<compile_context>
chip_gen: v7x
topology: tpu7x:2x2x1
jax: 0.10.0
libtpu: 0.0.40
codegen_flags: <defaults>
</compile_context>

<pallas_src>
import jax
import jax.numpy as jnp
from jax import lax
from jax.experimental import pallas as pl
from jax.experimental.pallas import tpu as pltpu

KSIZE = 11          # Conv1d kernel_size=11, stride=1, padding=5 -> "same"
PAD = KSIZE // 2
NEG_SLOPE = 0.1     # LeakyReLU(0.1)


def _full_spec(shape):
    nd = len(shape)
    return pl.BlockSpec(tuple(shape), lambda *_: (0,) * nd)


# ----------------------------------------------------------------------------
# Single fused kernel: Conv1d x3 + LeakyReLU -> GRU (L layers) -> Linear.
# ----------------------------------------------------------------------------
def convgru_kernel(xp_ref,
                   w1_ref, b1_ref, w2_ref, b2_ref, w3_ref, b3_ref,
                   wih_ref, whr_ref, whz_ref, whn_ref,
                   bih_ref, bhr_ref, bhz_ref, bhn_ref,
                   lw_ref, lb_ref,
                   o_ref,
                   cur_scr, gir_scr, giz_scr, gin_scr):
    # xp_ref : (T + 2*PAD, B, Cin) f32, zero padded along time (time-major)
    # wK_ref : (KSIZE*C_in_k, H) bf16 im2col conv weights ; bK_ref: (1, H) f32
    # wih_ref: (L, H, 3H) bf16 ; wh{r,z,n}_ref: (L, H, H) bf16 (gate-separated)
    # bih_ref: (L, 1, 3H) f32  ; bh{r,z,n}_ref: (L, 1, H) f32
    # lw_ref : (H, O) bf16 ; lb_ref: (1, O) f32
    # o_ref  : (T, B, O) f32 time-major
    # cur_scr / gi*_scr: (T, B, H) f32 VMEM scratch
    T, B, O = o_ref.shape
    H = cur_scr.shape[-1]
    L = wih_ref.shape[0]

    # ---- Stage 1: Conv1d x3 + LeakyReLU, intermediates stay in VMEM -------
    def conv_lrelu(xp, w_ref, b_ref):
        # xp: (T + 2*PAD, B, C) f32 value; time leading -> the KSIZE tap views
        # are cheap leading-dim slices; one deep im2col matmul on the MXU.
        C = xp.shape[-1]
        col = jnp.concatenate([xp[k:k + T] for k in range(KSIZE)], axis=-1)
        col2d = col.reshape(T * B, KSIZE * C).astype(jnp.bfloat16)
        y = jnp.dot(col2d, w_ref[...], preferred_element_type=jnp.float32)
        y = y + b_ref[...]
        y = jnp.where(y >= 0, y, NEG_SLOPE * y)          # LeakyReLU(0.1), f32
        return y.reshape(T, B, H)

    def repad(h):                                        # "same" zero padding
        z = jnp.zeros((PAD, B, H), jnp.float32)
        return jnp.concatenate([z, h, z], axis=0)

    h1 = conv_lrelu(xp_ref[...], w1_ref, b1_ref)
    h2 = conv_lrelu(repad(h1), w2_ref, b2_ref)
    cur_scr[...] = conv_lrelu(repad(h2), w3_ref, b3_ref)

    # ---- Stage 2: GRU layers (PyTorch nn.GRU gate order [r, z, n]) --------
    for l in range(L):                                   # static unroll
        # Hoisted input projection for ALL timesteps -> one MXU matmul.
        x2d = cur_scr[...].reshape(T * B, H).astype(jnp.bfloat16)
        gi = jnp.dot(x2d, wih_ref[l],
                     preferred_element_type=jnp.float32) + bih_ref[l]
        gir_scr[...] = gi[:, 0:H].reshape(T, B, H)
        giz_scr[...] = gi[:, H:2 * H].reshape(T, B, H)
        gin_scr[...] = gi[:, 2 * H:3 * H].reshape(T, B, H)

        whr = whr_ref[l]
        whz = whz_ref[l]
        whn = whn_ref[l]
        bhr = bhr_ref[l]
        bhz = bhz_ref[l]
        bhn = bhn_ref[l]

        # Serial recurrence: only the tiny hidden matmuls + gate math.
        # h_t is written back into cur_scr so it directly feeds layer l+1.
        def step(t, h):
            hb = h.astype(jnp.bfloat16)
            gh_r = jnp.dot(hb, whr, preferred_element_type=jnp.float32) + bhr
            gh_z = jnp.dot(hb, whz, preferred_element_type=jnp.float32) + bhz
            gh_n = jnp.dot(hb, whn, preferred_element_type=jnp.float32) + bhn
            r = jax.nn.sigmoid(gir_scr[t] + gh_r)
            z = jax.nn.sigmoid(giz_scr[t] + gh_z)
            n = jnp.tanh(gin_scr[t] + r * gh_n)
            h_new = (1.0 - z) * n + z * h
            cur_scr[t] = h_new
            return h_new

        lax.fori_loop(0, T, step, jnp.zeros((B, H), jnp.float32))  # h_0 = 0

    # ---- Stage 3: final Linear ---------------------------------------------
    x2d = cur_scr[...].reshape(T * B, H).astype(jnp.bfloat16)
    y = jnp.dot(x2d, lw_ref[...],
                preferred_element_type=jnp.float32) + lb_ref[...]
    o_ref[...] = y.reshape(T, B, O).astype(o_ref.dtype)


# ----------------------------------------------------------------------------
# Full ConvGru forward.
# ----------------------------------------------------------------------------
@jax.jit
def conv_gru_forward(x, params):
    # x: (B, T, input_dim) -> (B, T, output_dim)
    # Only the narrow boundary tensors (Cin / O wide) are transposed by XLA;
    # everything hidden-size stays time-major and never leaves the kernel.
    x_tm = jnp.transpose(x, (1, 0, 2))                   # (T, B, Cin)
    T, B, _ = x_tm.shape
    xp = jnp.pad(x_tm, ((PAD, PAD), (0, 0), (0, 0)))     # "same" zero padding

    w1, w2, w3 = params["conv_w"]
    b1, b2, b3 = params["conv_b"]
    lw, lb = params["lin_w"], params["lin_b"]
    H = lw.shape[0]
    O = lw.shape[1]

    args = (xp, w1, b1, w2, b2, w3, b3,
            params["gru_wih"], params["gru_whr"], params["gru_whz"],
            params["gru_whn"], params["gru_bih"], params["gru_bhr"],
            params["gru_bhz"], params["gru_bhn"], lw, lb)

    out_tm = pl.pallas_call(
        convgru_kernel,
        out_shape=jax.ShapeDtypeStruct((T, B, O), jnp.float32),
        grid=(1,),
        in_specs=[_full_spec(a.shape) for a in args],
        out_specs=_full_spec((T, B, O)),
        scratch_shapes=[pltpu.VMEM((T, B, H), jnp.float32)] * 4,
        compiler_params=pltpu.CompilerParams(
            dimension_semantics=("arbitrary",)),
    )(*args)
    return jnp.transpose(out_tm, (1, 0, 2))              # (B, T, O)


# ----------------------------------------------------------------------------
# Deterministic parameter construction (PyTorch layouts -> kernel layouts).
# ----------------------------------------------------------------------------
def init_params(key, input_dim, hidden_dim, output_dim, num_layers):
    def nrm(k, shape, scale=0.1):
        return scale * jax.random.normal(k, shape, jnp.float32)

    keys = jax.random.split(key, 64)
    ki = iter(keys)
    H = hidden_dim

    conv_w, conv_b = [], []
    cin = input_dim
    for _ in range(3):
        # PyTorch Conv1d weight (Cout, Cin, K) -> im2col weight (K*Cin, Cout)
        w_pt = nrm(next(ki), (H, cin, KSIZE))
        b = nrm(next(ki), (H,))
        w_col = jnp.transpose(w_pt, (2, 1, 0)).reshape(KSIZE * cin, H)
        conv_w.append(w_col.astype(jnp.bfloat16))
        conv_b.append(b.reshape(1, H))
        cin = H

    # GRU: every layer's input is H (conv output = hidden_dim), so weights can
    # be stacked along a leading layer axis.  PyTorch layout: weight_ih (3H, in),
    # weight_hh (3H, H), gate order [r, z, n].
    wih_l, whr_l, whz_l, whn_l = [], [], [], []
    bih_l, bhr_l, bhz_l, bhn_l = [], [], [], []
    for _ in range(num_layers):
        wih_pt = nrm(next(ki), (3 * H, H))
        whh_pt = nrm(next(ki), (3 * H, H))
        bih = nrm(next(ki), (3 * H,))
        bhh = nrm(next(ki), (3 * H,))
        wih_l.append(wih_pt.T.astype(jnp.bfloat16))                  # (H, 3H)
        whr_l.append(whh_pt[0:H, :].T.astype(jnp.bfloat16))          # (H, H)
        whz_l.append(whh_pt[H:2 * H, :].T.astype(jnp.bfloat16))
        whn_l.append(whh_pt[2 * H:3 * H, :].T.astype(jnp.bfloat16))
        bih_l.append(bih.reshape(1, 3 * H))
        bhr_l.append(bhh[0:H].reshape(1, H))
        bhz_l.append(bhh[H:2 * H].reshape(1, H))
        bhn_l.append(bhh[2 * H:3 * H].reshape(1, H))

    # PyTorch Linear: weight (O, H) -> (H, O); bias (O,)
    lin_w = nrm(next(ki), (output_dim, H)).T.astype(jnp.bfloat16)
    lin_b = nrm(next(ki), (output_dim,)).reshape(1, output_dim)

    return {
        "conv_w": conv_w, "conv_b": conv_b,
        "gru_wih": jnp.stack(wih_l),   # (L, H, 3H) bf16
        "gru_whr": jnp.stack(whr_l),   # (L, H, H)  bf16
        "gru_whz": jnp.stack(whz_l),
        "gru_whn": jnp.stack(whn_l),
        "gru_bih": jnp.stack(bih_l),   # (L, 1, 3H) f32
        "gru_bhr": jnp.stack(bhr_l),   # (L, 1, H)  f32
        "gru_bhz": jnp.stack(bhz_l),
        "gru_bhn": jnp.stack(bhn_l),
        "lin_w": lin_w, "lin_b": lin_b,
    }


if __name__ == "__main__":
    # Small shapes consistent with the module: x is (m, K, input_dim).
    B, T = 2, 16
    INPUT_DIM, HIDDEN_DIM, OUTPUT_DIM, NUM_LAYERS = 4, 32, 8, 2

    key = jax.random.PRNGKey(0)
    kx, kp = jax.random.split(key)
    x = jax.random.normal(kx, (B, T, INPUT_DIM), jnp.float32)
    params = init_params(kp, INPUT_DIM, HIDDEN_DIM, OUTPUT_DIM, NUM_LAYERS)

    out = conv_gru_forward(x, params)
    out = jax.block_until_ready(out)
    assert out.shape == (B, T, OUTPUT_DIM), out.shape
    assert bool(jnp.all(jnp.isfinite(out)))
    print("KERNEL_OK")
</pallas_src>

<mosaic_0001>
module attributes {stable_mosaic.version = 11 : i64} {
  func.func @convgru_kernel(%arg0: i32, %arg1: memref<26x2x4xf32, #tpu.memory_space<vmem>>, %arg2: memref<44x32xbf16, #tpu.memory_space<vmem>>, %arg3: memref<1x32xf32, #tpu.memory_space<vmem>>, %arg4: memref<352x32xbf16, #tpu.memory_space<vmem>>, %arg5: memref<1x32xf32, #tpu.memory_space<vmem>>, %arg6: memref<352x32xbf16, #tpu.memory_space<vmem>>, %arg7: memref<1x32xf32, #tpu.memory_space<vmem>>, %arg8: memref<2x32x96xbf16, #tpu.memory_space<vmem>>, %arg9: memref<2x32x32xbf16, #tpu.memory_space<vmem>>, %arg10: memref<2x32x32xbf16, #tpu.memory_space<vmem>>, %arg11: memref<2x32x32xbf16, #tpu.memory_space<vmem>>, %arg12: memref<2x1x96xf32, #tpu.memory_space<vmem>>, %arg13: memref<2x1x32xf32, #tpu.memory_space<vmem>>, %arg14: memref<2x1x32xf32, #tpu.memory_space<vmem>>, %arg15: memref<2x1x32xf32, #tpu.memory_space<vmem>>, %arg16: memref<32x8xbf16, #tpu.memory_space<vmem>>, %arg17: memref<1x8xf32, #tpu.memory_space<vmem>>, %arg18: memref<16x2x8xf32, #tpu.memory_space<vmem>>, %arg19: memref<16x2x32xf32, #tpu.memory_space<vmem>>, %arg20: memref<16x2x32xf32, #tpu.memory_space<vmem>>, %arg21: memref<16x2x32xf32, #tpu.memory_space<vmem>>, %arg22: memref<16x2x32xf32, #tpu.memory_space<vmem>>) attributes {dimension_semantics = [#tpu.dimension_semantics<arbitrary>], iteration_bounds = array<i64: 1>, scalar_prefetch = 0 : i64, scratch_operands = 4 : i64, tpu.core_type = #tpu.core_type<tc>, window_params = [{pipeline_mode = #tpu.pipeline_mode<synchronous>, transform_indices = @transform_0, window_bounds = array<i64: 26, 2, 4>}, {pipeline_mode = #tpu.pipeline_mode<synchronous>, transform_indices = @transform_1, window_bounds = array<i64: 44, 32>}, {pipeline_mode = #tpu.pipeline_mode<synchronous>, transform_indices = @transform_2, window_bounds = array<i64: 1, 32>}, {pipeline_mode = #tpu.pipeline_mode<synchronous>, transform_indices = @transform_3, window_bounds = array<i64: 352, 32>}, {pipeline_mode = #tpu.pipeline_mode<synchronous>, transform_indices = @transform_4, window_bounds = array<i64: 1, 32>}, {pipeline_mode = #tpu.pipeline_mode<synchronous>, transform_indices = @transform_5, window_bounds = array<i64: 352, 32>}, {pipeline_mode = #tpu.pipeline_mode<synchronous>, transform_indices = @transform_6, window_bounds = array<i64: 1, 32>}, {pipeline_mode = #tpu.pipeline_mode<synchronous>, transform_indices = @transform_7, window_bounds = array<i64: 2, 32, 96>}, {pipeline_mode = #tpu.pipeline_mode<synchronous>, transform_indices = @transform_8, window_bounds = array<i64: 2, 32, 32>}, {pipeline_mode = #tpu.pipeline_mode<synchronous>, transform_indices = @transform_9, window_bounds = array<i64: 2, 32, 32>}, {pipeline_mode = #tpu.pipeline_mode<synchronous>, transform_indices = @transform_10, window_bounds = array<i64: 2, 32, 32>}, {pipeline_mode = #tpu.pipeline_mode<synchronous>, transform_indices = @transform_11, window_bounds = array<i64: 2, 1, 96>}, {pipeline_mode = #tpu.pipeline_mode<synchronous>, transform_indices = @transform_12, window_bounds = array<i64: 2, 1, 32>}, {pipeline_mode = #tpu.pipeline_mode<synchronous>, transform_indices = @transform_13, window_bounds = array<i64: 2, 1, 32>}, {pipeline_mode = #tpu.pipeline_mode<synchronous>, transform_indices = @transform_14, window_bounds = array<i64: 2, 1, 32>}, {pipeline_mode = #tpu.pipeline_mode<synchronous>, transform_indices = @transform_15, window_bounds = array<i64: 32, 8>}, {pipeline_mode = #tpu.pipeline_mode<synchronous>, transform_indices = @transform_16, window_bounds = array<i64: 1, 8>}, {pipeline_mode = #tpu.pipeline_mode<synchronous>, transform_indices = @transform_17, window_bounds = array<i64: 16, 2, 8>}]} {
    %c0 = arith.constant 0 : index
    %c0_0 = arith.constant 0 : index
    %c0_1 = arith.constant 0 : index
    %0 = vector.load %arg1[%c0, %c0_0, %c0_1] : memref<26x2x4xf32, #tpu.memory_space<vmem>>, vector<26x2x4xf32>
    %1 = vector.extract_strided_slice %0 {offsets = [0, 0, 0], sizes = [16, 2, 4], strides = [1, 1, 1]} : vector<26x2x4xf32> to vector<16x2x4xf32>
    %2 = vector.extract_strided_slice %0 {offsets = [1, 0, 0], sizes = [16, 2, 4], strides = [1, 1, 1]} : vector<26x2x4xf32> to vector<16x2x4xf32>
    %3 = vector.extract_strided_slice %0 {offsets = [2, 0, 0], sizes = [16, 2, 4], strides = [1, 1, 1]} : vector<26x2x4xf32> to vector<16x2x4xf32>
    %4 = vector.extract_strided_slice %0 {offsets = [3, 0, 0], sizes = [16, 2, 4], strides = [1, 1, 1]} : vector<26x2x4xf32> to vector<16x2x4xf32>
    %5 = vector.extract_strided_slice %0 {offsets = [4, 0, 0], sizes = [16, 2, 4], strides = [1, 1, 1]} : vector<26x2x4xf32> to vector<16x2x4xf32>
    %6 = vector.extract_strided_slice %0 {offsets = [5, 0, 0], sizes = [16, 2, 4], strides = [1, 1, 1]} : vector<26x2x4xf32> to vector<16x2x4xf32>
    %7 = vector.extract_strided_slice %0 {offsets = [6, 0, 0], sizes = [16, 2, 4], strides = [1, 1, 1]} : vector<26x2x4xf32> to vector<16x2x4xf32>
    %8 = vector.extract_strided_slice %0 {offsets = [7, 0, 0], sizes = [16, 2, 4], strides = [1, 1, 1]} : vector<26x2x4xf32> to vector<16x2x4xf32>
    %9 = vector.extract_strided_slice %0 {offsets = [8, 0, 0], sizes = [16, 2, 4], strides = [1, 1, 1]} : vector<26x2x4xf32> to vector<16x2x4xf32>
    %10 = vector.extract_strided_slice %0 {offsets = [9, 0, 0], sizes = [16, 2, 4], strides = [1, 1, 1]} : vector<26x2x4xf32> to vector<16x2x4xf32>
    %11 = vector.extract_strided_slice %0 {offsets = [10, 0, 0], sizes = [16, 2, 4], strides = [1, 1, 1]} : vector<26x2x4xf32> to vector<16x2x4xf32>
    %12 = tpu.concatenate %1, %2, %3, %4, %5, %6, %7, %8, %9, %10, %11 in 2 : vector<16x2x4xf32>, vector<16x2x4xf32>, vector<16x2x4xf32>, vector<16x2x4xf32>, vector<16x2x4xf32>, vector<16x2x4xf32>, vector<16x2x4xf32>, vector<16x2x4xf32>, vector<16x2x4xf32>, vector<16x2x4xf32>, vector<16x2x4xf32> -> vector<16x2x44xf32>
    %13 = vector.shape_cast %12 : vector<16x2x44xf32> to vector<32x44xf32>
    %14 = arith.truncf %13 : vector<32x44xf32> to vector<32x44xbf16>
    %c0_2 = arith.constant 0 : index
    %c0_3 = arith.constant 0 : index
    %15 = vector.load %arg2[%c0_2, %c0_3] : memref<44x32xbf16, #tpu.memory_space<vmem>>, vector<44x32xbf16>
    %cst = arith.constant dense<0.000000e+00> : vector<32x32xf32>
    %16 = tpu.matmul %14, %15, %cst {dimension_numbers = #tpu.dot_dimension_numbers<[1], [0], [0], [1], [0, 0, 1, 1], [], []>} : vector<32x44xbf16>, vector<44x32xbf16>, vector<32x32xf32> -> vector<32x32xf32>
    %c0_4 = arith.constant 0 : index
    %c0_5 = arith.constant 0 : index
    %17 = vector.load %arg3[%c0_4, %c0_5] : memref<1x32xf32, #tpu.memory_space<vmem>>, vector<1x32xf32>
    %18 = vector.broadcast %17 : vector<1x32xf32> to vector<32x32xf32>
    %19 = arith.addf %16, %18 : vector<32x32xf32>
    %cst_6 = arith.constant 0.000000e+00 : f32
    %20 = vector.broadcast %cst_6 : f32 to vector<32x32xf32>
    %21 = arith.cmpf oge, %19, %20 : vector<32x32xf32>
    %cst_7 = arith.constant 1.000000e-01 : f32
    %22 = vector.broadcast %cst_7 : f32 to vector<32x32xf32>
    %23 = arith.mulf %22, %19 : vector<32x32xf32>
    %24 = arith.select %21, %19, %23 : vector<32x32xi1>, vector<32x32xf32>
    %25 = vector.shape_cast %24 : vector<32x32xf32> to vector<16x2x32xf32>
    %cst_8 = arith.constant 0.000000e+00 : f32
    %26 = vector.broadcast %cst_8 : f32 to vector<5x2x32xf32>
    %27 = tpu.concatenate %26, %25, %26 in 0 : vector<5x2x32xf32>, vector<16x2x32xf32>, vector<5x2x32xf32> -> vector<26x2x32xf32>
    %28 = vector.extract_strided_slice %27 {offsets = [0, 0, 0], sizes = [16, 2, 32], strides = [1, 1, 1]} : vector<26x2x32xf32> to vector<16x2x32xf32>
    %29 = vector.extract_strided_slice %27 {offsets = [1, 0, 0], sizes = [16, 2, 32], strides = [1, 1, 1]} : vector<26x2x32xf32> to vector<16x2x32xf32>
    %30 = vector.extract_strided_slice %27 {offsets = [2, 0, 0], sizes = [16, 2, 32], strides = [1, 1, 1]} : vector<26x2x32xf32> to vector<16x2x32xf32>
    %31 = vector.extract_strided_slice %27 {offsets = [3, 0, 0], sizes = [16, 2, 32], strides = [1, 1, 1]} : vector<26x2x32xf32> to vector<16x2x32xf32>
    %32 = vector.extract_strided_slice %27 {offsets = [4, 0, 0], sizes = [16, 2, 32], strides = [1, 1, 1]} : vector<26x2x32xf32> to vector<16x2x32xf32>
    %33 = vector.extract_strided_slice %27 {offsets = [5, 0, 0], sizes = [16, 2, 32], strides = [1, 1, 1]} : vector<26x2x32xf32> to vector<16x2x32xf32>
    %34 = vector.extract_strided_slice %27 {offsets = [6, 0, 0], sizes = [16, 2, 32], strides = [1, 1, 1]} : vector<26x2x32xf32> to vector<16x2x32xf32>
    %35 = vector.extract_strided_slice %27 {offsets = [7, 0, 0], sizes = [16, 2, 32], strides = [1, 1, 1]} : vector<26x2x32xf32> to vector<16x2x32xf32>
    %36 = vector.extract_strided_slice %27 {offsets = [8, 0, 0], sizes = [16, 2, 32], strides = [1, 1, 1]} : vector<26x2x32xf32> to vector<16x2x32xf32>
    %37 = vector.extract_strided_slice %27 {offsets = [9, 0, 0], sizes = [16, 2, 32], strides = [1, 1, 1]} : vector<26x2x32xf32> to vector<16x2x32xf32>
    %38 = vector.extract_strided_slice %27 {offsets = [10, 0, 0], sizes = [16, 2, 32], strides = [1, 1, 1]} : vector<26x2x32xf32> to vector<16x2x32xf32>
    %39 = tpu.concatenate %28, %29, %30, %31, %32, %33, %34, %35, %36, %37, %38 in 2 : vector<16x2x32xf32>, vector<16x2x32xf32>, vector<16x2x32xf32>, vector<16x2x32xf32>, vector<16x2x32xf32>, vector<16x2x32xf32>, vector<16x2x32xf32>, vector<16x2x32xf32>, vector<16x2x32xf32>, vector<16x2x32xf32>, vector<16x2x32xf32> -> vector<16x2x352xf32>
    %40 = vector.shape_cast %39 : vector<16x2x352xf32> to vector<32x352xf32>
    %41 = arith.truncf %40 : vector<32x352xf32> to vector<32x352xbf16>
    %c0_9 = arith.constant 0 : index
    %c0_10 = arith.constant 0 : index
    %42 = vector.load %arg4[%c0_9, %c0_10] : memref<352x32xbf16, #tpu.memory_space<vmem>>, vector<352x32xbf16>
    %cst_11 = arith.constant dense<0.000000e+00> : vector<32x32xf32>
    %43 = tpu.matmul %41, %42, %cst_11 {dimension_numbers = #tpu.dot_dimension_numbers<[1], [0], [0], [1], [0, 0, 1, 1], [], []>} : vector<32x352xbf16>, vector<352x32xbf16>, vector<32x32xf32> -> vector<32x32xf32>
    %c0_12 = arith.constant 0 : index
    %c0_13 = arith.constant 0 : index
    %44 = vector.load %arg5[%c0_12, %c0_13] : memref<1x32xf32, #tpu.memory_space<vmem>>, vector<1x32xf32>
    %45 = vector.broadcast %44 : vector<1x32xf32> to vector<32x32xf32>
    %46 = arith.addf %43, %45 : vector<32x32xf32>
    %cst_14 = arith.constant 0.000000e+00 : f32
    %47 = vector.broadcast %cst_14 : f32 to vector<32x32xf32>
    %48 = arith.cmpf oge, %46, %47 : vector<32x32xf32>
    %cst_15 = arith.constant 1.000000e-01 : f32
    %49 = vector.broadcast %cst_15 : f32 to vector<32x32xf32>
    %50 = arith.mulf %49, %46 : vector<32x32xf32>
    %51 = arith.select %48, %46, %50 : vector<32x32xi1>, vector<32x32xf32>
    %52 = vector.shape_cast %51 : vector<32x32xf32> to vector<16x2x32xf32>
    %cst_16 = arith.constant 0.000000e+00 : f32
    %53 = vector.broadcast %cst_16 : f32 to vector<5x2x32xf32>
    %54 = tpu.concatenate %53, %52, %53 in 0 : vector<5x2x32xf32>, vector<16x2x32xf32>, vector<5x2x32xf32> -> vector<26x2x32xf32>
    %55 = vector.extract_strided_slice %54 {offsets = [0, 0, 0], sizes = [16, 2, 32], strides = [1, 1, 1]} : vector<26x2x32xf32> to vector<16x2x32xf32>
    %56 = vector.extract_strided_slice %54 {offsets = [1, 0, 0], sizes = [16, 2, 32], strides = [1, 1, 1]} : vector<26x2x32xf32> to vector<16x2x32xf32>
    %57 = vector.extract_strided_slice %54 {offsets = [2, 0, 0], sizes = [16, 2, 32], strides = [1, 1, 1]} : vector<26x2x32xf32> to vector<16x2x32xf32>
    %58 = vector.extract_strided_slice %54 {offsets = [3, 0, 0], sizes = [16, 2, 32], strides = [1, 1, 1]} : vector<26x2x32xf32> to vector<16x2x32xf32>
    %59 = vector.extract_strided_slice %54 {offsets = [4, 0, 0], sizes = [16, 2, 32], strides = [1, 1, 1]} : vector<26x2x32xf32> to vector<16x2x32xf32>
    %60 = vector.extract_strided_slice %54 {offsets = [5, 0, 0], sizes = [16, 2, 32], strides = [1, 1, 1]} : vector<26x2x32xf32> to vector<16x2x32xf32>
    %61 = vector.extract_strided_slice %54 {offsets = [6, 0, 0], sizes = [16, 2, 32], strides = [1, 1, 1]} : vector<26x2x32xf32> to vector<16x2x32xf32>
    %62 = vector.extract_strided_slice %54 {offsets = [7, 0, 0], sizes = [16, 2, 32], strides = [1, 1, 1]} : vector<26x2x32xf32> to vector<16x2x32xf32>
    %63 = vector.extract_strided_slice %54 {offsets = [8, 0, 0], sizes = [16, 2, 32], strides = [1, 1, 1]} : vector<26x2x32xf32> to vector<16x2x32xf32>
    %64 = vector.extract_strided_slice %54 {offsets = [9, 0, 0], sizes = [16, 2, 32], strides = [1, 1, 1]} : vector<26x2x32xf32> to vector<16x2x32xf32>
    %65 = vector.extract_strided_slice %54 {offsets = [10, 0, 0], sizes = [16, 2, 32], strides = [1, 1, 1]} : vector<26x2x32xf32> to vector<16x2x32xf32>
    %66 = tpu.concatenate %55, %56, %57, %58, %59, %60, %61, %62, %63, %64, %65 in 2 : vector<16x2x32xf32>, vector<16x2x32xf32>, vector<16x2x32xf32>, vector<16x2x32xf32>, vector<16x2x32xf32>, vector<16x2x32xf32>, vector<16x2x32xf32>, vector<16x2x32xf32>, vector<16x2x32xf32>, vector<16x2x32xf32>, vector<16x2x32xf32> -> vector<16x2x352xf32>
    %67 = vector.shape_cast %66 : vector<16x2x352xf32> to vector<32x352xf32>
    %68 = arith.truncf %67 : vector<32x352xf32> to vector<32x352xbf16>
    %c0_17 = arith.constant 0 : index
    %c0_18 = arith.constant 0 : index
    %69 = vector.load %arg6[%c0_17, %c0_18] : memref<352x32xbf16, #tpu.memory_space<vmem>>, vector<352x32xbf16>
    %cst_19 = arith.constant dense<0.000000e+00> : vector<32x32xf32>
    %70 = tpu.matmul %68, %69, %cst_19 {dimension_numbers = #tpu.dot_dimension_numbers<[1], [0], [0], [1], [0, 0, 1, 1], [], []>} : vector<32x352xbf16>, vector<352x32xbf16>, vector<32x32xf32> -> vector<32x32xf32>
    %c0_20 = arith.constant 0 : index
    %c0_21 = arith.constant 0 : index
    %71 = vector.load %arg7[%c0_20, %c0_21] : memref<1x32xf32, #tpu.memory_space<vmem>>, vector<1x32xf32>
    %72 = vector.broadcast %71 : vector<1x32xf32> to vector<32x32xf32>
    %73 = arith.addf %70, %72 : vector<32x32xf32>
    %cst_22 = arith.constant 0.000000e+00 : f32
    %74 = vector.broadcast %cst_22 : f32 to vector<32x32xf32>
    %75 = arith.cmpf oge, %73, %74 : vector<32x32xf32>
    %cst_23 = arith.constant 1.000000e-01 : f32
    %76 = vector.broadcast %cst_23 : f32 to vector<32x32xf32>
    %77 = arith.mulf %76, %73 : vector<32x32xf32>
    %78 = arith.select %75, %73, %77 : vector<32x32xi1>, vector<32x32xf32>
    %79 = vector.shape_cast %78 : vector<32x32xf32> to vector<16x2x32xf32>
    %c0_24 = arith.constant 0 : index
    %c0_25 = arith.constant 0 : index
    %c0_26 = arith.constant 0 : index
    %80 = vector.load %arg19[%c0_24, %c0_25, %c0_26] : memref<16x2x32xf32, #tpu.memory_space<vmem>>, vector<16x2x32xf32>
    tpu.vector_store %arg19[%c0_24, %c0_25, %c0_26], %79 {strides = array<i32>} : memref<16x2x32xf32, #tpu.memory_space<vmem>>, vector<16x2x32xf32>,
    %c0_27 = arith.constant 0 : index
    %c0_28 = arith.constant 0 : index
    %c0_29 = arith.constant 0 : index
    %81 = vector.load %arg19[%c0_27, %c0_28, %c0_29] : memref<16x2x32xf32, #tpu.memory_space<vmem>>, vector<16x2x32xf32>
    %82 = vector.shape_cast %81 : vector<16x2x32xf32> to vector<32x32xf32>
    %83 = arith.truncf %82 : vector<32x32xf32> to vector<32x32xbf16>
    %c0_30 = arith.constant 0 : index
    %c0_31 = arith.constant 0 : index
    %c0_32 = arith.constant 0 : index
    %84 = vector.load %arg8[%c0_30, %c0_31, %c0_32] : memref<2x32x96xbf16, #tpu.memory_space<vmem>>, vector<1x32x96xbf16>
    %85 = vector.shape_cast %84 : vector<1x32x96xbf16> to vector<32x96xbf16>
    %cst_33 = arith.constant dense<0.000000e+00> : vector<32x96xf32>
    %86 = tpu.matmul %83, %85, %cst_33 {dimension_numbers = #tpu.dot_dimension_numbers<[1], [0], [0], [1], [0, 0, 1, 1], [], []>} : vector<32x32xbf16>, vector<32x96xbf16>, vector<32x96xf32> -> vector<32x96xf32>
    %c0_34 = arith.constant 0 : index
    %c0_35 = arith.constant 0 : index
    %c0_36 = arith.constant 0 : index
    %87 = vector.load %arg12[%c0_34, %c0_35, %c0_36] : memref<2x1x96xf32, #tpu.memory_space<vmem>>, vector<1x1x96xf32>
    %88 = vector.shape_cast %87 : vector<1x1x96xf32> to vector<1x96xf32>
    %89 = vector.broadcast %88 : vector<1x96xf32> to vector<32x96xf32>
    %90 = arith.addf %86, %89 : vector<32x96xf32>
    %91 = vector.extract_strided_slice %90 {offsets = [0, 0], sizes = [32, 32], strides = [1, 1]} : vector<32x96xf32> to vector<32x32xf32>
    %92 = vector.shape_cast %91 : vector<32x32xf32> to vector<16x2x32xf32>
    %c0_37 = arith.constant 0 : index
    %c0_38 = arith.constant 0 : index
    %c0_39 = arith.constant 0 : index
    %93 = vector.load %arg20[%c0_37, %c0_38, %c0_39] : memref<16x2x32xf32, #tpu.memory_space<vmem>>, vector<16x2x32xf32>
    tpu.vector_store %arg20[%c0_37, %c0_38, %c0_39], %92 {strides = array<i32>} : memref<16x2x32xf32, #tpu.memory_space<vmem>>, vector<16x2x32xf32>,
    %94 = vector.extract_strided_slice %90 {offsets = [0, 32], sizes = [32, 32], strides = [1, 1]} : vector<32x96xf32> to vector<32x32xf32>
    %95 = vector.shape_cast %94 : vector<32x32xf32> to vector<16x2x32xf32>
    %c0_40 = arith.constant 0 : index
    %c0_41 = arith.constant 0 : index
    %c0_42 = arith.constant 0 : index
    %96 = vector.load %arg21[%c0_40, %c0_41, %c0_42] : memref<16x2x32xf32, #tpu.memory_space<vmem>>, vector<16x2x32xf32>
    tpu.vector_store %arg21[%c0_40, %c0_41, %c0_42], %95 {strides = array<i32>} : memref<16x2x32xf32, #tpu.memory_space<vmem>>, vector<16x2x32xf32>,
    %97 = vector.extract_strided_slice %90 {offsets = [0, 64], sizes = [32, 32], strides = [1, 1]} : vector<32x96xf32> to vector<32x32xf32>
    %98 = vector.shape_cast %97 : vector<32x32xf32> to vector<16x2x32xf32>
    %c0_43 = arith.constant 0 : index
    %c0_44 = arith.constant 0 : index
    %c0_45 = arith.constant 0 : index
    %99 = vector.load %arg22[%c0_43, %c0_44, %c0_45] : memref<16x2x32xf32, #tpu.memory_space<vmem>>, vector<16x2x32xf32>
    tpu.vector_store %arg22[%c0_43, %c0_44, %c0_45], %98 {strides = array<i32>} : memref<16x2x32xf32, #tpu.memory_space<vmem>>, vector<16x2x32xf32>,
    %c0_46 = arith.constant 0 : index
    %c0_47 = arith.constant 0 : index
    %c0_48 = arith.constant 0 : index
    %100 = vector.load %arg9[%c0_46, %c0_47, %c0_48] : memref<2x32x32xbf16, #tpu.memory_space<vmem>>, vector<1x32x32xbf16>
    %101 = vector.shape_cast %100 : vector<1x32x32xbf16> to vector<32x32xbf16>
    %c0_49 = arith.constant 0 : index
    %c0_50 = arith.constant 0 : index
    %c0_51 = arith.constant 0 : index
    %102 = vector.load %arg10[%c0_49, %c0_50, %c0_51] : memref<2x32x32xbf16, #tpu.memory_space<vmem>>, vector<1x32x32xbf16>
    %103 = vector.shape_cast %102 : vector<1x32x32xbf16> to vector<32x32xbf16>
    %c0_52 = arith.constant 0 : index
    %c0_53 = arith.constant 0 : index
    %c0_54 = arith.constant 0 : index
    %104 = vector.load %arg11[%c0_52, %c0_53, %c0_54] : memref<2x32x32xbf16, #tpu.memory_space<vmem>>, vector<1x32x32xbf16>
    %105 = vector.shape_cast %104 : vector<1x32x32xbf16> to vector<32x32xbf16>
    %c0_55 = arith.constant 0 : index
    %c0_56 = arith.constant 0 : index
    %c0_57 = arith.constant 0 : index
    %106 = vector.load %arg13[%c0_55, %c0_56, %c0_57] : memref<2x1x32xf32, #tpu.memory_space<vmem>>, vector<1x1x32xf32>
    %107 = vector.shape_cast %106 : vector<1x1x32xf32> to vector<1x32xf32>
    %c0_58 = arith.constant 0 : index
    %c0_59 = arith.constant 0 : index
    %c0_60 = arith.constant 0 : index
    %108 = vector.load %arg14[%c0_58, %c0_59, %c0_60] : memref<2x1x32xf32, #tpu.memory_space<vmem>>, vector<1x1x32xf32>
    %109 = vector.shape_cast %108 : vector<1x1x32xf32> to vector<1x32xf32>
    %c0_61 = arith.constant 0 : index
    %c0_62 = arith.constant 0 : index
    %c0_63 = arith.constant 0 : index
    %110 = vector.load %arg15[%c0_61, %c0_62, %c0_63] : memref<2x1x32xf32, #tpu.memory_space<vmem>>, vector<1x1x32xf32>
    %111 = vector.shape_cast %110 : vector<1x1x32xf32> to vector<1x32xf32>
    %cst_64 = arith.constant 0.000000e+00 : f32
    %112 = vector.broadcast %cst_64 : f32 to vector<2x32xf32>
    %c0_i32 = arith.constant 0 : i32
    %c16_i32 = arith.constant 16 : i32
    %113 = arith.addi %c0_i32, %c16_i32 : i32
    %c1_i32 = arith.constant 1 : i32
    %114 = scf.for %arg23 = %c0_i32 to %113 step %c1_i32 iter_args(%arg24 = %112) -> (vector<2x32xf32>)  : i32 {
      %159 = arith.truncf %arg24 : vector<2x32xf32> to vector<2x32xbf16>
      %cst_118 = arith.constant dense<0.000000e+00> : vector<2x32xf32>
      %160 = tpu.matmul %159, %101, %cst_118 {dimension_numbers = #tpu.dot_dimension_numbers<[1], [0], [0], [1], [0, 0, 1, 1], [], []>} : vector<2x32xbf16>, vector<32x32xbf16>, vector<2x32xf32> -> vector<2x32xf32>
      %161 = vector.broadcast %107 : vector<1x32xf32> to vector<2x32xf32>
      %162 = arith.addf %160, %161 : vector<2x32xf32>
      %cst_119 = arith.constant dense<0.000000e+00> : vector<2x32xf32>
      %163 = tpu.matmul %159, %103, %cst_119 {dimension_numbers = #tpu.dot_dimension_numbers<[1], [0], [0], [1], [0, 0, 1, 1], [], []>} : vector<2x32xbf16>, vector<32x32xbf16>, vector<2x32xf32> -> vector<2x32xf32>
      %164 = vector.broadcast %109 : vector<1x32xf32> to vector<2x32xf32>
      %165 = arith.addf %163, %164 : vector<2x32xf32>
      %cst_120 = arith.constant dense<0.000000e+00> : vector<2x32xf32>
      %166 = tpu.matmul %159, %105, %cst_120 {dimension_numbers = #tpu.dot_dimension_numbers<[1], [0], [0], [1], [0, 0, 1, 1], [], []>} : vector<2x32xbf16>, vector<32x32xbf16>, vector<2x32xf32> -> vector<2x32xf32>
      %167 = vector.broadcast %111 : vector<1x32xf32> to vector<2x32xf32>
      %168 = arith.addf %166, %167 : vector<2x32xf32>
      %169 = arith.index_cast %arg23 : i32 to index
      %c0_121 = arith.constant 0 : index
      %c0_122 = arith.constant 0 : index
      %170 = vector.load %arg20[%169, %c0_121, %c0_122] : memref<16x2x32xf32, #tpu.memory_space<vmem>>, vector<1x2x32xf32>
      %171 = vector.shape_cast %170 : vector<1x2x32xf32> to vector<2x32xf32>
      %172 = arith.addf %171, %162 : vector<2x32xf32>
      %173 = arith.negf %172 : vector<2x32xf32>
      %174 = math.exp %173 : vector<2x32xf32>
      %cst_123 = arith.constant 1.000000e+00 : f32
      %175 = vector.broadcast %cst_123 : f32 to vector<2x32xf32>
      %176 = arith.addf %175, %174 : vector<2x32xf32>
      %177 = arith.divf %175, %176 : vector<2x32xf32>
      %178 = arith.index_cast %arg23 : i32 to index
      %c0_124 = arith.constant 0 : index
      %c0_125 = arith.constant 0 : index
      %179 = vector.load %arg21[%178, %c0_124, %c0_125] : memref<16x2x32xf32, #tpu.memory_space<vmem>>, vector<1x2x32xf32>
      %180 = vector.shape_cast %179 : vector<1x2x32xf32> to vector<2x32xf32>
      %181 = arith.addf %180, %165 : vector<2x32xf32>
      %182 = arith.negf %181 : vector<2x32xf32>
      %183 = math.exp %182 : vector<2x32xf32>
      %cst_126 = arith.constant 1.000000e+00 : f32
      %184 = vector.broadcast %cst_126 : f32 to vector<2x32xf32>
      %185 = arith.addf %184, %183 : vector<2x32xf32>
      %186 = arith.divf %184, %185 : vector<2x32xf32>
      %187 = arith.index_cast %arg23 : i32 to index
      %c0_127 = arith.constant 0 : index
      %c0_128 = arith.constant 0 : index
      %188 = vector.load %arg22[%187, %c0_127, %c0_128] : memref<16x2x32xf32, #tpu.memory_space<vmem>>, vector<1x2x32xf32>
      %189 = vector.shape_cast %188 : vector<1x2x32xf32> to vector<2x32xf32>
      %190 = arith.mulf %177, %168 : vector<2x32xf32>
      %191 = arith.addf %189, %190 : vector<2x32xf32>
      %192 = math.tanh %191 : vector<2x32xf32>
      %cst_129 = arith.constant 1.000000e+00 : f32
      %193 = vector.broadcast %cst_129 : f32 to vector<2x32xf32>
      %194 = arith.subf %193, %186 : vector<2x32xf32>
      %195 = arith.mulf %194, %192 : vector<2x32xf32>
      %196 = arith.mulf %186, %arg24 : vector<2x32xf32>
      %197 = arith.addf %195, %196 : vector<2x32xf32>
      %198 = arith.index_cast %arg23 : i32 to index
      %c0_130 = arith.constant 0 : index
      %c0_131 = arith.constant 0 : index
      %199 = vector.load %arg19[%198, %c0_130, %c0_131] : memref<16x2x32xf32, #tpu.memory_space<vmem>>, vector<1x2x32xf32>
      %200 = vector.shape_cast %199 : vector<1x2x32xf32> to vector<2x32xf32>
      %201 = vector.shape_cast %197 : vector<2x32xf32> to vector<1x2x32xf32>
      tpu.vector_store %arg19[%198, %c0_130, %c0_131], %201 {strides = array<i32>} : memref<16x2x32xf32, #tpu.memory_space<vmem>>, vector<1x2x32xf32>,
      scf.yield %197 : vector<2x32xf32>
    }
    %c16_i32_65 = arith.constant 16 : i32
    %c0_66 = arith.constant 0 : index
    %c0_67 = arith.constant 0 : index
    %c0_68 = arith.constant 0 : index
    %115 = vector.load %arg19[%c0_66, %c0_67, %c0_68] : memref<16x2x32xf32, #tpu.memory_space<vmem>>, vector<16x2x32xf32>
    %116 = vector.shape_cast %115 : vector<16x2x32xf32> to vector<32x32xf32>
    %117 = arith.truncf %116 : vector<32x32xf32> to vector<32x32xbf16>
    %c1 = arith.constant 1 : index
    %c0_69 = arith.constant 0 : index
    %c0_70 = arith.constant 0 : index
    %118 = vector.load %arg8[%c1, %c0_69, %c0_70] : memref<2x32x96xbf16, #tpu.memory_space<vmem>>, vector<1x32x96xbf16>
    %119 = vector.shape_cast %118 : vector<1x32x96xbf16> to vector<32x96xbf16>
    %cst_71 = arith.constant dense<0.000000e+00> : vector<32x96xf32>
    %120 = tpu.matmul %117, %119, %cst_71 {dimension_numbers = #tpu.dot_dimension_numbers<[1], [0], [0], [1], [0, 0, 1, 1], [], []>} : vector<32x32xbf16>, vector<32x96xbf16>, vector<32x96xf32> -> vector<32x96xf32>
    %c1_72 = arith.constant 1 : index
    %c0_73 = arith.constant 0 : index
    %c0_74 = arith.constant 0 : index
    %121 = vector.load %arg12[%c1_72, %c0_73, %c0_74] : memref<2x1x96xf32, #tpu.memory_space<vmem>>, vector<1x1x96xf32>
    %122 = vector.shape_cast %121 : vector<1x1x96xf32> to vector<1x96xf32>
    %123 = vector.broadcast %122 : vector<1x96xf32> to vector<32x96xf32>
    %124 = arith.addf %120, %123 : vector<32x96xf32>
    %125 = vector.extract_strided_slice %124 {offsets = [0, 0], sizes = [32, 32], strides = [1, 1]} : vector<32x96xf32> to vector<32x32xf32>
    %126 = vector.shape_cast %125 : vector<32x32xf32> to vector<16x2x32xf32>
    %c0_75 = arith.constant 0 : index
    %c0_76 = arith.constant 0 : index
    %c0_77 = arith.constant 0 : index
    %127 = vector.load %arg20[%c0_75, %c0_76, %c0_77] : memref<16x2x32xf32, #tpu.memory_space<vmem>>, vector<16x2x32xf32>
    tpu.vector_store %arg20[%c0_75, %c0_76, %c0_77], %126 {strides = array<i32>} : memref<16x2x32xf32, #tpu.memory_space<vmem>>, vector<16x2x32xf32>,
    %128 = vector.extract_strided_slice %124 {offsets = [0, 32], sizes = [32, 32], strides = [1, 1]} : vector<32x96xf32> to vector<32x32xf32>
    %129 = vector.shape_cast %128 : vector<32x32xf32> to vector<16x2x32xf32>
    %c0_78 = arith.constant 0 : index
    %c0_79 = arith.constant 0 : index
    %c0_80 = arith.constant 0 : index
    %130 = vector.load %arg21[%c0_78, %c0_79, %c0_80] : memref<16x2x32xf32, #tpu.memory_space<vmem>>, vector<16x2x32xf32>
    tpu.vector_store %arg21[%c0_78, %c0_79, %c0_80], %129 {strides = array<i32>} : memref<16x2x32xf32, #tpu.memory_space<vmem>>, vector<16x2x32xf32>,
    %131 = vector.extract_strided_slice %124 {offsets = [0, 64], sizes = [32, 32], strides = [1, 1]} : vector<32x96xf32> to vector<32x32xf32>
    %132 = vector.shape_cast %131 : vector<32x32xf32> to vector<16x2x32xf32>
    %c0_81 = arith.constant 0 : index
    %c0_82 = arith.constant 0 : index
    %c0_83 = arith.constant 0 : index
    %133 = vector.load %arg22[%c0_81, %c0_82, %c0_83] : memref<16x2x32xf32, #tpu.memory_space<vmem>>, vector<16x2x32xf32>
    tpu.vector_store %arg22[%c0_81, %c0_82, %c0_83], %132 {strides = array<i32>} : memref<16x2x32xf32, #tpu.memory_space<vmem>>, vector<16x2x32xf32>,
    %c1_84 = arith.constant 1 : index
    %c0_85 = arith.constant 0 : index
    %c0_86 = arith.constant 0 : index
    %134 = vector.load %arg9[%c1_84, %c0_85, %c0_86] : memref<2x32x32xbf16, #tpu.memory_space<vmem>>, vector<1x32x32xbf16>
    %135 = vector.shape_cast %134 : vector<1x32x32xbf16> to vector<32x32xbf16>
    %c1_87 = arith.constant 1 : index
    %c0_88 = arith.constant 0 : index
    %c0_89 = arith.constant 0 : index
    %136 = vector.load %arg10[%c1_87, %c0_88, %c0_89] : memref<2x32x32xbf16, #tpu.memory_space<vmem>>, vector<1x32x32xbf16>
    %137 = vector.shape_cast %136 : vector<1x32x32xbf16> to vector<32x32xbf16>
    %c1_90 = arith.constant 1 : index
    %c0_91 = arith.constant 0 : index
    %c0_92 = arith.constant 0 : index
    %138 = vector.load %arg11[%c1_90, %c0_91, %c0_92] : memref<2x32x32xbf16, #tpu.memory_space<vmem>>, vector<1x32x32xbf16>
    %139 = vector.shape_cast %138 : vector<1x32x32xbf16> to vector<32x32xbf16>
    %c1_93 = arith.constant 1 : index
    %c0_94 = arith.constant 0 : index
    %c0_95 = arith.constant 0 : index
    %140 = vector.load %arg13[%c1_93, %c0_94, %c0_95] : memref<2x1x32xf32, #tpu.memory_space<vmem>>, vector<1x1x32xf32>
    %141 = vector.shape_cast %140 : vector<1x1x32xf32> to vector<1x32xf32>
    %c1_96 = arith.constant 1 : index
    %c0_97 = arith.constant 0 : index
    %c0_98 = arith.constant 0 : index
    %142 = vector.load %arg14[%c1_96, %c0_97, %c0_98] : memref<2x1x32xf32, #tpu.memory_space<vmem>>, vector<1x1x32xf32>
    %143 = vector.shape_cast %142 : vector<1x1x32xf32> to vector<1x32xf32>
    %c1_99 = arith.constant 1 : index
    %c0_100 = arith.constant 0 : index
    %c0_101 = arith.constant 0 : index
    %144 = vector.load %arg15[%c1_99, %c0_100, %c0_101] : memref<2x1x32xf32, #tpu.memory_space<vmem>>, vector<1x1x32xf32>
    %145 = vector.shape_cast %144 : vector<1x1x32xf32> to vector<1x32xf32>
    %cst_102 = arith.constant 0.000000e+00 : f32
    %146 = vector.broadcast %cst_102 : f32 to vector<2x32xf32>
    %c0_i32_103 = arith.constant 0 : i32
    %c16_i32_104 = arith.constant 16 : i32
    %147 = arith.addi %c0_i32_103, %c16_i32_104 : i32
    %c1_i32_105 = arith.constant 1 : i32
    %148 = scf.for %arg23 = %c0_i32_103 to %147 step %c1_i32_105 iter_args(%arg24 = %146) -> (vector<2x32xf32>)  : i32 {
      %159 = arith.truncf %arg24 : vector<2x32xf32> to vector<2x32xbf16>
      %cst_118 = arith.constant dense<0.000000e+00> : vector<2x32xf32>
      %160 = tpu.matmul %159, %135, %cst_118 {dimension_numbers = #tpu.dot_dimension_numbers<[1], [0], [0], [1], [0, 0, 1, 1], [], []>} : vector<2x32xbf16>, vector<32x32xbf16>, vector<2x32xf32> -> vector<2x32xf32>
      %161 = vector.broadcast %141 : vector<1x32xf32> to vector<2x32xf32>
      %162 = arith.addf %160, %161 : vector<2x32xf32>
      %cst_119 = arith.constant dense<0.000000e+00> : vector<2x32xf32>
      %163 = tpu.matmul %159, %137, %cst_119 {dimension_numbers = #tpu.dot_dimension_numbers<[1], [0], [0], [1], [0, 0, 1, 1], [], []>} : vector<2x32xbf16>, vector<32x32xbf16>, vector<2x32xf32> -> vector<2x32xf32>
      %164 = vector.broadcast %143 : vector<1x32xf32> to vector<2x32xf32>
      %165 = arith.addf %163, %164 : vector<2x32xf32>
      %cst_120 = arith.constant dense<0.000000e+00> : vector<2x32xf32>
      %166 = tpu.matmul %159, %139, %cst_120 {dimension_numbers = #tpu.dot_dimension_numbers<[1], [0], [0], [1], [0, 0, 1, 1], [], []>} : vector<2x32xbf16>, vector<32x32xbf16>, vector<2x32xf32> -> vector<2x32xf32>
      %167 = vector.broadcast %145 : vector<1x32xf32> to vector<2x32xf32>
      %168 = arith.addf %166, %167 : vector<2x32xf32>
      %169 = arith.index_cast %arg23 : i32 to index
      %c0_121 = arith.constant 0 : index
      %c0_122 = arith.constant 0 : index
      %170 = vector.load %arg20[%169, %c0_121, %c0_122] : memref<16x2x32xf32, #tpu.memory_space<vmem>>, vector<1x2x32xf32>
      %171 = vector.shape_cast %170 : vector<1x2x32xf32> to vector<2x32xf32>
      %172 = arith.addf %171, %162 : vector<2x32xf32>
      %173 = arith.negf %172 : vector<2x32xf32>
      %174 = math.exp %173 : vector<2x32xf32>
      %cst_123 = arith.constant 1.000000e+00 : f32
      %175 = vector.broadcast %cst_123 : f32 to vector<2x32xf32>
      %176 = arith.addf %175, %174 : vector<2x32xf32>
      %177 = arith.divf %175, %176 : vector<2x32xf32>
      %178 = arith.index_cast %arg23 : i32 to index
      %c0_124 = arith.constant 0 : index
      %c0_125 = arith.constant 0 : index
      %179 = vector.load %arg21[%178, %c0_124, %c0_125] : memref<16x2x32xf32, #tpu.memory_space<vmem>>, vector<1x2x32xf32>
      %180 = vector.shape_cast %179 : vector<1x2x32xf32> to vector<2x32xf32>
      %181 = arith.addf %180, %165 : vector<2x32xf32>
      %182 = arith.negf %181 : vector<2x32xf32>
      %183 = math.exp %182 : vector<2x32xf32>
      %cst_126 = arith.constant 1.000000e+00 : f32
      %184 = vector.broadcast %cst_126 : f32 to vector<2x32xf32>
      %185 = arith.addf %184, %183 : vector<2x32xf32>
      %186 = arith.divf %184, %185 : vector<2x32xf32>
      %187 = arith.index_cast %arg23 : i32 to index
      %c0_127 = arith.constant 0 : index
      %c0_128 = arith.constant 0 : index
      %188 = vector.load %arg22[%187, %c0_127, %c0_128] : memref<16x2x32xf32, #tpu.memory_space<vmem>>, vector<1x2x32xf32>
      %189 = vector.shape_cast %188 : vector<1x2x32xf32> to vector<2x32xf32>
      %190 = arith.mulf %177, %168 : vector<2x32xf32>
      %191 = arith.addf %189, %190 : vector<2x32xf32>
      %192 = math.tanh %191 : vector<2x32xf32>
      %cst_129 = arith.constant 1.000000e+00 : f32
      %193 = vector.broadcast %cst_129 : f32 to vector<2x32xf32>
      %194 = arith.subf %193, %186 : vector<2x32xf32>
      %195 = arith.mulf %194, %192 : vector<2x32xf32>
      %196 = arith.mulf %186, %arg24 : vector<2x32xf32>
      %197 = arith.addf %195, %196 : vector<2x32xf32>
      %198 = arith.index_cast %arg23 : i32 to index
      %c0_130 = arith.constant 0 : index
      %c0_131 = arith.constant 0 : index
      %199 = vector.load %arg19[%198, %c0_130, %c0_131] : memref<16x2x32xf32, #tpu.memory_space<vmem>>, vector<1x2x32xf32>
      %200 = vector.shape_cast %199 : vector<1x2x32xf32> to vector<2x32xf32>
      %201 = vector.shape_cast %197 : vector<2x32xf32> to vector<1x2x32xf32>
      tpu.vector_store %arg19[%198, %c0_130, %c0_131], %201 {strides = array<i32>} : memref<16x2x32xf32, #tpu.memory_space<vmem>>, vector<1x2x32xf32>,
      scf.yield %197 : vector<2x32xf32>
    }
    %c16_i32_106 = arith.constant 16 : i32
    %c0_107 = arith.constant 0 : index
    %c0_108 = arith.constant 0 : index
    %c0_109 = arith.constant 0 : index
    %149 = vector.load %arg19[%c0_107, %c0_108, %c0_109] : memref<16x2x32xf32, #tpu.memory_space<vmem>>, vector<16x2x32xf32>
    %150 = vector.shape_cast %149 : vector<16x2x32xf32> to vector<32x32xf32>
    %151 = arith.truncf %150 : vector<32x32xf32> to vector<32x32xbf16>
    %c0_110 = arith.constant 0 : index
    %c0_111 = arith.constant 0 : index
    %152 = vector.load %arg16[%c0_110, %c0_111] : memref<32x8xbf16, #tpu.memory_space<vmem>>, vector<32x8xbf16>
    %cst_112 = arith.constant dense<0.000000e+00> : vector<32x8xf32>
    %153 = tpu.matmul %151, %152, %cst_112 {dimension_numbers = #tpu.dot_dimension_numbers<[1], [0], [0], [1], [0, 0, 1, 1], [], []>} : vector<32x32xbf16>, vector<32x8xbf16>, vector<32x8xf32> -> vector<32x8xf32>
    %c0_113 = arith.constant 0 : index
    %c0_114 = arith.constant 0 : index
    %154 = vector.load %arg17[%c0_113, %c0_114] : memref<1x8xf32, #tpu.memory_space<vmem>>, vector<1x8xf32>
    %155 = vector.broadcast %154 : vector<1x8xf32> to vector<32x8xf32>
    %156 = arith.addf %153, %155 : vector<32x8xf32>
    %157 = vector.shape_cast %156 : vector<32x8xf32> to vector<16x2x8xf32>
    %c0_115 = arith.constant 0 : index
    %c0_116 = arith.constant 0 : index
    %c0_117 = arith.constant 0 : index
    %158 = vector.load %arg18[%c0_115, %c0_116, %c0_117] : memref<16x2x8xf32, #tpu.memory_space<vmem>>, vector<16x2x8xf32>
    tpu.vector_store %arg18[%c0_115, %c0_116, %c0_117], %157 {strides = array<i32>} : memref<16x2x8xf32, #tpu.memory_space<vmem>>, vector<16x2x8xf32>,
    return
  }
  func.func @transform_0(%arg0: i32) -> (i32, i32, i32) {
    %c0_i32 = arith.constant 0 : i32
    %c0_i32_0 = arith.constant 0 : i32
    %c0_i32_1 = arith.constant 0 : i32
    %c0_i32_2 = arith.constant 0 : i32
    return %c0_i32, %c0_i32_0, %c0_i32_1 : i32, i32, i32
  }
  func.func @transform_1(%arg0: i32) -> (i32, i32) {
    %c0_i32 = arith.constant 0 : i32
    %c0_i32_0 = arith.constant 0 : i32
    %c0_i32_1 = arith.constant 0 : i32
    return %c0_i32, %c0_i32_0 : i32, i32
  }
  func.func @transform_2(%arg0: i32) -> (i32, i32) {
    %c0_i32 = arith.constant 0 : i32
    %c0_i32_0 = arith.constant 0 : i32
    %c0_i32_1 = arith.constant 0 : i32
    return %c0_i32, %c0_i32_0 : i32, i32
  }
  func.func @transform_3(%arg0: i32) -> (i32, i32) {
    %c0_i32 = arith.constant 0 : i32
    %c0_i32_0 = arith.constant 0 : i32
    %c0_i32_1 = arith.constant 0 : i32
    return %c0_i32, %c0_i32_0 : i32, i32
  }
  func.func @transform_4(%arg0: i32) -> (i32, i32) {
    %c0_i32 = arith.constant 0 : i32
    %c0_i32_0 = arith.constant 0 : i32
    %c0_i32_1 = arith.constant 0 : i32
    return %c0_i32, %c0_i32_0 : i32, i32
  }
  func.func @transform_5(%arg0: i32) -> (i32, i32) {
    %c0_i32 = arith.constant 0 : i32
    %c0_i32_0 = arith.constant 0 : i32
    %c0_i32_1 = arith.constant 0 : i32
    return %c0_i32, %c0_i32_0 : i32, i32
  }
  func.func @transform_6(%arg0: i32) -> (i32, i32) {
    %c0_i32 = arith.constant 0 : i32
    %c0_i32_0 = arith.constant 0 : i32
    %c0_i32_1 = arith.constant 0 : i32
    return %c0_i32, %c0_i32_0 : i32, i32
  }
  func.func @transform_7(%arg0: i32) -> (i32, i32, i32) {
    %c0_i32 = arith.constant 0 : i32
    %c0_i32_0 = arith.constant 0 : i32
    %c0_i32_1 = arith.constant 0 : i32
    %c0_i32_2 = arith.constant 0 : i32
    return %c0_i32, %c0_i32_0, %c0_i32_1 : i32, i32, i32
  }
  func.func @transform_8(%arg0: i32) -> (i32, i32, i32) {
    %c0_i32 = arith.constant 0 : i32
    %c0_i32_0 = arith.constant 0 : i32
    %c0_i32_1 = arith.constant 0 : i32
    %c0_i32_2 = arith.constant 0 : i32
    return %c0_i32, %c0_i32_0, %c0_i32_1 : i32, i32, i32
  }
  func.func @transform_9(%arg0: i32) -> (i32, i32, i32) {
    %c0_i32 = arith.constant 0 : i32
    %c0_i32_0 = arith.constant 0 : i32
    %c0_i32_1 = arith.constant 0 : i32
    %c0_i32_2 = arith.constant 0 : i32
    return %c0_i32, %c0_i32_0, %c0_i32_1 : i32, i32, i32
  }
  func.func @transform_10(%arg0: i32) -> (i32, i32, i32) {
    %c0_i32 = arith.constant 0 : i32
    %c0_i32_0 = arith.constant 0 : i32
    %c0_i32_1 = arith.constant 0 : i32
    %c0_i32_2 = arith.constant 0 : i32
    return %c0_i32, %c0_i32_0, %c0_i32_1 : i32, i32, i32
  }
  func.func @transform_11(%arg0: i32) -> (i32, i32, i32) {
    %c0_i32 = arith.constant 0 : i32
    %c0_i32_0 = arith.constant 0 : i32
    %c0_i32_1 = arith.constant 0 : i32
    %c0_i32_2 = arith.constant 0 : i32
    return %c0_i32, %c0_i32_0, %c0_i32_1 : i32, i32, i32
  }
  func.func @transform_12(%arg0: i32) -> (i32, i32, i32) {
    %c0_i32 = arith.constant 0 : i32
    %c0_i32_0 = arith.constant 0 : i32
    %c0_i32_1 = arith.constant 0 : i32
    %c0_i32_2 = arith.constant 0 : i32
    return %c0_i32, %c0_i32_0, %c0_i32_1 : i32, i32, i32
  }
  func.func @transform_13(%arg0: i32) -> (i32, i32, i32) {
    %c0_i32 = arith.constant 0 : i32
    %c0_i32_0 = arith.constant 0 : i32
    %c0_i32_1 = arith.constant 0 : i32
    %c0_i32_2 = arith.constant 0 : i32
    return %c0_i32, %c0_i32_0, %c0_i32_1 : i32, i32, i32
  }
  func.func @transform_14(%arg0: i32) -> (i32, i32, i32) {
    %c0_i32 = arith.constant 0 : i32
    %c0_i32_0 = arith.constant 0 : i32
    %c0_i32_1 = arith.constant 0 : i32
    %c0_i32_2 = arith.constant 0 : i32
    return %c0_i32, %c0_i32_0, %c0_i32_1 : i32, i32, i32
  }
  func.func @transform_15(%arg0: i32) -> (i32, i32) {
    %c0_i32 = arith.constant 0 : i32
    %c0_i32_0 = arith.constant 0 : i32
    %c0_i32_1 = arith.constant 0 : i32
    return %c0_i32, %c0_i32_0 : i32, i32
  }
  func.func @transform_16(%arg0: i32) -> (i32, i32) {
    %c0_i32 = arith.constant 0 : i32
    %c0_i32_0 = arith.constant 0 : i32
    %c0_i32_1 = arith.constant 0 : i32
    return %c0_i32, %c0_i32_0 : i32, i32
  }
  func.func @transform_17(%arg0: i32) -> (i32, i32, i32) {
    %c0_i32 = arith.constant 0 : i32
    %c0_i32_0 = arith.constant 0 : i32
    %c0_i32_1 = arith.constant 0 : i32
    %c0_i32_2 = arith.constant 0 : i32
    return %c0_i32, %c0_i32_0, %c0_i32_1 : i32, i32, i32
  }
}

</mosaic_0001>

<llo_original>
// kernel: conv_gru_forward.1
$region0: #{conv_gru_forward.1}
  #allocation0 [shape = 'u32[]', space=smem, size = 0x4, offset = 0x4, fixed_abs, tag = 'smem constant byte address 0x4 - core index']
  #allocation1 [shape = 'u32[144,128]{1,0:T(1,128)}', space=vmem, size = 0x12000, scoped, tag = 'internal scratch']
  #allocation2 [shape = 'f32[16,2,32]{2,1,0:T(2,128)}', space=vmem, size = 0x4000, scoped, tag = 'scratch operand']
  #allocation3 [shape = 'f32[16,2,32]{2,1,0:T(2,128)}', space=vmem, size = 0x4000, scoped, tag = 'scratch operand']
  #allocation4 [shape = 'f32[16,2,32]{2,1,0:T(2,128)}', space=vmem, size = 0x4000, scoped, tag = 'scratch operand']
  #allocation5 [shape = 'f32[16,2,32]{2,1,0:T(2,128)}', space=vmem, size = 0x4000, scoped, tag = 'scratch operand']
  %s0 = inlined_call_operand.vmem [shape: f32[26,2,4], index: 0, kind: input, shape index: {}]
  %s1 = inlined_call_operand.vmem [shape: bf16[44,32], index: 1, kind: input, shape index: {}]
  %s2 = inlined_call_operand.vmem [shape: f32[1,32], index: 2, kind: input, shape index: {}]
  %s3 = inlined_call_operand.vmem [shape: bf16[352,32], index: 3, kind: input, shape index: {}]
  %s4 = inlined_call_operand.vmem [shape: f32[1,32], index: 4, kind: input, shape index: {}]
  %s5 = inlined_call_operand.vmem [shape: bf16[352,32], index: 5, kind: input, shape index: {}]
  %s6 = inlined_call_operand.vmem [shape: f32[1,32], index: 6, kind: input, shape index: {}]
  %s7 = inlined_call_operand.vmem [shape: bf16[2,32,96], index: 7, kind: input, shape index: {}]
  %s8 = inlined_call_operand.vmem [shape: bf16[2,32,32], index: 8, kind: input, shape index: {}]
  %s9 = inlined_call_operand.vmem [shape: bf16[2,32,32], index: 9, kind: input, shape index: {}]
  %s10 = inlined_call_operand.vmem [shape: bf16[2,32,32], index: 10, kind: input, shape index: {}]
  %s11 = inlined_call_operand.vmem [shape: f32[2,1,96], index: 11, kind: input, shape index: {}]
  %s12 = inlined_call_operand.vmem [shape: f32[2,1,32], index: 12, kind: input, shape index: {}]
  %s13 = inlined_call_operand.vmem [shape: f32[2,1,32], index: 13, kind: input, shape index: {}]
  %s14 = inlined_call_operand.vmem [shape: f32[2,1,32], index: 14, kind: input, shape index: {}]
  %s15 = inlined_call_operand.vmem [shape: bf16[32,8], index: 15, kind: input, shape index: {}]
  %s16 = inlined_call_operand.vmem [shape: f32[1,8], index: 16, kind: input, shape index: {}]
  %s17 = inlined_call_operand.vmem [shape: f32[16,2,8], index: 17, kind: output, shape index: {}]
  %s18 = sld [smem:[#allocation0]]
  $region92: #{conv_gru_forward.1} parent=0
    _
  %s20 = ssub.s32 1, %s18
  %s21 = scalar_select 0, %s20, %s18
  // Predicated region
  $region2: #{conv_gru_forward.1} parent=0 // pred_check
    _
  $region3: #{conv_gru_forward.1} parent=0 // pred_check_branch
    %23 = sbr.rel (0) target = $region5
  $region4: #{conv_gru_forward.1} parent=0 // pred_region
    _
  $region5: #{conv_gru_forward.1} parent=0 // pred_fallthru
    _
  // Predicated region
  $region6: #{conv_gru_forward.1} parent=0 // pred_check
    _
  $region7: #{conv_gru_forward.1} parent=0 // pred_check_branch
    %25 = sbr.rel (0) target = $region9
  $region8: #{conv_gru_forward.1} parent=0 // pred_region
    _
  $region9: #{conv_gru_forward.1} parent=0 // pred_fallthru
    _
  // Predicated region
  $region10: #{conv_gru_forward.1} parent=0 // pred_check
    _
  $region11: #{conv_gru_forward.1} parent=0 // pred_check_branch
    %27 = sbr.rel (0) target = $region13
  $region12: #{conv_gru_forward.1} parent=0 // pred_region
    _
  $region13: #{conv_gru_forward.1} parent=0 // pred_fallthru
    _
  // Predicated region
  $region14: #{conv_gru_forward.1} parent=0 // pred_check
    _
  $region15: #{conv_gru_forward.1} parent=0 // pred_check_branch
    %29 = sbr.rel (0) target = $region17
  $region16: #{conv_gru_forward.1} parent=0 // pred_region
    _
  $region17: #{conv_gru_forward.1} parent=0 // pred_fallthru
    _
  // Predicated region
  $region18: #{conv_gru_forward.1} parent=0 // pred_check
    _
  $region19: #{conv_gru_forward.1} parent=0 // pred_check_branch
    %31 = sbr.rel (0) target = $region21
  $region20: #{conv_gru_forward.1} parent=0 // pred_region
    _
  $region21: #{conv_gru_forward.1} parent=0 // pred_fallthru
    _
  // Predicated region
  $region22: #{conv_gru_forward.1} parent=0 // pred_check
    _
  $region23: #{conv_gru_forward.1} parent=0 // pred_check_branch
    %33 = sbr.rel (0) target = $region25
  $region24: #{conv_gru_forward.1} parent=0 // pred_region
    _
  $region25: #{conv_gru_forward.1} parent=0 // pred_fallthru
    _
  // Predicated region
  $region26: #{conv_gru_forward.1} parent=0 // pred_check
    _
  $region27: #{conv_gru_forward.1} parent=0 // pred_check_branch
    %35 = sbr.rel (0) target = $region29
  $region28: #{conv_gru_forward.1} parent=0 // pred_region
    _
  $region29: #{conv_gru_forward.1} parent=0 // pred_fallthru
    _
  // Predicated region
  $region30: #{conv_gru_forward.1} parent=0 // pred_check
    _
  $region31: #{conv_gru_forward.1} parent=0 // pred_check_branch
    %37 = sbr.rel (0) target = $region33
  $region32: #{conv_gru_forward.1} parent=0 // pred_region
    _
  $region33: #{conv_gru_forward.1} parent=0 // pred_fallthru
    _
  // Predicated region
  $region34: #{conv_gru_forward.1} parent=0 // pred_check
    _
  $region35: #{conv_gru_forward.1} parent=0 // pred_check_branch
    %39 = sbr.rel (0) target = $region37
  $region36: #{conv_gru_forward.1} parent=0 // pred_region
    _
  $region37: #{conv_gru_forward.1} parent=0 // pred_fallthru
    _
  // Predicated region
  $region38: #{conv_gru_forward.1} parent=0 // pred_check
    _
  $region39: #{conv_gru_forward.1} parent=0 // pred_check_branch
    %41 = sbr.rel (0) target = $region41
  $region40: #{conv_gru_forward.1} parent=0 // pred_region
    _
  $region41: #{conv_gru_forward.1} parent=0 // pred_fallthru
    _
  // Predicated region
  $region42: #{conv_gru_forward.1} parent=0 // pred_check
    _
  $region43: #{conv_gru_forward.1} parent=0 // pred_check_branch
    %43 = sbr.rel (0) target = $region45
  $region44: #{conv_gru_forward.1} parent=0 // pred_region
    _
  $region45: #{conv_gru_forward.1} parent=0 // pred_fallthru
    _
  // Predicated region
  $region46: #{conv_gru_forward.1} parent=0 // pred_check
    _
  $region47: #{conv_gru_forward.1} parent=0 // pred_check_branch
    %45 = sbr.rel (0) target = $region49
  $region48: #{conv_gru_forward.1} parent=0 // pred_region
    _
  $region49: #{conv_gru_forward.1} parent=0 // pred_fallthru
    _
  // Predicated region
  $region50: #{conv_gru_forward.1} parent=0 // pred_check
    _
  $region51: #{conv_gru_forward.1} parent=0 // pred_check_branch
    %47 = sbr.rel (0) target = $region53
  $region52: #{conv_gru_forward.1} parent=0 // pred_region
    _
  $region53: #{conv_gru_forward.1} parent=0 // pred_fallthru
    _
  // Predicated region
  $region54: #{conv_gru_forward.1} parent=0 // pred_check
    _
  $region55: #{conv_gru_forward.1} parent=0 // pred_check_branch
    %49 = sbr.rel (0) target = $region57
  $region56: #{conv_gru_forward.1} parent=0 // pred_region
    _
  $region57: #{conv_gru_forward.1} parent=0 // pred_fallthru
    _
  // Predicated region
  $region58: #{conv_gru_forward.1} parent=0 // pred_check
    _
  $region59: #{conv_gru_forward.1} parent=0 // pred_check_branch
    %51 = sbr.rel (0) target = $region61
  $region60: #{conv_gru_forward.1} parent=0 // pred_region
    _
  $region61: #{conv_gru_forward.1} parent=0 // pred_fallthru
    _
  // Predicated region
  $region62: #{conv_gru_forward.1} parent=0 // pred_check
    _
  $region63: #{conv_gru_forward.1} parent=0 // pred_check_branch
    %53 = sbr.rel (0) target = $region65
  $region64: #{conv_gru_forward.1} parent=0 // pred_region
    _
  $region65: #{conv_gru_forward.1} parent=0 // pred_fallthru
    _
  // Predicated region
  $region66: #{conv_gru_forward.1} parent=0 // pred_check
    _
  $region67: #{conv_gru_forward.1} parent=0 // pred_check_branch
    %55 = sbr.rel (0) target = $region69
  $region68: #{conv_gru_forward.1} parent=0 // pred_region
    _
  $region69: #{conv_gru_forward.1} parent=0 // pred_fallthru
    _
  %v57 = vld [vmem:[%s0] sm:$0x3]
  %v58 = vld [vmem:[%s0 + $0x2] sm:$0x3]
  %v59 = vld [vmem:[%s0 + $0x4] sm:$0x3]
  %v60 = vld [vmem:[%s0 + $0x6] sm:$0x3]
  %v61 = vld [vmem:[%s0 + $0x8] sm:$0x3]
  %v62 = vld [vmem:[%s0 + $0xa] sm:$0x3]
  %v63 = vld [vmem:[%s0 + $0xc] sm:$0x3]
  %v64 = vld [vmem:[%s0 + $0xe] sm:$0x3]
  %v65 = vld [vmem:[%s0 + $0x10] sm:$0x3]
  %v66 = vld [vmem:[%s0 + $0x12] sm:$0x3]
  %v67 = vld [vmem:[%s0 + $0x14] sm:$0x3]
  %v68 = vld [vmem:[%s0 + $0x16] sm:$0x3]
  %v69 = vld [vmem:[%s0 + $0x18] sm:$0x3]
  %v70 = vld [vmem:[%s0 + $0x1a] sm:$0x3]
  %v71 = vld [vmem:[%s0 + $0x1c] sm:$0x3]
  %v72 = vld [vmem:[%s0 + $0x1e] sm:$0x3]
  %v73 = vld [vmem:[%s0 + $0x20] sm:$0x3]
  %v74 = vld [vmem:[%s0 + $0x22] sm:$0x3]
  %v75 = vld [vmem:[%s0 + $0x24] sm:$0x3]
  %v76 = vld [vmem:[%s0 + $0x26] sm:$0x3]
  %v77 = vld [vmem:[%s0 + $0x28] sm:$0x3]
  %v78 = vld [vmem:[%s0 + $0x2a] sm:$0x3]
  %v79 = vld [vmem:[%s0 + $0x2c] sm:$0x3]
  %v80 = vld [vmem:[%s0 + $0x2e] sm:$0x3]
  %v81 = vld [vmem:[%s0 + $0x30] sm:$0x3]
  %v82 = vld [vmem:[%s0 + $0x32] sm:$0x3]
  %99 = vrot.lane.b32.xlu0 %v58, 4
  %v100 = vpop.permute.xlu0 %99
  %101 = vrot.lane.b32.xlu0 %v59, 4
  %v102 = vpop.permute.xlu0 %101
  %103 = vrot.lane.b32.xlu0 %v60, 4
  %v104 = vpop.permute.xlu0 %103
  %105 = vrot.lane.b32.xlu0 %v61, 4
  %v106 = vpop.permute.xlu0 %105
  %107 = vrot.lane.b32.xlu0 %v62, 4
  %v108 = vpop.permute.xlu0 %107
  %109 = vrot.lane.b32.xlu0 %v63, 4
  %v110 = vpop.permute.xlu0 %109
  %111 = vrot.lane.b32.xlu0 %v64, 4
  %v112 = vpop.permute.xlu0 %111
  %113 = vrot.lane.b32.xlu0 %v65, 4
  %v114 = vpop.permute.xlu0 %113
  %115 = vrot.lane.b32.xlu0 %v66, 4
  %v116 = vpop.permute.xlu0 %115
  %117 = vrot.lane.b32.xlu0 %v67, 4
  %v118 = vpop.permute.xlu0 %117
  %119 = vrot.lane.b32.xlu0 %v68, 4
  %v120 = vpop.permute.xlu0 %119
  %121 = vrot.lane.b32.xlu0 %v69, 4
  %v122 = vpop.permute.xlu0 %121
  %123 = vrot.lane.b32.xlu0 %v70, 4
  %v124 = vpop.permute.xlu0 %123
  %125 = vrot.lane.b32.xlu0 %v71, 4
  %v126 = vpop.permute.xlu0 %125
  %127 = vrot.lane.b32.xlu0 %v72, 4
  %v128 = vpop.permute.xlu0 %127
  %129 = vrot.lane.b32.xlu0 %v73, 4
  %v130 = vpop.permute.xlu0 %129
  %148 = vrot.lane.b32.xlu0 %v59, 8
  %v149 = vpop.permute.xlu0 %148
  %150 = vrot.lane.b32.xlu0 %v60, 8
  %v151 = vpop.permute.xlu0 %150
  %152 = vrot.lane.b32.xlu0 %v61, 8
  %v153 = vpop.permute.xlu0 %152
  %154 = vrot.lane.b32.xlu0 %v62, 8
  %v155 = vpop.permute.xlu0 %154
  %156 = vrot.lane.b32.xlu0 %v63, 8
  %v157 = vpop.permute.xlu0 %156
  %158 = vrot.lane.b32.xlu0 %v64, 8
  %v159 = vpop.permute.xlu0 %158
  %160 = vrot.lane.b32.xlu0 %v65, 8
  %v161 = vpop.permute.xlu0 %160
  %162 = vrot.lane.b32.xlu0 %v66, 8
  %v163 = vpop.permute.xlu0 %162
  %164 = vrot.lane.b32.xlu0 %v67, 8
  %v165 = vpop.permute.xlu0 %164
  %166 = vrot.lane.b32.xlu0 %v68, 8
  %v167 = vpop.permute.xlu0 %166
  %168 = vrot.lane.b32.xlu0 %v69, 8
  %v169 = vpop.permute.xlu0 %168
  %170 = vrot.lane.b32.xlu0 %v70, 8
  %v171 = vpop.permute.xlu0 %170
  %172 = vrot.lane.b32.xlu0 %v71, 8
  %v173 = vpop.permute.xlu0 %172
  %174 = vrot.lane.b32.xlu0 %v72, 8
  %v175 = vpop.permute.xlu0 %174
  %176 = vrot.lane.b32.xlu0 %v73, 8
  %v177 = vpop.permute.xlu0 %176
  %178 = vrot.lane.b32.xlu0 %v74, 8
  %v179 = vpop.permute.xlu0 %178
  %197 = vrot.lane.b32.xlu0 %v60, 12
  %v198 = vpop.permute.xlu0 %197
  %199 = vrot.lane.b32.xlu0 %v61, 12
  %v200 = vpop.permute.xlu0 %199
  %201 = vrot.lane.b32.xlu0 %v62, 12
  %v202 = vpop.permute.xlu0 %201
  %203 = vrot.lane.b32.xlu0 %v63, 12
  %v204 = vpop.permute.xlu0 %203
  %205 = vrot.lane.b32.xlu0 %v64, 12
  %v206 = vpop.permute.xlu0 %205
  %207 = vrot.lane.b32.xlu0 %v65, 12
  %v208 = vpop.permute.xlu0 %207
  %209 = vrot.lane.b32.xlu0 %v66, 12
  %v210 = vpop.permute.xlu0 %209
  %211 = vrot.lane.b32.xlu0 %v67, 12
  %v212 = vpop.permute.xlu0 %211
  %213 = vrot.lane.b32.xlu0 %v68, 12
  %v214 = vpop.permute.xlu0 %213
  %215 = vrot.lane.b32.xlu0 %v69, 12
  %v216 = vpop.permute.xlu0 %215
  %217 = vrot.lane.b32.xlu0 %v70, 12
  %v218 = vpop.permute.xlu0 %217
  %219 = vrot.lane.b32.xlu0 %v71, 12
  %v220 = vpop.permute.xlu0 %219
  %221 = vrot.lane.b32.xlu0 %v72, 12
  %v222 = vpop.permute.xlu0 %221
  %223 = vrot.lane.b32.xlu0 %v73, 12
  %v224 = vpop.permute.xlu0 %223
  %225 = vrot.lane.b32.xlu0 %v74, 12
  %v226 = vpop.permute.xlu0 %225
  %227 = vrot.lane.b32.xlu0 %v75, 12
  %v228 = vpop.permute.xlu0 %227
  %246 = vrot.lane.b32.xlu0 %v61, 16
  %v247 = vpop.permute.xlu0 %246
  %248 = vrot.lane.b32.xlu0 %v62, 16
  %v249 = vpop.permute.xlu0 %248
  %250 = vrot.lane.b32.xlu0 %v63, 16
  %v251 = vpop.permute.xlu0 %250
  %252 = vrot.lane.b32.xlu0 %v64, 16
  %v253 = vpop.permute.xlu0 %252
  %254 = vrot.lane.b32.xlu0 %v65, 16
  %v255 = vpop.permute.xlu0 %254
  %256 = vrot.lane.b32.xlu0 %v66, 16
  %v257 = vpop.permute.xlu0 %256
  %258 = vrot.lane.b32.xlu0 %v67, 16
  %v259 = vpop.permute.xlu0 %258
  %260 = vrot.lane.b32.xlu0 %v68, 16
  %v261 = vpop.permute.xlu0 %260
  %262 = vrot.lane.b32.xlu0 %v69, 16
  %v263 = vpop.permute.xlu0 %262
  %264 = vrot.lane.b32.xlu0 %v70, 16
  %v265 = vpop.permute.xlu0 %264
  %266 = vrot.lane.b32.xlu0 %v71, 16
  %v267 = vpop.permute.xlu0 %266
  %268 = vrot.lane.b32.xlu0 %v72, 16
  %v269 = vpop.permute.xlu0 %268
  %270 = vrot.lane.b32.xlu0 %v73, 16
  %v271 = vpop.permute.xlu0 %270
  %272 = vrot.lane.b32.xlu0 %v74, 16
  %v273 = vpop.permute.xlu0 %272
  %274 = vrot.lane.b32.xlu0 %v75, 16
  %v275 = vpop.permute.xlu0 %274
  %276 = vrot.lane.b32.xlu0 %v76, 16
  %v277 = vpop.permute.xlu0 %276
  %295 = vrot.lane.b32.xlu0 %v62, 20
  %v296 = vpop.permute.xlu0 %295
  %297 = vrot.lane.b32.xlu0 %v63, 20
  %v298 = vpop.permute.xlu0 %297
  %299 = vrot.lane.b32.xlu0 %v64, 20
  %v300 = vpop.permute.xlu0 %299
  %301 = vrot.lane.b32.xlu0 %v65, 20
  %v302 = vpop.permute.xlu0 %301
  %303 = vrot.lane.b32.xlu0 %v66, 20
  %v304 = vpop.permute.xlu0 %303
  %305 = vrot.lane.b32.xlu0 %v67, 20
  %v306 = vpop.permute.xlu0 %305
  %307 = vrot.lane.b32.xlu0 %v68, 20
  %v308 = vpop.permute.xlu0 %307
  %309 = vrot.lane.b32.xlu0 %v69, 20
  %v310 = vpop.permute.xlu0 %309
  %311 = vrot.lane.b32.xlu0 %v70, 20
  %v312 = vpop.permute.xlu0 %311
  %313 = vrot.lane.b32.xlu0 %v71, 20
  %v314 = vpop.permute.xlu0 %313
  %315 = vrot.lane.b32.xlu0 %v72, 20
  %v316 = vpop.permute.xlu0 %315
  %317 = vrot.lane.b32.xlu0 %v73, 20
  %v318 = vpop.permute.xlu0 %317
  %319 = vrot.lane.b32.xlu0 %v74, 20
  %v320 = vpop.permute.xlu0 %319
  %321 = vrot.lane.b32.xlu0 %v75, 20
  %v322 = vpop.permute.xlu0 %321
  %323 = vrot.lane.b32.xlu0 %v76, 20
  %v324 = vpop.permute.xlu0 %323
  %325 = vrot.lane.b32.xlu0 %v77, 20
  %v326 = vpop.permute.xlu0 %325
  %344 = vrot.lane.b32.xlu0 %v63, 24
  %v345 = vpop.permute.xlu0 %344
  %346 = vrot.lane.b32.xlu0 %v64, 24
  %v347 = vpop.permute.xlu0 %346
  %348 = vrot.lane.b32.xlu0 %v65, 24
  %v349 = vpop.permute.xlu0 %348
  %350 = vrot.lane.b32.xlu0 %v66, 24
  %v351 = vpop.permute.xlu0 %350
  %352 = vrot.lane.b32.xlu0 %v67, 24
  %v353 = vpop.permute.xlu0 %352
  %354 = vrot.lane.b32.xlu0 %v68, 24
  %v355 = vpop.permute.xlu0 %354
  %356 = vrot.lane.b32.xlu0 %v69, 24
  %v357 = vpop.permute.xlu0 %356
  %358 = vrot.lane.b32.xlu0 %v70, 24
  %v359 = vpop.permute.xlu0 %358
  %360 = vrot.lane.b32.xlu0 %v71, 24
  %v361 = vpop.permute.xlu0 %360
  %362 = vrot.lane.b32.xlu0 %v72, 24
  %v363 = vpop.permute.xlu0 %362
  %364 = vrot.lane.b32.xlu0 %v73, 24
  %v365 = vpop.permute.xlu0 %364
  %366 = vrot.lane.b32.xlu0 %v74, 24
  %v367 = vpop.permute.xlu0 %366
  %368 = vrot.lane.b32.xlu0 %v75, 24
  %v369 = vpop.permute.xlu0 %368
  %370 = vrot.lane.b32.xlu0 %v76, 24
  %v371 = vpop.permute.xlu0 %370
  %372 = vrot.lane.b32.xlu0 %v77, 24
  %v373 = vpop.permute.xlu0 %372
  %374 = vrot.lane.b32.xlu0 %v78, 24
  %v375 = vpop.permute.xlu0 %374
  %393 = vrot.lane.b32.xlu0 %v64, 28
  %v394 = vpop.permute.xlu0 %393
  %395 = vrot.lane.b32.xlu0 %v65, 28
  %v396 = vpop.permute.xlu0 %395
  %397 = vrot.lane.b32.xlu0 %v66, 28
  %v398 = vpop.permute.xlu0 %397
  %399 = vrot.lane.b32.xlu0 %v67, 28
  %v400 = vpop.permute.xlu0 %399
  %401 = vrot.lane.b32.xlu0 %v68, 28
  %v402 = vpop.permute.xlu0 %401
  %403 = vrot.lane.b32.xlu0 %v69, 28
  %v404 = vpop.permute.xlu0 %403
  %405 = vrot.lane.b32.xlu0 %v70, 28
  %v406 = vpop.permute.xlu0 %405
  %407 = vrot.lane.b32.xlu0 %v71, 28
  %v408 = vpop.permute.xlu0 %407
  %409 = vrot.lane.b32.xlu0 %v72, 28
  %v410 = vpop.permute.xlu0 %409
  %411 = vrot.lane.b32.xlu0 %v73, 28
  %v412 = vpop.permute.xlu0 %411
  %413 = vrot.lane.b32.xlu0 %v74, 28
  %v414 = vpop.permute.xlu0 %413
  %415 = vrot.lane.b32.xlu0 %v75, 28
  %v416 = vpop.permute.xlu0 %415
  %417 = vrot.lane.b32.xlu0 %v76, 28
  %v418 = vpop.permute.xlu0 %417
  %419 = vrot.lane.b32.xlu0 %v77, 28
  %v420 = vpop.permute.xlu0 %419
  %421 = vrot.lane.b32.xlu0 %v78, 28
  %v422 = vpop.permute.xlu0 %421
  %423 = vrot.lane.b32.xlu0 %v79, 28
  %v424 = vpop.permute.xlu0 %423
  %442 = vrot.lane.b32.xlu0 %v65, 32
  %v443 = vpop.permute.xlu0 %442
  %444 = vrot.lane.b32.xlu0 %v66, 32
  %v445 = vpop.permute.xlu0 %444
  %446 = vrot.lane.b32.xlu0 %v67, 32
  %v447 = vpop.permute.xlu0 %446
  %448 = vrot.lane.b32.xlu0 %v68, 32
  %v449 = vpop.permute.xlu0 %448
  %450 = vrot.lane.b32.xlu0 %v69, 32
  %v451 = vpop.permute.xlu0 %450
  %452 = vrot.lane.b32.xlu0 %v70, 32
  %v453 = vpop.permute.xlu0 %452
  %454 = vrot.lane.b32.xlu0 %v71, 32
  %v455 = vpop.permute.xlu0 %454
  %456 = vrot.lane.b32.xlu0 %v72, 32
  %v457 = vpop.permute.xlu0 %456
  %458 = vrot.lane.b32.xlu0 %v73, 32
  %v459 = vpop.permute.xlu0 %458
  %460 = vrot.lane.b32.xlu0 %v74, 32
  %v461 = vpop.permute.xlu0 %460
  %462 = vrot.lane.b32.xlu0 %v75, 32
  %v463 = vpop.permute.xlu0 %462
  %464 = vrot.lane.b32.xlu0 %v76, 32
  %v465 = vpop.permute.xlu0 %464
  %466 = vrot.lane.b32.xlu0 %v77, 32
  %v467 = vpop.permute.xlu0 %466
  %468 = vrot.lane.b32.xlu0 %v78, 32
  %v469 = vpop.permute.xlu0 %468
  %470 = vrot.lane.b32.xlu0 %v79, 32
  %v471 = vpop.permute.xlu0 %470
  %472 = vrot.lane.b32.xlu0 %v80, 32
  %v473 = vpop.permute.xlu0 %472
  %491 = vrot.lane.b32.xlu0 %v66, 36
  %v492 = vpop.permute.xlu0 %491
  %493 = vrot.lane.b32.xlu0 %v67, 36
  %v494 = vpop.permute.xlu0 %493
  %495 = vrot.lane.b32.xlu0 %v68, 36
  %v496 = vpop.permute.xlu0 %495
  %497 = vrot.lane.b32.xlu0 %v69, 36
  %v498 = vpop.permute.xlu0 %497
  %499 = vrot.lane.b32.xlu0 %v70, 36
  %v500 = vpop.permute.xlu0 %499
  %501 = vrot.lane.b32.xlu0 %v71, 36
  %v502 = vpop.permute.xlu0 %501
  %503 = vrot.lane.b32.xlu0 %v72, 36
  %v504 = vpop.permute.xlu0 %503
  %505 = vrot.lane.b32.xlu0 %v73, 36
  %v506 = vpop.permute.xlu0 %505
  %507 = vrot.lane.b32.xlu0 %v74, 36
  %v508 = vpop.permute.xlu0 %507
  %509 = vrot.lane.b32.xlu0 %v75, 36
  %v510 = vpop.permute.xlu0 %509
  %511 = vrot.lane.b32.xlu0 %v76, 36
  %v512 = vpop.permute.xlu0 %511
  %513 = vrot.lane.b32.xlu0 %v77, 36
  %v514 = vpop.permute.xlu0 %513
  %515 = vrot.lane.b32.xlu0 %v78, 36
  %v516 = vpop.permute.xlu0 %515
  %517 = vrot.lane.b32.xlu0 %v79, 36
  %v518 = vpop.permute.xlu0 %517
  %519 = vrot.lane.b32.xlu0 %v80, 36
  %v520 = vpop.permute.xlu0 %519
  %521 = vrot.lane.b32.xlu0 %v81, 36
  %v522 = vpop.permute.xlu0 %521
  %540 = vrot.lane.b32.xlu0 %v67, 40
  %v541 = vpop.permute.xlu0 %540
  %542 = vrot.lane.b32.xlu0 %v68, 40
  %v543 = vpop.permute.xlu0 %542
  %544 = vrot.lane.b32.xlu0 %v69, 40
  %v545 = vpop.permute.xlu0 %544
  %546 = vrot.lane.b32.xlu0 %v70, 40
  %v547 = vpop.permute.xlu0 %546
  %548 = vrot.lane.b32.xlu0 %v71, 40
  %v549 = vpop.permute.xlu0 %548
  %550 = vrot.lane.b32.xlu0 %v72, 40
  %v551 = vpop.permute.xlu0 %550
  %552 = vrot.lane.b32.xlu0 %v73, 40
  %v553 = vpop.permute.xlu0 %552
  %554 = vrot.lane.b32.xlu0 %v74, 40
  %v555 = vpop.permute.xlu0 %554
  %556 = vrot.lane.b32.xlu0 %v75, 40
  %v557 = vpop.permute.xlu0 %556
  %558 = vrot.lane.b32.xlu0 %v76, 40
  %v559 = vpop.permute.xlu0 %558
  %560 = vrot.lane.b32.xlu0 %v77, 40
  %v561 = vpop.permute.xlu0 %560
  %562 = vrot.lane.b32.xlu0 %v78, 40
  %v563 = vpop.permute.xlu0 %562
  %564 = vrot.lane.b32.xlu0 %v79, 40
  %v565 = vpop.permute.xlu0 %564
  %566 = vrot.lane.b32.xlu0 %v80, 40
  %v567 = vpop.permute.xlu0 %566
  %568 = vrot.lane.b32.xlu0 %v81, 40
  %v569 = vpop.permute.xlu0 %568
  %570 = vrot.lane.b32.xlu0 %v82, 40
  %v571 = vpop.permute.xlu0 %570
  %vm588 = vcmask 31744
  %v589 = vsel %vm588, %v57, %v100
  %v590 = vsel %vm588, %v58, %v102
  %v591 = vsel %vm588, %v59, %v104
  %v592 = vsel %vm588, %v60, %v106
  %v593 = vsel %vm588, %v61, %v108
  %v594 = vsel %vm588, %v62, %v110
  %v595 = vsel %vm588, %v63, %v112
  %v596 = vsel %vm588, %v64, %v114
  %v597 = vsel %vm588, %v65, %v116
  %v598 = vsel %vm588, %v66, %v118
  %v599 = vsel %vm588, %v67, %v120
  %v600 = vsel %vm588, %v68, %v122
  %v601 = vsel %vm588, %v69, %v124
  %v602 = vsel %vm588, %v70, %v126
  %v603 = vsel %vm588, %v71, %v128
  %v604 = vsel %vm588, %v72, %v130
  %vm605 = vcmask 64512
  %v606 = vsel %vm605, %v589, %v149
  %v607 = vsel %vm605, %v590, %v151
  %v608 = vsel %vm605, %v591, %v153
  %v609 = vsel %vm605, %v592, %v155
  %v610 = vsel %vm605, %v593, %v157
  %v611 = vsel %vm605, %v594, %v159
  %v612 = vsel %vm605, %v595, %v161
  %v613 = vsel %vm605, %v596, %v163
  %v614 = vsel %vm605, %v597, %v165
  %v615 = vsel %vm605, %v598, %v167
  %v616 = vsel %vm605, %v599, %v169
  %v617 = vsel %vm605, %v600, %v171
  %v618 = vsel %vm605, %v601, %v173
  %v619 = vsel %vm605, %v602, %v175
  %v620 = vsel %vm605, %v603, %v177
  %v621 = vsel %vm605, %v604, %v179
  %vm622 = vcmask 97280
  %v623 = vsel %vm622, %v606, %v198
  %v624 = vsel %vm622, %v607, %v200
  %v625 = vsel %vm622, %v608, %v202
  %v626 = vsel %vm622, %v609, %v204
  %v627 = vsel %vm622, %v610, %v206
  %v628 = vsel %vm622, %v611, %v208
  %v629 = vsel %vm622, %v612, %v210
  %v630 = vsel %vm622, %v613, %v212
  %v631 = vsel %vm622, %v614, %v214
  %v632 = vsel %vm622, %v615, %v216
  %v633 = vsel %vm622, %v616, %v218
  %v634 = vsel %vm622, %v617, %v220
  %v635 = vsel %vm622, %v618, %v222
  %v636 = vsel %vm622, %v619, %v224
  %v637 = vsel %vm622, %v620, %v226
  %v638 = vsel %vm622, %v621, %v228
  %vm639 = vcmask 130048
  %v640 = vsel %vm639, %v623, %v247
  %v641 = vsel %vm639, %v624, %v249
  %v642 = vsel %vm639, %v625, %v251
  %v643 = vsel %vm639, %v626, %v253
  %v644 = vsel %vm639, %v627, %v255
  %v645 = vsel %vm639, %v628, %v257
  %v646 = vsel %vm639, %v629, %v259
  %v647 = vsel %vm639, %v630, %v261
  %v648 = vsel %vm639, %v631, %v263
  %v649 = vsel %vm639, %v632, %v265
  %v650 = vsel %vm639, %v633, %v267
  %v651 = vsel %vm639, %v634, %v269
  %v652 = vsel %vm639, %v635, %v271
  %v653 = vsel %vm639, %v636, %v273
  %v654 = vsel %vm639, %v637, %v275
  %v655 = vsel %vm639, %v638, %v277
  %vm656 = vcmask 162816
  %v657 = vsel %vm656, %v640, %v296
  %v658 = vsel %vm656, %v641, %v298
  %v659 = vsel %vm656, %v642, %v300
  %v660 = vsel %vm656, %v643, %v302
  %v661 = vsel %vm656, %v644, %v304
  %v662 = vsel %vm656, %v645, %v306
  %v663 = vsel %vm656, %v646, %v308
  %v664 = vsel %vm656, %v647, %v310
  %v665 = vsel %vm656, %v648, %v312
  %v666 = vsel %vm656, %v649, %v314
  %v667 = vsel %vm656, %v650, %v316
  %v668 = vsel %vm656, %v651, %v318
  %v669 = vsel %vm656, %v652, %v320
  %v670 = vsel %vm656, %v653, %v322
  %v671 = vsel %vm656, %v654, %v324
  %v672 = vsel %vm656, %v655, %v326
  %vm673 = vcmask 195584
  %v674 = vsel %vm673, %v657, %v345
  %v675 = vsel %vm673, %v658, %v347
  %v676 = vsel %vm673, %v659, %v349
  %v677 = vsel %vm673, %v660, %v351
  %v678 = vsel %vm673, %v661, %v353
  %v679 = vsel %vm673, %v662, %v355
  %v680 = vsel %vm673, %v663, %v357
  %v681 = vsel %vm673, %v664, %v359
  %v682 = vsel %vm673, %v665, %v361
  %v683 = vsel %vm673, %v666, %v363
  %v684 = vsel %vm673, %v667, %v365
  %v685 = vsel %vm673, %v668, %v367
  %v686 = vsel %vm673, %v669, %v369
  %v687 = vsel %vm673, %v670, %v371
  %v688 = vsel %vm673, %v671, %v373
  %v689 = vsel %vm673, %v672, %v375
  %vm690 = vcmask 228352
  %v691 = vsel %vm690, %v674, %v394
  %v692 = vsel %vm690, %v675, %v396
  %v693 = vsel %vm690, %v676, %v398
  %v694 = vsel %vm690, %v677, %v400
  %v695 = vsel %vm690, %v678, %v402
  %v696 = vsel %vm690, %v679, %v404
  %v697 = vsel %vm690, %v680, %v406
  %v698 = vsel %vm690, %v681, %v408
  %v699 = vsel %vm690, %v682, %v410
  %v700 = vsel %vm690, %v683, %v412
  %v701 = vsel %vm690, %v684, %v414
  %v702 = vsel %vm690, %v685, %v416
  %v703 = vsel %vm690, %v686, %v418
  %v704 = vsel %vm690, %v687, %v420
  %v705 = vsel %vm690, %v688, %v422
  %v706 = vsel %vm690, %v689, %v424
  %vm707 = vcmask 261120
  %v708 = vsel %vm707, %v691, %v443
  %v709 = vsel %vm707, %v692, %v445
  %v710 = vsel %vm707, %v693, %v447
  %v711 = vsel %vm707, %v694, %v449
  %v712 = vsel %vm707, %v695, %v451
  %v713 = vsel %vm707, %v696, %v453
  %v714 = vsel %vm707, %v697, %v455
  %v715 = vsel %vm707, %v698, %v457
  %v716 = vsel %vm707, %v699, %v459
  %v717 = vsel %vm707, %v700, %v461
  %v718 = vsel %vm707, %v701, %v463
  %v719 = vsel %vm707, %v702, %v465
  %v720 = vsel %vm707, %v703, %v467
  %v721 = vsel %vm707, %v704, %v469
  %v722 = vsel %vm707, %v705, %v471
  %v723 = vsel %vm707, %v706, %v473
  %vm724 = vcmask 293888
  %v725 = vsel %vm724, %v708, %v492
  %v726 = vsel %vm724, %v709, %v494
  %v727 = vsel %vm724, %v710, %v496
  %v728 = vsel %vm724, %v711, %v498
  %v729 = vsel %vm724, %v712, %v500
  %v730 = vsel %vm724, %v713, %v502
  %v731 = vsel %vm724, %v714, %v504
  %v732 = vsel %vm724, %v715, %v506
  %v733 = vsel %vm724, %v716, %v508
  %v734 = vsel %vm724, %v717, %v510
  %v735 = vsel %vm724, %v718, %v512
  %v736 = vsel %vm724, %v719, %v514
  %v737 = vsel %vm724, %v720, %v516
  %v738 = vsel %vm724, %v721, %v518
  %v739 = vsel %vm724, %v722, %v520
  %v740 = vsel %vm724, %v723, %v522
  %vm741 = vcmask 326656
  %v742 = vsel %vm741, %v725, %v541
  %v743 = vsel %vm741, %v726, %v543
  %v744 = vsel %vm741, %v727, %v545
  %v745 = vsel %vm741, %v728, %v547
  %v746 = vsel %vm741, %v729, %v549
  %v747 = vsel %vm741, %v730, %v551
  %v748 = vsel %vm741, %v731, %v553
  %v749 = vsel %vm741, %v732, %v555
  %v750 = vsel %vm741, %v733, %v557
  %v751 = vsel %vm741, %v734, %v559
  %v752 = vsel %vm741, %v735, %v561
  %v753 = vsel %vm741, %v736, %v563
  %v754 = vsel %vm741, %v737, %v565
  %v755 = vsel %vm741, %v738, %v567
  %v756 = vsel %vm741, %v739, %v569
  %v757 = vsel %vm741, %v740, %v571
  %v774 = vcombine.low %v742, %v743
  %v775 = vcombine.low %v744, %v745
  %v777 = vunpack.c.l.s4 1983009808
  %v778 = vunpack.c.0.s8 %v777
  %v779 = vlaneseq
  %v780 = vshrl.u32 %v779, 7
  %v781 = vsub.s32 %v778, %v780
  %v782 = vrot.slane %v774, %v781
  %v784 = vunpack.c.l.s4 1983009808
  %v785 = vunpack.c.0.s8 %v784
  %v786 = vlaneseq
  %v787 = vshrl.u32 %v786, 7
  %v788 = vsub.s32 %v785, %v787
  %v789 = vrot.slane %v775, %v788
  %v790 = vcombine.low %v782, %v789
  %v791 = vcombine.low %v746, %v747
  %v792 = vcombine.low %v748, %v749
  %v794 = vunpack.c.l.s4 1983009808
  %v795 = vunpack.c.0.s8 %v794
  %v796 = vlaneseq
  %v797 = vshrl.u32 %v796, 7
  %v798 = vsub.s32 %v795, %v797
  %v799 = vrot.slane %v791, %v798
  %v801 = vunpack.c.l.s4 1983009808
  %v802 = vunpack.c.0.s8 %v801
  %v803 = vlaneseq
  %v804 = vshrl.u32 %v803, 7
  %v805 = vsub.s32 %v802, %v804
  %v806 = vrot.slane %v792, %v805
  %v807 = vcombine.low %v799, %v806
  %v808 = vcombine.low %v750, %v751
  %v809 = vcombine.low %v752, %v753
  %v811 = vunpack.c.l.s4 1983009808
  %v812 = vunpack.c.0.s8 %v811
  %v813 = vlaneseq
  %v814 = vshrl.u32 %v813, 7
  %v815 = vsub.s32 %v812, %v814
  %v816 = vrot.slane %v808, %v815
  %v818 = vunpack.c.l.s4 1983009808
  %v819 = vunpack.c.0.s8 %v818
  %v820 = vlaneseq
  %v821 = vshrl.u32 %v820, 7
  %v822 = vsub.s32 %v819, %v821
  %v823 = vrot.slane %v809, %v822
  %v824 = vcombine.low %v816, %v823
  %v825 = vcombine.low %v754, %v755
  %v826 = vcombine.low %v756, %v757
  %v828 = vunpack.c.l.s4 1983009808
  %v829 = vunpack.c.0.s8 %v828
  %v830 = vlaneseq
  %v831 = vshrl.u32 %v830, 7
  %v832 = vsub.s32 %v829, %v831
  %v833 = vrot.slane %v825, %v832
  %v835 = vunpack.c.l.s4 1983009808
  %v836 = vunpack.c.0.s8 %v835
  %v837 = vlaneseq
  %v838 = vshrl.u32 %v837, 7
  %v839 = vsub.s32 %v836, %v838
  %v840 = vrot.slane %v826, %v839
  %v841 = vcombine.low %v833, %v840
  %v846 = vpack.c.bf16 %v807, %v790
  %v847 = vpack.c.bf16 %v841, %v824
  %v848 = vld [vmem:[%s1] sm:$0xf]
  %v849 = vld [vmem:[%s1 + $0x4] sm:$0xf]
  %v850 = vld [vmem:[%s1 + $0x8] sm:$0xf]
  %v851 = vld [vmem:[%s1 + $0xc] sm:$0xf]
  %v852 = vld [vmem:[%s1 + $0x10] sm:$0xf]
  %v853 = vld [vmem:[%s1 + $0x14] sm:$0x3]
  %v854 = vld [vmem:[%s2] sm:$0x1]
  %v856 = vlaneseq
  %v857 = vshrl.u32 %v856, 7
  %v858 = vsub.s32 0, %v857
  %v859 = vrot.slane %v854, %v858
  %v867 = vunpack.c.l.b16 %v848
  %v868 = vunpack.c.l.b16 %v849
  %v869 = vunpack.c.l.b16 %v850
  %v870 = vunpack.c.l.b16 %v851
  %v871 = vunpack.c.l.b16 %v852
  %v872 = vunpack.c.l.b16 %v853
  %v873 = vpack.c.b16 %v868, %v867
  %v874 = vpack.c.b16 %v870, %v869
  %v875 = vpack.c.b16 %v872, %v871
  %vm878 = vcmask 359424
  %v880 = vsel %vm878, %v846, 0
  %v883 = vsel %vm878, %v847, 0
  %vm885 = vcmask 1045504
  %v887 = vsel %vm885, %v875, 0
  %889 = vmatprep.subr.bf16.mxu0 0
  %890 = vmatpush1.bf16.msra.mxu0 %v873
  %891 = vmatprep.subr.bf16.mxu0 0
  %892 = vmatpush1.bf16.msra.mxu0 %v874
  %893 = vmatprep.subr.bf16.mxu0 0
  %894 = vmatpush1.bf16.msra.mxu0 %v887
  %895 = vmatprep.subr.bf16.mxu0 0
  %896 = vmatpush1.bf16.msra.mxu0 0
  %897 = vmatprep.subr.bf16.mxu0 0
  %898 = vmatpush1.bf16.msra.mxu0 0
  %899 = vmatprep.subr.bf16.mxu0 0
  %900 = vmatpush1.bf16.msra.mxu0 0
  %901 = vmatprep.subr.bf16.mxu0 0
  %902 = vmatpush1.bf16.msra.mxu0 0
  %903 = vmatprep.subr.bf16.mxu0 0
  %904 = vmatpush1.bf16.msra.mxu0 0
  %905 = vmatprep.subr.bf16.mxu0 0
  %906 = vmatpush1.bf16.msra.mxu0 0
  %907 = vmatprep.subr.bf16.mxu0 0
  %908 = vmatpush1.bf16.msra.mxu0 0
  %909 = vmatprep.subr.bf16.mxu0 0
  %910 = vmatpush1.bf16.msra.mxu0 0
  %911 = vmatprep.subr.bf16.mxu0 0
  %912 = vmatpush1.bf16.msra.mxu0 0
  %913 = vmatprep.subr.bf16.mxu0 0
  %914 = vmatpush1.bf16.msra.mxu0 0
  %915 = vmatprep.subr.bf16.mxu0 0
  %916 = vmatpush1.bf16.msra.mxu0 0
  %917 = vmatprep.subr.bf16.mxu0 0
  %918 = vmatpush1.bf16.msra.mxu0 0
  %919 = vmatprep.subr.bf16.mxu0 0
  %920 = vmatpush1.bf16.msra.mxu0 0
  %921 = vmatprep.mubr.bf16.mxu0 0
  %922 = vmatmul.mubr.bf16.gmra.mrb[0].mxu0 %v880
  %v923 = vpop.f32.mrb[0].mxu0
  %v924 = vadd.f32 %v859, %v923
  %v925 = vpop.f32.mrb[0].mxu0
  %v926 = vpop.f32.mrb[0].mxu0
  %v927 = vadd.f32 %v859, %v926
  %v928 = vpop.f32.mrb[0].mxu0
  %929 = vmatprep.mubr.bf16.mxu0 0
  %930 = vmatmul.mubr.bf16.gmra.mrb[0].mxu0 %v883
  %v931 = vpop.f32.mrb[0].mxu0
  %v932 = vadd.f32 %v859, %v931
  %v933 = vpop.f32.mrb[0].mxu0
  %v934 = vpop.f32.mrb[0].mxu0
  %v935 = vadd.f32 %v859, %v934
  %v936 = vpop.f32.mrb[0].mxu0
  %937 = vdwg.mxu0
  %vm938 = vcmp.ge.f32.partialorder %v924, 0.0
  %vm939 = vcmp.ge.f32.partialorder %v927, 0.0
  %vm940 = vcmp.ge.f32.partialorder %v932, 0.0
  %vm941 = vcmp.ge.f32.partialorder %v935, 0.0
  %v942 = vmul.f32 %v924, 0.1
  %v943 = vmul.f32 %v927, 0.1
  %v944 = vmul.f32 %v932, 0.1
  %v945 = vmul.f32 %v935, 0.1
  %v946 = vsel %vm938, %v924, %v942
  %v947 = vsel %vm939, %v927, %v943
  %v948 = vsel %vm940, %v932, %v944
  %v949 = vsel %vm941, %v935, %v945
  %v954 = vcombine.high %v946, %v946
  %v956 = vunpack.c.l.s4 1983009808
  %v957 = vunpack.c.0.s8 %v956
  %v958 = vlaneseq
  %v959 = vshrl.u32 %v958, 7
  %v960 = vsub.s32 %v957, %v959
  %v961 = vrot.slane %v946, %v960
  %v963 = vunpack.c.l.s4 1983009808
  %v964 = vunpack.c.0.s8 %v963
  %v965 = vlaneseq
  %v966 = vshrl.u32 %v965, 7
  %v967 = vsub.s32 %v964, %v966
  %v968 = vrot.slane %v954, %v967
  %v969 = vcombine.high %v961, %v961
  %v970 = vcombine.high %v968, %v968
  %v971 = vcombine.high %v947, %v947
  %v973 = vunpack.c.l.s4 1983009808
  %v974 = vunpack.c.0.s8 %v973
  %v975 = vlaneseq
  %v976 = vshrl.u32 %v975, 7
  %v977 = vsub.s32 %v974, %v976
  %v978 = vrot.slane %v947, %v977
  %v980 = vunpack.c.l.s4 1983009808
  %v981 = vunpack.c.0.s8 %v980
  %v982 = vlaneseq
  %v983 = vshrl.u32 %v982, 7
  %v984 = vsub.s32 %v981, %v983
  %v985 = vrot.slane %v971, %v984
  %v986 = vcombine.high %v978, %v978
  %v987 = vcombine.high %v985, %v985
  %v988 = vcombine.high %v948, %v948
  %v990 = vunpack.c.l.s4 1983009808
  %v991 = vunpack.c.0.s8 %v990
  %v992 = vlaneseq
  %v993 = vshrl.u32 %v992, 7
  %v994 = vsub.s32 %v991, %v993
  %v995 = vrot.slane %v948, %v994
  %v997 = vunpack.c.l.s4 1983009808
  %v998 = vunpack.c.0.s8 %v997
  %v999 = vlaneseq
  %v1000 = vshrl.u32 %v999, 7
  %v1001 = vsub.s32 %v998, %v1000
  %v1002 = vrot.slane %v988, %v1001
  %v1003 = vcombine.high %v995, %v995
  %v1004 = vcombine.high %v1002, %v1002
  %v1005 = vcombine.high %v949, %v949
  %v1007 = vunpack.c.l.s4 1983009808
  %v1008 = vunpack.c.0.s8 %v1007
  %v1009 = vlaneseq
  %v1010 = vshrl.u32 %v1009, 7
  %v1011 = vsub.s32 %v1008, %v1010
  %v1012 = vrot.slane %v949, %v1011
  %v1014 = vunpack.c.l.s4 1983009808
  %v1015 = vunpack.c.0.s8 %v1014
  %v1016 = vlaneseq
  %v1017 = vshrl.u32 %v1016, 7
  %v1018 = vsub.s32 %v1015, %v1017
  %v1019 = vrot.slane %v1005, %v1018
  %v1020 = vcombine.high %v1012, %v1012
  %v1021 = vcombine.high %v1019, %v1019
  %1039 = vrot.lane.b32.xlu0 0.0, 32
  %v1040 = vpop.permute.xlu0 %1039
  %1041 = vrot.lane.b32.xlu0 %v961, 32
  %v1042 = vpop.permute.xlu0 %1041
  %1043 = vrot.lane.b32.xlu0 %v969, 32
  %v1044 = vpop.permute.xlu0 %1043
  %1045 = vrot.lane.b32.xlu0 %v968, 32
  %v1046 = vpop.permute.xlu0 %1045
  %1047 = vrot.lane.b32.xlu0 %v970, 32
  %v1048 = vpop.permute.xlu0 %1047
  %1049 = vrot.lane.b32.xlu0 %v978, 32
  %v1050 = vpop.permute.xlu0 %1049
  %1051 = vrot.lane.b32.xlu0 %v986, 32
  %v1052 = vpop.permute.xlu0 %1051
  %1053 = vrot.lane.b32.xlu0 %v985, 32
  %v1054 = vpop.permute.xlu0 %1053
  %1055 = vrot.lane.b32.xlu0 %v987, 32
  %v1056 = vpop.permute.xlu0 %1055
  %1057 = vrot.lane.b32.xlu0 %v995, 32
  %v1058 = vpop.permute.xlu0 %1057
  %1059 = vrot.lane.b32.xlu0 %v1003, 32
  %v1060 = vpop.permute.xlu0 %1059
  %1061 = vrot.lane.b32.xlu0 %v1002, 32
  %v1062 = vpop.permute.xlu0 %1061
  %1063 = vrot.lane.b32.xlu0 %v1004, 32
  %v1064 = vpop.permute.xlu0 %1063
  %1078 = vrot.lane.b32.xlu0 0.0, 64
  %v1079 = vpop.permute.xlu0 %1078
  %1080 = vrot.lane.b32.xlu0 %v961, 64
  %v1081 = vpop.permute.xlu0 %1080
  %1082 = vrot.lane.b32.xlu0 %v969, 64
  %v1083 = vpop.permute.xlu0 %1082
  %1084 = vrot.lane.b32.xlu0 %v968, 64
  %v1085 = vpop.permute.xlu0 %1084
  %1086 = vrot.lane.b32.xlu0 %v970, 64
  %v1087 = vpop.permute.xlu0 %1086
  %1088 = vrot.lane.b32.xlu0 %v978, 64
  %v1089 = vpop.permute.xlu0 %1088
  %1090 = vrot.lane.b32.xlu0 %v986, 64
  %v1091 = vpop.permute.xlu0 %1090
  %1092 = vrot.lane.b32.xlu0 %v985, 64
  %v1093 = vpop.permute.xlu0 %1092
  %1094 = vrot.lane.b32.xlu0 %v987, 64
  %v1095 = vpop.permute.xlu0 %1094
  %1096 = vrot.lane.b32.xlu0 %v995, 64
  %v1097 = vpop.permute.xlu0 %1096
  %1098 = vrot.lane.b32.xlu0 %v1003, 64
  %v1099 = vpop.permute.xlu0 %1098
  %1100 = vrot.lane.b32.xlu0 %v1002, 64
  %v1101 = vpop.permute.xlu0 %1100
  %1102 = vrot.lane.b32.xlu0 %v1004, 64
  %v1103 = vpop.permute.xlu0 %1102
  %1104 = vrot.lane.b32.xlu0 %v1012, 64
  %v1105 = vpop.permute.xlu0 %1104
  %1120 = vrot.lane.b32.xlu0 0.0, 96
  %v1121 = vpop.permute.xlu0 %1120
  %1122 = vrot.lane.b32.xlu0 %v961, 96
  %v1123 = vpop.permute.xlu0 %1122
  %1124 = vrot.lane.b32.xlu0 %v969, 96
  %v1125 = vpop.permute.xlu0 %1124
  %1126 = vrot.lane.b32.xlu0 %v968, 96
  %v1127 = vpop.permute.xlu0 %1126
  %1128 = vrot.lane.b32.xlu0 %v970, 96
  %v1129 = vpop.permute.xlu0 %1128
  %1130 = vrot.lane.b32.xlu0 %v978, 96
  %v1131 = vpop.permute.xlu0 %1130
  %1132 = vrot.lane.b32.xlu0 %v986, 96
  %v1133 = vpop.permute.xlu0 %1132
  %1134 = vrot.lane.b32.xlu0 %v985, 96
  %v1135 = vpop.permute.xlu0 %1134
  %1136 = vrot.lane.b32.xlu0 %v987, 96
  %v1137 = vpop.permute.xlu0 %1136
  %1138 = vrot.lane.b32.xlu0 %v995, 96
  %v1139 = vpop.permute.xlu0 %1138
  %1140 = vrot.lane.b32.xlu0 %v1003, 96
  %v1141 = vpop.permute.xlu0 %1140
  %1142 = vrot.lane.b32.xlu0 %v1002, 96
  %v1143 = vpop.permute.xlu0 %1142
  %1144 = vrot.lane.b32.xlu0 %v1004, 96
  %v1145 = vpop.permute.xlu0 %1144
  %1146 = vrot.lane.b32.xlu0 %v1012, 96
  %v1147 = vpop.permute.xlu0 %1146
  %1148 = vrot.lane.b32.xlu0 %v1020, 96
  %v1149 = vpop.permute.xlu0 %1148
  %1165 = vrot.lane.b32.xlu0 %v1012, 32
  %v1166 = vpop.permute.xlu0 %1165
  %1167 = vrot.lane.b32.xlu0 %v1020, 32
  %v1168 = vpop.permute.xlu0 %1167
  %1169 = vrot.lane.b32.xlu0 %v1019, 32
  %v1170 = vpop.permute.xlu0 %1169
  %1171 = vrot.lane.b32.xlu0 %v1021, 32
  %v1172 = vpop.permute.xlu0 %1171
  %1177 = vrot.lane.b32.xlu0 %v1020, 64
  %v1178 = vpop.permute.xlu0 %1177
  %1179 = vrot.lane.b32.xlu0 %v1019, 64
  %v1180 = vpop.permute.xlu0 %1179
  %1181 = vrot.lane.b32.xlu0 %v1021, 64
  %v1182 = vpop.permute.xlu0 %1181
  %1186 = vrot.lane.b32.xlu0 %v1019, 96
  %v1187 = vpop.permute.xlu0 %1186
  %1188 = vrot.lane.b32.xlu0 %v1021, 96
  %v1189 = vpop.permute.xlu0 %1188
  %v1192 = vsel %vm707, 0.0, %v1040
  %v1193 = vsel %vm707, 0.0, %v1042
  %v1194 = vsel %vm707, %v961, %v1044
  %v1195 = vsel %vm707, %v969, %v1046
  %v1196 = vsel %vm707, %v968, %v1048
  %v1197 = vsel %vm707, %v970, %v1050
  %v1198 = vsel %vm707, %v978, %v1052
  %v1199 = vsel %vm707, %v986, %v1054
  %v1200 = vsel %vm707, %v985, %v1056
  %v1201 = vsel %vm707, %v987, %v1058
  %v1202 = vsel %vm707, %v995, %v1060
  %v1203 = vsel %vm707, %v1003, %v1062
  %v1204 = vsel %vm707, %v1002, %v1064
  %vm1205 = vcmask 523264
  %v1206 = vsel %vm1205, %v1192, %v1079
  %v1207 = vsel %vm1205, %v1192, %v1081
  %v1208 = vsel %vm1205, %v1193, %v1083
  %v1209 = vsel %vm1205, %v1194, %v1085
  %v1210 = vsel %vm1205, %v1195, %v1087
  %v1211 = vsel %vm1205, %v1196, %v1089
  %v1212 = vsel %vm1205, %v1197, %v1091
  %v1213 = vsel %vm1205, %v1198, %v1093
  %v1214 = vsel %vm1205, %v1199, %v1095
  %v1215 = vsel %vm1205, %v1200, %v1097
  %v1216 = vsel %vm1205, %v1201, %v1099
  %v1217 = vsel %vm1205, %v1202, %v1101
  %v1218 = vsel %vm1205, %v1203, %v1103
  %v1219 = vsel %vm1205, %v1204, %v1105
  %vm1220 = vcmask 785408
  %v1221 = vsel %vm1220, %v1206, %v1121
  %v1222 = vsel %vm1220, %v1206, %v1123
  %v1223 = vsel %vm1220, %v1207, %v1125
  %v1224 = vsel %vm1220, %v1208, %v1127
  %v1225 = vsel %vm1220, %v1209, %v1129
  %v1226 = vsel %vm1220, %v1210, %v1131
  %v1227 = vsel %vm1220, %v1211, %v1133
  %v1228 = vsel %vm1220, %v1212, %v1135
  %v1229 = vsel %vm1220, %v1213, %v1137
  %v1230 = vsel %vm1220, %v1214, %v1139
  %v1231 = vsel %vm1220, %v1215, %v1141
  %v1232 = vsel %vm1220, %v1216, %v1143
  %v1233 = vsel %vm1220, %v1217, %v1145
  %v1234 = vsel %vm1220, %v1218, %v1147
  %v1235 = vsel %vm1220, %v1219, %v1149
  %v1236 = vsel %vm707, %v1004, %v1166
  %v1237 = vsel %vm707, %v1012, %v1168
  %v1238 = vsel %vm707, %v1020, %v1170
  %v1239 = vsel %vm707, %v1019, %v1172
  %v1240 = vsel %vm1205, %v1236, %v1178
  %v1241 = vsel %vm1205, %v1237, %v1180
  %v1242 = vsel %vm1205, %v1238, %v1182
  %v1243 = vsel %vm1205, %v1239, %v1079
  %v1244 = vsel %vm1220, %v1240, %v1187
  %v1245 = vsel %vm1220, %v1241, %v1189
  %v1246 = vsel %vm1220, %v1242, %v1121
  %v1247 = vsel %vm1220, %v1243, %v1121
  %v1248 = vsel %vm707, %v1021, %v1040
  %v1249 = vsel %vm1205, %v1248, %v1079
  %v1283 = vcombine.low %v1221, %v1224
  %v1285 = vunpack.c.l.s4 1983009808
  %v1286 = vunpack.c.0.s8 %v1285
  %v1287 = vlaneseq
  %v1288 = vshrl.u32 %v1287, 7
  %v1289 = vsub.s32 %v1286, %v1288
  %v1290 = vrot.slane %v1283, %v1289
  %v1292 = vunpack.c.l.s4 1983009808
  %v1293 = vunpack.c.0.s8 %v1292
  %v1294 = vlaneseq
  %v1295 = vshrl.u32 %v1294, 7
  %v1296 = vsub.s32 %v1293, %v1295
  %v1297 = vrot.slane %v1212, %v1296
  %v1298 = vcombine.low %v1290, %v1297
  %v1299 = vcombine.low %v1221, %v1225
  %v1301 = vunpack.c.l.s4 1983009808
  %v1302 = vunpack.c.0.s8 %v1301
  %v1303 = vlaneseq
  %v1304 = vshrl.u32 %v1303, 7
  %v1305 = vsub.s32 %v1302, %v1304
  %v1306 = vrot.slane %v1299, %v1305
  %v1308 = vunpack.c.l.s4 1983009808
  %v1309 = vunpack.c.0.s8 %v1308
  %v1310 = vlaneseq
  %v1311 = vshrl.u32 %v1310, 7
  %v1312 = vsub.s32 %v1309, %v1311
  %v1313 = vrot.slane %v1213, %v1312
  %v1314 = vcombine.low %v1306, %v1313
  %v1315 = vcombine.low %v1222, %v1226
  %v1317 = vunpack.c.l.s4 1983009808
  %v1318 = vunpack.c.0.s8 %v1317
  %v1319 = vlaneseq
  %v1320 = vshrl.u32 %v1319, 7
  %v1321 = vsub.s32 %v1318, %v1320
  %v1322 = vrot.slane %v1315, %v1321
  %v1324 = vunpack.c.l.s4 1983009808
  %v1325 = vunpack.c.0.s8 %v1324
  %v1326 = vlaneseq
  %v1327 = vshrl.u32 %v1326, 7
  %v1328 = vsub.s32 %v1325, %v1327
  %v1329 = vrot.slane %v1214, %v1328
  %v1330 = vcombine.low %v1322, %v1329
  %v1331 = vcombine.low %v1223, %v1227
  %v1333 = vunpack.c.l.s4 1983009808
  %v1334 = vunpack.c.0.s8 %v1333
  %v1335 = vlaneseq
  %v1336 = vshrl.u32 %v1335, 7
  %v1337 = vsub.s32 %v1334, %v1336
  %v1338 = vrot.slane %v1331, %v1337
  %v1340 = vunpack.c.l.s4 1983009808
  %v1341 = vunpack.c.0.s8 %v1340
  %v1342 = vlaneseq
  %v1343 = vshrl.u32 %v1342, 7
  %v1344 = vsub.s32 %v1341, %v1343
  %v1345 = vrot.slane %v1215, %v1344
  %v1346 = vcombine.low %v1338, %v1345
  %v1347 = vcombine.low %v1224, %v1228
  %v1349 = vunpack.c.l.s4 1983009808
  %v1350 = vunpack.c.0.s8 %v1349
  %v1351 = vlaneseq
  %v1352 = vshrl.u32 %v1351, 7
  %v1353 = vsub.s32 %v1350, %v1352
  %v1354 = vrot.slane %v1347, %v1353
  %v1356 = vunpack.c.l.s4 1983009808
  %v1357 = vunpack.c.0.s8 %v1356
  %v1358 = vlaneseq
  %v1359 = vshrl.u32 %v1358, 7
  %v1360 = vsub.s32 %v1357, %v1359
  %v1361 = vrot.slane %v1216, %v1360
  %v1362 = vcombine.low %v1354, %v1361
  %v1363 = vcombine.low %v1225, %v1229
  %v1365 = vunpack.c.l.s4 1983009808
  %v1366 = vunpack.c.0.s8 %v1365
  %v1367 = vlaneseq
  %v1368 = vshrl.u32 %v1367, 7
  %v1369 = vsub.s32 %v1366, %v1368
  %v1370 = vrot.slane %v1363, %v1369
  %v1372 = vunpack.c.l.s4 1983009808
  %v1373 = vunpack.c.0.s8 %v1372
  %v1374 = vlaneseq
  %v1375 = vshrl.u32 %v1374, 7
  %v1376 = vsub.s32 %v1373, %v1375
  %v1377 = vrot.slane %v1217, %v1376
  %v1378 = vcombine.low %v1370, %v1377
  %v1379 = vcombine.low %v1226, %v1230
  %v1381 = vunpack.c.l.s4 1983009808
  %v1382 = vunpack.c.0.s8 %v1381
  %v1383 = vlaneseq
  %v1384 = vshrl.u32 %v1383, 7
  %v1385 = vsub.s32 %v1382, %v1384
  %v1386 = vrot.slane %v1379, %v1385
  %v1388 = vunpack.c.l.s4 1983009808
  %v1389 = vunpack.c.0.s8 %v1388
  %v1390 = vlaneseq
  %v1391 = vshrl.u32 %v1390, 7
  %v1392 = vsub.s32 %v1389, %v1391
  %v1393 = vrot.slane %v1218, %v1392
  %v1394 = vcombine.low %v1386, %v1393
  %v1395 = vcombine.low %v1227, %v1231
  %v1397 = vunpack.c.l.s4 1983009808
  %v1398 = vunpack.c.0.s8 %v1397
  %v1399 = vlaneseq
  %v1400 = vshrl.u32 %v1399, 7
  %v1401 = vsub.s32 %v1398, %v1400
  %v1402 = vrot.slane %v1395, %v1401
  %v1404 = vunpack.c.l.s4 1983009808
  %v1405 = vunpack.c.0.s8 %v1404
  %v1406 = vlaneseq
  %v1407 = vshrl.u32 %v1406, 7
  %v1408 = vsub.s32 %v1405, %v1407
  %v1409 = vrot.slane %v1219, %v1408
  %v1410 = vcombine.low %v1402, %v1409
  %v1411 = vcombine.low %v1228, %v1232
  %v1413 = vunpack.c.l.s4 1983009808
  %v1414 = vunpack.c.0.s8 %v1413
  %v1415 = vlaneseq
  %v1416 = vshrl.u32 %v1415, 7
  %v1417 = vsub.s32 %v1414, %v1416
  %v1418 = vrot.slane %v1411, %v1417
  %v1420 = vunpack.c.l.s4 1983009808
  %v1421 = vunpack.c.0.s8 %v1420
  %v1422 = vlaneseq
  %v1423 = vshrl.u32 %v1422, 7
  %v1424 = vsub.s32 %v1421, %v1423
  %v1425 = vrot.slane %v1240, %v1424
  %v1426 = vcombine.low %v1418, %v1425
  %v1427 = vcombine.low %v1229, %v1233
  %v1429 = vunpack.c.l.s4 1983009808
  %v1430 = vunpack.c.0.s8 %v1429
  %v1431 = vlaneseq
  %v1432 = vshrl.u32 %v1431, 7
  %v1433 = vsub.s32 %v1430, %v1432
  %v1434 = vrot.slane %v1427, %v1433
  %v1436 = vunpack.c.l.s4 1983009808
  %v1437 = vunpack.c.0.s8 %v1436
  %v1438 = vlaneseq
  %v1439 = vshrl.u32 %v1438, 7
  %v1440 = vsub.s32 %v1437, %v1439
  %v1441 = vrot.slane %v1241, %v1440
  %v1442 = vcombine.low %v1434, %v1441
  %v1443 = vcombine.low %v1230, %v1234
  %v1445 = vunpack.c.l.s4 1983009808
  %v1446 = vunpack.c.0.s8 %v1445
  %v1447 = vlaneseq
  %v1448 = vshrl.u32 %v1447, 7
  %v1449 = vsub.s32 %v1446, %v1448
  %v1450 = vrot.slane %v1443, %v1449
  %v1452 = vunpack.c.l.s4 1983009808
  %v1453 = vunpack.c.0.s8 %v1452
  %v1454 = vlaneseq
  %v1455 = vshrl.u32 %v1454, 7
  %v1456 = vsub.s32 %v1453, %v1455
  %v1457 = vrot.slane %v1242, %v1456
  %v1458 = vcombine.low %v1450, %v1457
  %v1459 = vcombine.low %v1231, %v1235
  %v1461 = vunpack.c.l.s4 1983009808
  %v1462 = vunpack.c.0.s8 %v1461
  %v1463 = vlaneseq
  %v1464 = vshrl.u32 %v1463, 7
  %v1465 = vsub.s32 %v1462, %v1464
  %v1466 = vrot.slane %v1459, %v1465
  %v1468 = vunpack.c.l.s4 1983009808
  %v1469 = vunpack.c.0.s8 %v1468
  %v1470 = vlaneseq
  %v1471 = vshrl.u32 %v1470, 7
  %v1472 = vsub.s32 %v1469, %v1471
  %v1473 = vrot.slane %v1243, %v1472
  %v1474 = vcombine.low %v1466, %v1473
  %v1475 = vcombine.low %v1232, %v1244
  %v1477 = vunpack.c.l.s4 1983009808
  %v1478 = vunpack.c.0.s8 %v1477
  %v1479 = vlaneseq
  %v1480 = vshrl.u32 %v1479, 7
  %v1481 = vsub.s32 %v1478, %v1480
  %v1482 = vrot.slane %v1475, %v1481
  %v1484 = vunpack.c.l.s4 1983009808
  %v1485 = vunpack.c.0.s8 %v1484
  %v1486 = vlaneseq
  %v1487 = vshrl.u32 %v1486, 7
  %v1488 = vsub.s32 %v1485, %v1487
  %v1489 = vrot.slane %v1249, %v1488
  %v1490 = vcombine.low %v1482, %v1489
  %v1491 = vcombine.low %v1233, %v1245
  %v1493 = vunpack.c.l.s4 1983009808
  %v1494 = vunpack.c.0.s8 %v1493
  %v1495 = vlaneseq
  %v1496 = vshrl.u32 %v1495, 7
  %v1497 = vsub.s32 %v1494, %v1496
  %v1498 = vrot.slane %v1491, %v1497
  %v1500 = vunpack.c.l.s4 1983009808
  %v1501 = vunpack.c.0.s8 %v1500
  %v1502 = vlaneseq
  %v1503 = vshrl.u32 %v1502, 7
  %v1504 = vsub.s32 %v1501, %v1503
  %v1505 = vrot.slane %v1206, %v1504
  %v1506 = vcombine.low %v1498, %v1505
  %v1507 = vcombine.low %v1234, %v1246
  %v1509 = vunpack.c.l.s4 1983009808
  %v1510 = vunpack.c.0.s8 %v1509
  %v1511 = vlaneseq
  %v1512 = vshrl.u32 %v1511, 7
  %v1513 = vsub.s32 %v1510, %v1512
  %v1514 = vrot.slane %v1507, %v1513
  %v1515 = vcombine.low %v1514, %v1505
  %v1516 = vcombine.low %v1235, %v1247
  %v1518 = vunpack.c.l.s4 1983009808
  %v1519 = vunpack.c.0.s8 %v1518
  %v1520 = vlaneseq
  %v1521 = vshrl.u32 %v1520, 7
  %v1522 = vsub.s32 %v1519, %v1521
  %v1523 = vrot.slane %v1516, %v1522
  %v1524 = vcombine.low %v1523, %v1505
  %v1525 = vcombine.low %v1298, %v1314
  %v1526 = vcombine.high %v1298, %v1314
  %v1527 = vcombine.low %v1330, %v1346
  %v1528 = vcombine.high %v1330, %v1346
  %v1530 = vunpack.c.l.s4 1983009808
  %v1531 = vunpack.c.0.s8 %v1530
  %v1532 = vlaneseq
  %v1533 = vshrl.u32 %v1532, 7
  %v1534 = vsub.s32 %v1531, %v1533
  %v1535 = vrot.slane %v1525, %v1534
  %v1537 = vunpack.c.l.s4 1983009808
  %v1538 = vunpack.c.0.s8 %v1537
  %v1539 = vlaneseq
  %v1540 = vshrl.u32 %v1539, 7
  %v1541 = vsub.s32 %v1538, %v1540
  %v1542 = vrot.slane %v1526, %v1541
  %v1544 = vunpack.c.l.s4 1983009808
  %v1545 = vunpack.c.0.s8 %v1544
  %v1546 = vlaneseq
  %v1547 = vshrl.u32 %v1546, 7
  %v1548 = vsub.s32 %v1545, %v1547
  %v1549 = vrot.slane %v1527, %v1548
  %v1551 = vunpack.c.l.s4 1983009808
  %v1552 = vunpack.c.0.s8 %v1551
  %v1553 = vlaneseq
  %v1554 = vshrl.u32 %v1553, 7
  %v1555 = vsub.s32 %v1552, %v1554
  %v1556 = vrot.slane %v1528, %v1555
  %v1557 = vcombine.low %v1535, %v1549
  %v1558 = vcombine.high %v1535, %v1549
  %v1559 = vcombine.low %v1542, %v1556
  %v1560 = vcombine.low %v1362, %v1378
  %v1561 = vcombine.high %v1362, %v1378
  %v1562 = vcombine.low %v1394, %v1410
  %v1563 = vcombine.high %v1394, %v1410
  %v1565 = vunpack.c.l.s4 1983009808
  %v1566 = vunpack.c.0.s8 %v1565
  %v1567 = vlaneseq
  %v1568 = vshrl.u32 %v1567, 7
  %v1569 = vsub.s32 %v1566, %v1568
  %v1570 = vrot.slane %v1560, %v1569
  %v1572 = vunpack.c.l.s4 1983009808
  %v1573 = vunpack.c.0.s8 %v1572
  %v1574 = vlaneseq
  %v1575 = vshrl.u32 %v1574, 7
  %v1576 = vsub.s32 %v1573, %v1575
  %v1577 = vrot.slane %v1561, %v1576
  %v1579 = vunpack.c.l.s4 1983009808
  %v1580 = vunpack.c.0.s8 %v1579
  %v1581 = vlaneseq
  %v1582 = vshrl.u32 %v1581, 7
  %v1583 = vsub.s32 %v1580, %v1582
  %v1584 = vrot.slane %v1562, %v1583
  %v1586 = vunpack.c.l.s4 1983009808
  %v1587 = vunpack.c.0.s8 %v1586
  %v1588 = vlaneseq
  %v1589 = vshrl.u32 %v1588, 7
  %v1590 = vsub.s32 %v1587, %v1589
  %v1591 = vrot.slane %v1563, %v1590
  %v1592 = vcombine.low %v1570, %v1584
  %v1593 = vcombine.high %v1570, %v1584
  %v1594 = vcombine.low %v1577, %v1591
  %v1595 = vcombine.low %v1426, %v1442
  %v1596 = vcombine.high %v1426, %v1442
  %v1597 = vcombine.low %v1458, %v1474
  %v1598 = vcombine.high %v1458, %v1474
  %v1600 = vunpack.c.l.s4 1983009808
  %v1601 = vunpack.c.0.s8 %v1600
  %v1602 = vlaneseq
  %v1603 = vshrl.u32 %v1602, 7
  %v1604 = vsub.s32 %v1601, %v1603
  %v1605 = vrot.slane %v1595, %v1604
  %v1607 = vunpack.c.l.s4 1983009808
  %v1608 = vunpack.c.0.s8 %v1607
  %v1609 = vlaneseq
  %v1610 = vshrl.u32 %v1609, 7
  %v1611 = vsub.s32 %v1608, %v1610
  %v1612 = vrot.slane %v1596, %v1611
  %v1614 = vunpack.c.l.s4 1983009808
  %v1615 = vunpack.c.0.s8 %v1614
  %v1616 = vlaneseq
  %v1617 = vshrl.u32 %v1616, 7
  %v1618 = vsub.s32 %v1615, %v1617
  %v1619 = vrot.slane %v1597, %v1618
  %v1621 = vunpack.c.l.s4 1983009808
  %v1622 = vunpack.c.0.s8 %v1621
  %v1623 = vlaneseq
  %v1624 = vshrl.u32 %v1623, 7
  %v1625 = vsub.s32 %v1622, %v1624
  %v1626 = vrot.slane %v1598, %v1625
  %v1627 = vcombine.low %v1605, %v1619
  %v1628 = vcombine.high %v1605, %v1619
  %v1629 = vcombine.low %v1612, %v1626
  %v1630 = vcombine.low %v1490, %v1506
  %v1631 = vcombine.high %v1490, %v1506
  %v1632 = vcombine.low %v1515, %v1524
  %v1633 = vcombine.high %v1515, %v1524
  %v1635 = vunpack.c.l.s4 1983009808
  %v1636 = vunpack.c.0.s8 %v1635
  %v1637 = vlaneseq
  %v1638 = vshrl.u32 %v1637, 7
  %v1639 = vsub.s32 %v1636, %v1638
  %v1640 = vrot.slane %v1630, %v1639
  %v1642 = vunpack.c.l.s4 1983009808
  %v1643 = vunpack.c.0.s8 %v1642
  %v1644 = vlaneseq
  %v1645 = vshrl.u32 %v1644, 7
  %v1646 = vsub.s32 %v1643, %v1645
  %v1647 = vrot.slane %v1631, %v1646
  %v1649 = vunpack.c.l.s4 1983009808
  %v1650 = vunpack.c.0.s8 %v1649
  %v1651 = vlaneseq
  %v1652 = vshrl.u32 %v1651, 7
  %v1653 = vsub.s32 %v1650, %v1652
  %v1654 = vrot.slane %v1632, %v1653
  %v1656 = vunpack.c.l.s4 1983009808
  %v1657 = vunpack.c.0.s8 %v1656
  %v1658 = vlaneseq
  %v1659 = vshrl.u32 %v1658, 7
  %v1660 = vsub.s32 %v1657, %v1659
  %v1661 = vrot.slane %v1633, %v1660
  %v1662 = vcombine.low %v1640, %v1654
  %v1663 = vcombine.high %v1640, %v1654
  %v1664 = vcombine.low %v1647, %v1661
  %v1677 = vpack.c.bf16 %v1592, %v1557
  %v1678 = vpack.c.bf16 %v1593, %v1558
  %v1679 = vpack.c.bf16 %v1594, %v1559
  %v1680 = vpack.c.bf16 %v1662, %v1627
  %v1681 = vpack.c.bf16 %v1663, %v1628
  %v1682 = vpack.c.bf16 %v1664, %v1629
  %v1683 = vld [vmem:[%s3] sm:$0xf]
  %v1684 = vld [vmem:[%s3 + $0x4] sm:$0xf]
  %v1685 = vld [vmem:[%s3 + $0x8] sm:$0xf]
  %v1686 = vld [vmem:[%s3 + $0xc] sm:$0xf]
  %v1687 = vld [vmem:[%s3 + $0x10] sm:$0xf]
  %v1688 = vld [vmem:[%s3 + $0x14] sm:$0xf]
  %v1689 = vld [vmem:[%s3 + $0x18] sm:$0xf]
  %v1690 = vld [vmem:[%s3 + $0x1c] sm:$0xf]
  %v1691 = vld [vmem:[%s3 + $0x20] sm:$0xf]
  %v1692 = vld [vmem:[%s3 + $0x24] sm:$0xf]
  %v1693 = vld [vmem:[%s3 + $0x28] sm:$0xf]
  %v1694 = vld [vmem:[%s3 + $0x2c] sm:$0xf]
  %v1695 = vld [vmem:[%s3 + $0x30] sm:$0xf]
  %v1696 = vld [vmem:[%s3 + $0x34] sm:$0xf]
  %v1697 = vld [vmem:[%s3 + $0x38] sm:$0xf]
  %v1698 = vld [vmem:[%s3 + $0x3c] sm:$0xf]
  %v1699 = vld [vmem:[%s3 + $0x40] sm:$0xf]
  %v1700 = vld [vmem:[%s3 + $0x44] sm:$0xf]
  %v1701 = vld [vmem:[%s3 + $0x48] sm:$0xf]
  %v1702 = vld [vmem:[%s3 + $0x4c] sm:$0xf]
  %v1703 = vld [vmem:[%s3 + $0x50] sm:$0xf]
  %v1704 = vld [vmem:[%s3 + $0x54] sm:$0xf]
  %v1705 = vld [vmem:[%s3 + $0x58] sm:$0xf]
  %v1706 = vld [vmem:[%s3 + $0x5c] sm:$0xf]
  %v1707 = vld [vmem:[%s3 + $0x60] sm:$0xf]
  %v1708 = vld [vmem:[%s3 + $0x64] sm:$0xf]
  %v1709 = vld [vmem:[%s3 + $0x68] sm:$0xf]
  %v1710 = vld [vmem:[%s3 + $0x6c] sm:$0xf]
  %v1711 = vld [vmem:[%s3 + $0x70] sm:$0xf]
  %v1712 = vld [vmem:[%s3 + $0x74] sm:$0xf]
  %v1713 = vld [vmem:[%s3 + $0x78] sm:$0xf]
  %v1714 = vld [vmem:[%s3 + $0x7c] sm:$0xf]
  %v1715 = vld [vmem:[%s3 + $0x80] sm:$0xf]
  %v1716 = vld [vmem:[%s3 + $0x84] sm:$0xf]
  %v1717 = vld [vmem:[%s3 + $0x88] sm:$0xf]
  %v1718 = vld [vmem:[%s3 + $0x8c] sm:$0xf]
  %v1719 = vld [vmem:[%s3 + $0x90] sm:$0xf]
  %v1720 = vld [vmem:[%s3 + $0x94] sm:$0xf]
  %v1721 = vld [vmem:[%s3 + $0x98] sm:$0xf]
  %v1722 = vld [vmem:[%s3 + $0x9c] sm:$0xf]
  %v1723 = vld [vmem:[%s3 + $0xa0] sm:$0xf]
  %v1724 = vld [vmem:[%s3 + $0xa4] sm:$0xf]
  %v1725 = vld [vmem:[%s3 + $0xa8] sm:$0xf]
  %v1726 = vld [vmem:[%s3 + $0xac] sm:$0xf]
  %v1727 = vld [vmem:[%s4] sm:$0x1]
  %v1729 = vlaneseq
  %v1730 = vshrl.u32 %v1729, 7
  %v1731 = vsub.s32 0, %v1730
  %v1732 = vrot.slane %v1727, %v1731
  %v1778 = vunpack.c.l.b16 %v1683
  %v1779 = vunpack.c.l.b16 %v1684
  %v1780 = vunpack.c.l.b16 %v1685
  %v1781 = vunpack.c.l.b16 %v1686
  %v1782 = vunpack.c.l.b16 %v1687
  %v1783 = vunpack.c.l.b16 %v1688
  %v1784 = vunpack.c.l.b16 %v1689
  %v1785 = vunpack.c.l.b16 %v1690
  %v1786 = vunpack.c.l.b16 %v1691
  %v1787 = vunpack.c.l.b16 %v1692
  %v1788 = vunpack.c.l.b16 %v1693
  %v1789 = vunpack.c.l.b16 %v1694
  %v1790 = vunpack.c.l.b16 %v1695
  %v1791 = vunpack.c.l.b16 %v1696
  %v1792 = vunpack.c.l.b16 %v1697
  %v1793 = vunpack.c.l.b16 %v1698
  %v1794 = vunpack.c.l.b16 %v1699
  %v1795 = vunpack.c.l.b16 %v1700
  %v1796 = vunpack.c.l.b16 %v1701
  %v1797 = vunpack.c.l.b16 %v1702
  %v1798 = vunpack.c.l.b16 %v1703
  %v1799 = vunpack.c.l.b16 %v1704
  %v1800 = vunpack.c.l.b16 %v1705
  %v1801 = vunpack.c.l.b16 %v1706
  %v1802 = vunpack.c.l.b16 %v1707
  %v1803 = vunpack.c.l.b16 %v1708
  %v1804 = vunpack.c.l.b16 %v1709
  %v1805 = vunpack.c.l.b16 %v1710
  %v1806 = vunpack.c.l.b16 %v1711
  %v1807 = vunpack.c.l.b16 %v1712
  %v1808 = vunpack.c.l.b16 %v1713
  %v1809 = vunpack.c.l.b16 %v1714
  %v1810 = vunpack.c.l.b16 %v1715
  %v1811 = vunpack.c.l.b16 %v1716
  %v1812 = vunpack.c.l.b16 %v1717
  %v1813 = vunpack.c.l.b16 %v1718
  %v1814 = vunpack.c.l.b16 %v1719
  %v1815 = vunpack.c.l.b16 %v1720
  %v1816 = vunpack.c.l.b16 %v1721
  %v1817 = vunpack.c.l.b16 %v1722
  %v1818 = vunpack.c.l.b16 %v1723
  %v1819 = vunpack.c.l.b16 %v1724
  %v1820 = vunpack.c.l.b16 %v1725
  %v1821 = vunpack.c.l.b16 %v1726
  %v1822 = vpack.c.b16 %v1779, %v1778
  %v1823 = vpack.c.b16 %v1781, %v1780
  %v1824 = vpack.c.b16 %v1783, %v1782
  %v1825 = vpack.c.b16 %v1785, %v1784
  %v1826 = vpack.c.b16 %v1787, %v1786
  %v1827 = vpack.c.b16 %v1789, %v1788
  %v1828 = vpack.c.b16 %v1791, %v1790
  %v1829 = vpack.c.b16 %v1793, %v1792
  %v1830 = vpack.c.b16 %v1795, %v1794
  %v1831 = vpack.c.b16 %v1797, %v1796
  %v1832 = vpack.c.b16 %v1799, %v1798
  %v1833 = vpack.c.b16 %v1801, %v1800
  %v1834 = vpack.c.b16 %v1803, %v1802
  %v1835 = vpack.c.b16 %v1805, %v1804
  %v1836 = vpack.c.b16 %v1807, %v1806
  %v1837 = vpack.c.b16 %v1809, %v1808
  %v1838 = vpack.c.b16 %v1811, %v1810
  %v1839 = vpack.c.b16 %v1813, %v1812
  %v1840 = vpack.c.b16 %v1815, %v1814
  %v1841 = vpack.c.b16 %v1817, %v1816
  %v1842 = vpack.c.b16 %v1819, %v1818
  %v1843 = vpack.c.b16 %v1821, %v1820
  %v1867 = vsel %vm1220, %v1679, 0
  %v1870 = vsel %vm1220, %v1682, 0
  %1872 = vmatprep.subr.bf16.mxu0 0
  %1873 = vmatpush1.bf16.msra.mxu0 %v1822
  %1874 = vmatprep.subr.bf16.mxu0 0
  %1875 = vmatpush1.bf16.msra.mxu0 %v1823
  %1876 = vmatprep.subr.bf16.mxu0 0
  %1877 = vmatpush1.bf16.msra.mxu0 %v1824
  %1878 = vmatprep.subr.bf16.mxu0 0
  %1879 = vmatpush1.bf16.msra.mxu0 %v1825
  %1880 = vmatprep.subr.bf16.mxu0 0
  %1881 = vmatpush1.bf16.msra.mxu0 %v1826
  %1882 = vmatprep.subr.bf16.mxu0 0
  %1883 = vmatpush1.bf16.msra.mxu0 %v1827
  %1884 = vmatprep.subr.bf16.mxu0 0
  %1885 = vmatpush1.bf16.msra.mxu0 %v1828
  %1886 = vmatprep.subr.bf16.mxu0 0
  %1887 = vmatpush1.bf16.msra.mxu0 %v1829
  %1888 = vmatprep.subr.bf16.mxu0 0
  %1889 = vmatpush1.bf16.msra.mxu0 %v1830
  %1890 = vmatprep.subr.bf16.mxu0 0
  %1891 = vmatpush1.bf16.msra.mxu0 %v1831
  %1892 = vmatprep.subr.bf16.mxu0 0
  %1893 = vmatpush1.bf16.msra.mxu0 %v1832
  %1894 = vmatprep.subr.bf16.mxu0 0
  %1895 = vmatpush1.bf16.msra.mxu0 %v1833
  %1896 = vmatprep.subr.bf16.mxu0 0
  %1897 = vmatpush1.bf16.msra.mxu0 %v1834
  %1898 = vmatprep.subr.bf16.mxu0 0
  %1899 = vmatpush1.bf16.msra.mxu0 %v1835
  %1900 = vmatprep.subr.bf16.mxu0 0
  %1901 = vmatpush1.bf16.msra.mxu0 %v1836
  %1902 = vmatprep.subr.bf16.mxu0 0
  %1903 = vmatpush1.bf16.msra.mxu0 %v1837
  %1904 = vmatprep.mubr.bf16.mxu0 %v1678
  %1905 = vmatmul.mubr.bf16.gmra.mrb[0].mxu0 %v1677
  %v1906 = vpop.f32.mrb[0].mxu0
  %v1907 = vadd.f32 %v1732, %v1906
  %v1908 = vpop.f32.mrb[0].mxu0
  %v1909 = vpop.f32.mrb[0].mxu0
  %v1910 = vadd.f32 %v1732, %v1909
  %v1911 = vpop.f32.mrb[0].mxu0
  %1912 = vmatprep.mubr.bf16.mxu0 %v1681
  %1913 = vmatmul.mubr.bf16.gmra.mrb[0].mxu0 %v1680
  %v1914 = vpop.f32.mrb[0].mxu0
  %v1915 = vadd.f32 %v1732, %v1914
  %v1916 = vpop.f32.mrb[0].mxu0
  %v1917 = vpop.f32.mrb[0].mxu0
  %v1918 = vadd.f32 %v1732, %v1917
  %v1919 = vpop.f32.mrb[0].mxu0
  %1920 = vdwg.mxu0
  %1921 = vmatprep.subr.bf16.mxu0 0
  %1922 = vmatpush1.bf16.msra.mxu0 %v1838
  %1923 = vmatprep.subr.bf16.mxu0 0
  %1924 = vmatpush1.bf16.msra.mxu0 %v1839
  %1925 = vmatprep.subr.bf16.mxu0 0
  %1926 = vmatpush1.bf16.msra.mxu0 %v1840
  %1927 = vmatprep.subr.bf16.mxu0 0
  %1928 = vmatpush1.bf16.msra.mxu0 %v1841
  %1929 = vmatprep.subr.bf16.mxu0 0
  %1930 = vmatpush1.bf16.msra.mxu0 %v1842
  %1931 = vmatprep.subr.bf16.mxu0 0
  %1932 = vmatpush1.bf16.msra.mxu0 %v1843
  %1933 = vmatprep.subr.bf16.mxu0 0
  %1934 = vmatpush1.bf16.msra.mxu0 0
  %1935 = vmatprep.subr.bf16.mxu0 0
  %1936 = vmatpush1.bf16.msra.mxu0 0
  %1937 = vmatprep.subr.bf16.mxu0 0
  %1938 = vmatpush1.bf16.msra.mxu0 0
  %1939 = vmatprep.subr.bf16.mxu0 0
  %1940 = vmatpush1.bf16.msra.mxu0 0
  %1941 = vmatprep.subr.bf16.mxu0 0
  %1942 = vmatpush1.bf16.msra.mxu0 0
  %1943 = vmatprep.subr.bf16.mxu0 0
  %1944 = vmatpush1.bf16.msra.mxu0 0
  %1945 = vmatprep.subr.bf16.mxu0 0
  %1946 = vmatpush1.bf16.msra.mxu0 0
  %1947 = vmatprep.subr.bf16.mxu0 0
  %1948 = vmatpush1.bf16.msra.mxu0 0
  %1949 = vmatprep.subr.bf16.mxu0 0
  %1950 = vmatpush1.bf16.msra.mxu0 0
  %1951 = vmatprep.subr.bf16.mxu0 0
  %1952 = vmatpush1.bf16.msra.mxu0 0
  %1953 = vmatprep.mubr.bf16.mxu0 0
  %1954 = vmatmul.mubr.bf16.gmra.mrb[0].mxu0 %v1867
  %v1955 = vpop.f32.mrb[0].mxu0
  %v1956 = vadd.f32 %v1907, %v1955
  %v1957 = vpop.f32.mrb[0].mxu0
  %v1958 = vpop.f32.mrb[0].mxu0
  %v1959 = vadd.f32 %v1910, %v1958
  %v1960 = vpop.f32.mrb[0].mxu0
  %1961 = vmatprep.mubr.bf16.mxu0 0
  %1962 = vmatmul.mubr.bf16.gmra.mrb[0].mxu0 %v1870
  %v1963 = vpop.f32.mrb[0].mxu0
  %v1964 = vadd.f32 %v1915, %v1963
  %v1965 = vpop.f32.mrb[0].mxu0
  %v1966 = vpop.f32.mrb[0].mxu0
  %v1967 = vadd.f32 %v1918, %v1966
  %v1968 = vpop.f32.mrb[0].mxu0
  %1969 = vdwg.mxu0
  %vm1970 = vcmp.ge.f32.partialorder %v1956, 0.0
  %vm1971 = vcmp.ge.f32.partialorder %v1959, 0.0
  %vm1972 = vcmp.ge.f32.partialorder %v1964, 0.0
  %vm1973 = vcmp.ge.f32.partialorder %v1967, 0.0
  %v1974 = vmul.f32 %v1956, 0.1
  %v1975 = vmul.f32 %v1959, 0.1
  %v1976 = vmul.f32 %v1964, 0.1
  %v1977 = vmul.f32 %v1967, 0.1
  %v1978 = vsel %vm1970, %v1956, %v1974
  %v1979 = vsel %vm1971, %v1959, %v1975
  %v1980 = vsel %vm1972, %v1964, %v1976
  %v1981 = vsel %vm1973, %v1967, %v1977
  %v1986 = vcombine.high %v1978, %v1978
  %v1988 = vunpack.c.l.s4 1983009808
  %v1989 = vunpack.c.0.s8 %v1988
  %v1990 = vlaneseq
  %v1991 = vshrl.u32 %v1990, 7
  %v1992 = vsub.s32 %v1989, %v1991
  %v1993 = vrot.slane %v1978, %v1992
  %v1995 = vunpack.c.l.s4 1983009808
  %v1996 = vunpack.c.0.s8 %v1995
  %v1997 = vlaneseq
  %v1998 = vshrl.u32 %v1997, 7
  %v1999 = vsub.s32 %v1996, %v1998
  %v2000 = vrot.slane %v1986, %v1999
  %v2001 = vcombine.high %v1993, %v1993
  %v2002 = vcombine.high %v2000, %v2000
  %v2003 = vcombine.high %v1979, %v1979
  %v2005 = vunpack.c.l.s4 1983009808
  %v2006 = vunpack.c.0.s8 %v2005
  %v2007 = vlaneseq
  %v2008 = vshrl.u32 %v2007, 7
  %v2009 = vsub.s32 %v2006, %v2008
  %v2010 = vrot.slane %v1979, %v2009
  %v2012 = vunpack.c.l.s4 1983009808
  %v2013 = vunpack.c.0.s8 %v2012
  %v2014 = vlaneseq
  %v2015 = vshrl.u32 %v2014, 7
  %v2016 = vsub.s32 %v2013, %v2015
  %v2017 = vrot.slane %v2003, %v2016
  %v2018 = vcombine.high %v2010, %v2010
  %v2019 = vcombine.high %v2017, %v2017
  %v2020 = vcombine.high %v1980, %v1980
  %v2022 = vunpack.c.l.s4 1983009808
  %v2023 = vunpack.c.0.s8 %v2022
  %v2024 = vlaneseq
  %v2025 = vshrl.u32 %v2024, 7
  %v2026 = vsub.s32 %v2023, %v2025
  %v2027 = vrot.slane %v1980, %v2026
  %v2029 = vunpack.c.l.s4 1983009808
  %v2030 = vunpack.c.0.s8 %v2029
  %v2031 = vlaneseq
  %v2032 = vshrl.u32 %v2031, 7
  %v2033 = vsub.s32 %v2030, %v2032
  %v2034 = vrot.slane %v2020, %v2033
  %v2035 = vcombine.high %v2027, %v2027
  %v2036 = vcombine.high %v2034, %v2034
  %v2037 = vcombine.high %v1981, %v1981
  %v2039 = vunpack.c.l.s4 1983009808
  %v2040 = vunpack.c.0.s8 %v2039
  %v2041 = vlaneseq
  %v2042 = vshrl.u32 %v2041, 7
  %v2043 = vsub.s32 %v2040, %v2042
  %v2044 = vrot.slane %v1981, %v2043
  %v2046 = vunpack.c.l.s4 1983009808
  %v2047 = vunpack.c.0.s8 %v2046
  %v2048 = vlaneseq
  %v2049 = vshrl.u32 %v2048, 7
  %v2050 = vsub.s32 %v2047, %v2049
  %v2051 = vrot.slane %v2037, %v2050
  %v2052 = vcombine.high %v2044, %v2044
  %v2053 = vcombine.high %v2051, %v2051
  %2070 = vrot.lane.b32.xlu0 %v1993, 32
  %v2071 = vpop.permute.xlu0 %2070
  %2072 = vrot.lane.b32.xlu0 %v2001, 32
  %v2073 = vpop.permute.xlu0 %2072
  %2074 = vrot.lane.b32.xlu0 %v2000, 32
  %v2075 = vpop.permute.xlu0 %2074
  %2076 = vrot.lane.b32.xlu0 %v2002, 32
  %v2077 = vpop.permute.xlu0 %2076
  %2078 = vrot.lane.b32.xlu0 %v2010, 32
  %v2079 = vpop.permute.xlu0 %2078
  %2080 = vrot.lane.b32.xlu0 %v2018, 32
  %v2081 = vpop.permute.xlu0 %2080
  %2082 = vrot.lane.b32.xlu0 %v2017, 32
  %v2083 = vpop.permute.xlu0 %2082
  %2084 = vrot.lane.b32.xlu0 %v2019, 32
  %v2085 = vpop.permute.xlu0 %2084
  %2086 = vrot.lane.b32.xlu0 %v2027, 32
  %v2087 = vpop.permute.xlu0 %2086
  %2088 = vrot.lane.b32.xlu0 %v2035, 32
  %v2089 = vpop.permute.xlu0 %2088
  %2090 = vrot.lane.b32.xlu0 %v2034, 32
  %v2091 = vpop.permute.xlu0 %2090
  %2092 = vrot.lane.b32.xlu0 %v2036, 32
  %v2093 = vpop.permute.xlu0 %2092
  %2106 = vrot.lane.b32.xlu0 %v1993, 64
  %v2107 = vpop.permute.xlu0 %2106
  %2108 = vrot.lane.b32.xlu0 %v2001, 64
  %v2109 = vpop.permute.xlu0 %2108
  %2110 = vrot.lane.b32.xlu0 %v2000, 64
  %v2111 = vpop.permute.xlu0 %2110
  %2112 = vrot.lane.b32.xlu0 %v2002, 64
  %v2113 = vpop.permute.xlu0 %2112
  %2114 = vrot.lane.b32.xlu0 %v2010, 64
  %v2115 = vpop.permute.xlu0 %2114
  %2116 = vrot.lane.b32.xlu0 %v2018, 64
  %v2117 = vpop.permute.xlu0 %2116
  %2118 = vrot.lane.b32.xlu0 %v2017, 64
  %v2119 = vpop.permute.xlu0 %2118
  %2120 = vrot.lane.b32.xlu0 %v2019, 64
  %v2121 = vpop.permute.xlu0 %2120
  %2122 = vrot.lane.b32.xlu0 %v2027, 64
  %v2123 = vpop.permute.xlu0 %2122
  %2124 = vrot.lane.b32.xlu0 %v2035, 64
  %v2125 = vpop.permute.xlu0 %2124
  %2126 = vrot.lane.b32.xlu0 %v2034, 64
  %v2127 = vpop.permute.xlu0 %2126
  %2128 = vrot.lane.b32.xlu0 %v2036, 64
  %v2129 = vpop.permute.xlu0 %2128
  %2130 = vrot.lane.b32.xlu0 %v2044, 64
  %v2131 = vpop.permute.xlu0 %2130
  %2145 = vrot.lane.b32.xlu0 %v1993, 96
  %v2146 = vpop.permute.xlu0 %2145
  %2147 = vrot.lane.b32.xlu0 %v2001, 96
  %v2148 = vpop.permute.xlu0 %2147
  %2149 = vrot.lane.b32.xlu0 %v2000, 96
  %v2150 = vpop.permute.xlu0 %2149
  %2151 = vrot.lane.b32.xlu0 %v2002, 96
  %v2152 = vpop.permute.xlu0 %2151
  %2153 = vrot.lane.b32.xlu0 %v2010, 96
  %v2154 = vpop.permute.xlu0 %2153
  %2155 = vrot.lane.b32.xlu0 %v2018, 96
  %v2156 = vpop.permute.xlu0 %2155
  %2157 = vrot.lane.b32.xlu0 %v2017, 96
  %v2158 = vpop.permute.xlu0 %2157
  %2159 = vrot.lane.b32.xlu0 %v2019, 96
  %v2160 = vpop.permute.xlu0 %2159
  %2161 = vrot.lane.b32.xlu0 %v2027, 96
  %v2162 = vpop.permute.xlu0 %2161
  %2163 = vrot.lane.b32.xlu0 %v2035, 96
  %v2164 = vpop.permute.xlu0 %2163
  %2165 = vrot.lane.b32.xlu0 %v2034, 96
  %v2166 = vpop.permute.xlu0 %2165
  %2167 = vrot.lane.b32.xlu0 %v2036, 96
  %v2168 = vpop.permute.xlu0 %2167
  %2169 = vrot.lane.b32.xlu0 %v2044, 96
  %v2170 = vpop.permute.xlu0 %2169
  %2171 = vrot.lane.b32.xlu0 %v2052, 96
  %v2172 = vpop.permute.xlu0 %2171
  %2187 = vrot.lane.b32.xlu0 %v2044, 32
  %v2188 = vpop.permute.xlu0 %2187
  %2189 = vrot.lane.b32.xlu0 %v2052, 32
  %v2190 = vpop.permute.xlu0 %2189
  %2191 = vrot.lane.b32.xlu0 %v2051, 32
  %v2192 = vpop.permute.xlu0 %2191
  %2193 = vrot.lane.b32.xlu0 %v2053, 32
  %v2194 = vpop.permute.xlu0 %2193
  %2199 = vrot.lane.b32.xlu0 %v2052, 64
  %v2200 = vpop.permute.xlu0 %2199
  %2201 = vrot.lane.b32.xlu0 %v2051, 64
  %v2202 = vpop.permute.xlu0 %2201
  %2203 = vrot.lane.b32.xlu0 %v2053, 64
  %v2204 = vpop.permute.xlu0 %2203
  %2208 = vrot.lane.b32.xlu0 %v2051, 96
  %v2209 = vpop.permute.xlu0 %2208
  %2210 = vrot.lane.b32.xlu0 %v2053, 96
  %v2211 = vpop.permute.xlu0 %2210
  %v2214 = vsel %vm707, 0.0, %v2071
  %v2215 = vsel %vm707, %v1993, %v2073
  %v2216 = vsel %vm707, %v2001, %v2075
  %v2217 = vsel %vm707, %v2000, %v2077
  %v2218 = vsel %vm707, %v2002, %v2079
  %v2219 = vsel %vm707, %v2010, %v2081
  %v2220 = vsel %vm707, %v2018, %v2083
  %v2221 = vsel %vm707, %v2017, %v2085
  %v2222 = vsel %vm707, %v2019, %v2087
  %v2223 = vsel %vm707, %v2027, %v2089
  %v2224 = vsel %vm707, %v2035, %v2091
  %v2225 = vsel %vm707, %v2034, %v2093
  %v2226 = vsel %vm1205, %v1192, %v2107
  %v2227 = vsel %vm1205, %v2214, %v2109
  %v2228 = vsel %vm1205, %v2215, %v2111
  %v2229 = vsel %vm1205, %v2216, %v2113
  %v2230 = vsel %vm1205, %v2217, %v2115
  %v2231 = vsel %vm1205, %v2218, %v2117
  %v2232 = vsel %vm1205, %v2219, %v2119
  %v2233 = vsel %vm1205, %v2220, %v2121
  %v2234 = vsel %vm1205, %v2221, %v2123
  %v2235 = vsel %vm1205, %v2222, %v2125
  %v2236 = vsel %vm1205, %v2223, %v2127
  %v2237 = vsel %vm1205, %v2224, %v2129
  %v2238 = vsel %vm1205, %v2225, %v2131
  %v2239 = vsel %vm1220, %v1206, %v2146
  %v2240 = vsel %vm1220, %v2226, %v2148
  %v2241 = vsel %vm1220, %v2227, %v2150
  %v2242 = vsel %vm1220, %v2228, %v2152
  %v2243 = vsel %vm1220, %v2229, %v2154
  %v2244 = vsel %vm1220, %v2230, %v2156
  %v2245 = vsel %vm1220, %v2231, %v2158
  %v2246 = vsel %vm1220, %v2232, %v2160
  %v2247 = vsel %vm1220, %v2233, %v2162
  %v2248 = vsel %vm1220, %v2234, %v2164
  %v2249 = vsel %vm1220, %v2235, %v2166
  %v2250 = vsel %vm1220, %v2236, %v2168
  %v2251 = vsel %vm1220, %v2237, %v2170
  %v2252 = vsel %vm1220, %v2238, %v2172
  %v2253 = vsel %vm707, %v2036, %v2188
  %v2254 = vsel %vm707, %v2044, %v2190
  %v2255 = vsel %vm707, %v2052, %v2192
  %v2256 = vsel %vm707, %v2051, %v2194
  %v2257 = vsel %vm1205, %v2253, %v2200
  %v2258 = vsel %vm1205, %v2254, %v2202
  %v2259 = vsel %vm1205, %v2255, %v2204
  %v2260 = vsel %vm1205, %v2256, %v1079
  %v2261 = vsel %vm1220, %v2257, %v2209
  %v2262 = vsel %vm1220, %v2258, %v2211
  %v2263 = vsel %vm1220, %v2259, %v1121
  %v2264 = vsel %vm1220, %v2260, %v1121
  %v2265 = vsel %vm707, %v2053, %v1040
  %v2266 = vsel %vm1205, %v2265, %v1079
  %v2298 = vcombine.low %v1221, %v2241
  %v2300 = vunpack.c.l.s4 1983009808
  %v2301 = vunpack.c.0.s8 %v2300
  %v2302 = vlaneseq
  %v2303 = vshrl.u32 %v2302, 7
  %v2304 = vsub.s32 %v2301, %v2303
  %v2305 = vrot.slane %v2298, %v2304
  %v2307 = vunpack.c.l.s4 1983009808
  %v2308 = vunpack.c.0.s8 %v2307
  %v2309 = vlaneseq
  %v2310 = vshrl.u32 %v2309, 7
  %v2311 = vsub.s32 %v2308, %v2310
  %v2312 = vrot.slane %v2231, %v2311
  %v2313 = vcombine.low %v2305, %v2312
  %v2314 = vcombine.low %v1221, %v2242
  %v2316 = vunpack.c.l.s4 1983009808
  %v2317 = vunpack.c.0.s8 %v2316
  %v2318 = vlaneseq
  %v2319 = vshrl.u32 %v2318, 7
  %v2320 = vsub.s32 %v2317, %v2319
  %v2321 = vrot.slane %v2314, %v2320
  %v2323 = vunpack.c.l.s4 1983009808
  %v2324 = vunpack.c.0.s8 %v2323
  %v2325 = vlaneseq
  %v2326 = vshrl.u32 %v2325, 7
  %v2327 = vsub.s32 %v2324, %v2326
  %v2328 = vrot.slane %v2232, %v2327
  %v2329 = vcombine.low %v2321, %v2328
  %v2330 = vcombine.low %v2239, %v2243
  %v2332 = vunpack.c.l.s4 1983009808
  %v2333 = vunpack.c.0.s8 %v2332
  %v2334 = vlaneseq
  %v2335 = vshrl.u32 %v2334, 7
  %v2336 = vsub.s32 %v2333, %v2335
  %v2337 = vrot.slane %v2330, %v2336
  %v2339 = vunpack.c.l.s4 1983009808
  %v2340 = vunpack.c.0.s8 %v2339
  %v2341 = vlaneseq
  %v2342 = vshrl.u32 %v2341, 7
  %v2343 = vsub.s32 %v2340, %v2342
  %v2344 = vrot.slane %v2233, %v2343
  %v2345 = vcombine.low %v2337, %v2344
  %v2346 = vcombine.low %v2240, %v2244
  %v2348 = vunpack.c.l.s4 1983009808
  %v2349 = vunpack.c.0.s8 %v2348
  %v2350 = vlaneseq
  %v2351 = vshrl.u32 %v2350, 7
  %v2352 = vsub.s32 %v2349, %v2351
  %v2353 = vrot.slane %v2346, %v2352
  %v2355 = vunpack.c.l.s4 1983009808
  %v2356 = vunpack.c.0.s8 %v2355
  %v2357 = vlaneseq
  %v2358 = vshrl.u32 %v2357, 7
  %v2359 = vsub.s32 %v2356, %v2358
  %v2360 = vrot.slane %v2234, %v2359
  %v2361 = vcombine.low %v2353, %v2360
  %v2362 = vcombine.low %v2241, %v2245
  %v2364 = vunpack.c.l.s4 1983009808
  %v2365 = vunpack.c.0.s8 %v2364
  %v2366 = vlaneseq
  %v2367 = vshrl.u32 %v2366, 7
  %v2368 = vsub.s32 %v2365, %v2367
  %v2369 = vrot.slane %v2362, %v2368
  %v2371 = vunpack.c.l.s4 1983009808
  %v2372 = vunpack.c.0.s8 %v2371
  %v2373 = vlaneseq
  %v2374 = vshrl.u32 %v2373, 7
  %v2375 = vsub.s32 %v2372, %v2374
  %v2376 = vrot.slane %v2235, %v2375
  %v2377 = vcombine.low %v2369, %v2376
  %v2378 = vcombine.low %v2242, %v2246
  %v2380 = vunpack.c.l.s4 1983009808
  %v2381 = vunpack.c.0.s8 %v2380
  %v2382 = vlaneseq
  %v2383 = vshrl.u32 %v2382, 7
  %v2384 = vsub.s32 %v2381, %v2383
  %v2385 = vrot.slane %v2378, %v2384
  %v2387 = vunpack.c.l.s4 1983009808
  %v2388 = vunpack.c.0.s8 %v2387
  %v2389 = vlaneseq
  %v2390 = vshrl.u32 %v2389, 7
  %v2391 = vsub.s32 %v2388, %v2390
  %v2392 = vrot.slane %v2236, %v2391
  %v2393 = vcombine.low %v2385, %v2392
  %v2394 = vcombine.low %v2243, %v2247
  %v2396 = vunpack.c.l.s4 1983009808
  %v2397 = vunpack.c.0.s8 %v2396
  %v2398 = vlaneseq
  %v2399 = vshrl.u32 %v2398, 7
  %v2400 = vsub.s32 %v2397, %v2399
  %v2401 = vrot.slane %v2394, %v2400
  %v2403 = vunpack.c.l.s4 1983009808
  %v2404 = vunpack.c.0.s8 %v2403
  %v2405 = vlaneseq
  %v2406 = vshrl.u32 %v2405, 7
  %v2407 = vsub.s32 %v2404, %v2406
  %v2408 = vrot.slane %v2237, %v2407
  %v2409 = vcombine.low %v2401, %v2408
  %v2410 = vcombine.low %v2244, %v2248
  %v2412 = vunpack.c.l.s4 1983009808
  %v2413 = vunpack.c.0.s8 %v2412
  %v2414 = vlaneseq
  %v2415 = vshrl.u32 %v2414, 7
  %v2416 = vsub.s32 %v2413, %v2415
  %v2417 = vrot.slane %v2410, %v2416
  %v2419 = vunpack.c.l.s4 1983009808
  %v2420 = vunpack.c.0.s8 %v2419
  %v2421 = vlaneseq
  %v2422 = vshrl.u32 %v2421, 7
  %v2423 = vsub.s32 %v2420, %v2422
  %v2424 = vrot.slane %v2238, %v2423
  %v2425 = vcombine.low %v2417, %v2424
  %v2426 = vcombine.low %v2245, %v2249
  %v2428 = vunpack.c.l.s4 1983009808
  %v2429 = vunpack.c.0.s8 %v2428
  %v2430 = vlaneseq
  %v2431 = vshrl.u32 %v2430, 7
  %v2432 = vsub.s32 %v2429, %v2431
  %v2433 = vrot.slane %v2426, %v2432
  %v2435 = vunpack.c.l.s4 1983009808
  %v2436 = vunpack.c.0.s8 %v2435
  %v2437 = vlaneseq
  %v2438 = vshrl.u32 %v2437, 7
  %v2439 = vsub.s32 %v2436, %v2438
  %v2440 = vrot.slane %v2257, %v2439
  %v2441 = vcombine.low %v2433, %v2440
  %v2442 = vcombine.low %v2246, %v2250
  %v2444 = vunpack.c.l.s4 1983009808
  %v2445 = vunpack.c.0.s8 %v2444
  %v2446 = vlaneseq
  %v2447 = vshrl.u32 %v2446, 7
  %v2448 = vsub.s32 %v2445, %v2447
  %v2449 = vrot.slane %v2442, %v2448
  %v2451 = vunpack.c.l.s4 1983009808
  %v2452 = vunpack.c.0.s8 %v2451
  %v2453 = vlaneseq
  %v2454 = vshrl.u32 %v2453, 7
  %v2455 = vsub.s32 %v2452, %v2454
  %v2456 = vrot.slane %v2258, %v2455
  %v2457 = vcombine.low %v2449, %v2456
  %v2458 = vcombine.low %v2247, %v2251
  %v2460 = vunpack.c.l.s4 1983009808
  %v2461 = vunpack.c.0.s8 %v2460
  %v2462 = vlaneseq
  %v2463 = vshrl.u32 %v2462, 7
  %v2464 = vsub.s32 %v2461, %v2463
  %v2465 = vrot.slane %v2458, %v2464
  %v2467 = vunpack.c.l.s4 1983009808
  %v2468 = vunpack.c.0.s8 %v2467
  %v2469 = vlaneseq
  %v2470 = vshrl.u32 %v2469, 7
  %v2471 = vsub.s32 %v2468, %v2470
  %v2472 = vrot.slane %v2259, %v2471
  %v2473 = vcombine.low %v2465, %v2472
  %v2474 = vcombine.low %v2248, %v2252
  %v2476 = vunpack.c.l.s4 1983009808
  %v2477 = vunpack.c.0.s8 %v2476
  %v2478 = vlaneseq
  %v2479 = vshrl.u32 %v2478, 7
  %v2480 = vsub.s32 %v2477, %v2479
  %v2481 = vrot.slane %v2474, %v2480
  %v2483 = vunpack.c.l.s4 1983009808
  %v2484 = vunpack.c.0.s8 %v2483
  %v2485 = vlaneseq
  %v2486 = vshrl.u32 %v2485, 7
  %v2487 = vsub.s32 %v2484, %v2486
  %v2488 = vrot.slane %v2260, %v2487
  %v2489 = vcombine.low %v2481, %v2488
  %v2490 = vcombine.low %v2249, %v2261
  %v2492 = vunpack.c.l.s4 1983009808
  %v2493 = vunpack.c.0.s8 %v2492
  %v2494 = vlaneseq
  %v2495 = vshrl.u32 %v2494, 7
  %v2496 = vsub.s32 %v2493, %v2495
  %v2497 = vrot.slane %v2490, %v2496
  %v2499 = vunpack.c.l.s4 1983009808
  %v2500 = vunpack.c.0.s8 %v2499
  %v2501 = vlaneseq
  %v2502 = vshrl.u32 %v2501, 7
  %v2503 = vsub.s32 %v2500, %v2502
  %v2504 = vrot.slane %v2266, %v2503
  %v2505 = vcombine.low %v2497, %v2504
  %v2506 = vcombine.low %v2250, %v2262
  %v2508 = vunpack.c.l.s4 1983009808
  %v2509 = vunpack.c.0.s8 %v2508
  %v2510 = vlaneseq
  %v2511 = vshrl.u32 %v2510, 7
  %v2512 = vsub.s32 %v2509, %v2511
  %v2513 = vrot.slane %v2506, %v2512
  %v2514 = vcombine.low %v2513, %v1505
  %v2515 = vcombine.low %v2251, %v2263
  %v2517 = vunpack.c.l.s4 1983009808
  %v2518 = vunpack.c.0.s8 %v2517
  %v2519 = vlaneseq
  %v2520 = vshrl.u32 %v2519, 7
  %v2521 = vsub.s32 %v2518, %v2520
  %v2522 = vrot.slane %v2515, %v2521
  %v2523 = vcombine.low %v2522, %v1505
  %v2524 = vcombine.low %v2252, %v2264
  %v2526 = vunpack.c.l.s4 1983009808
  %v2527 = vunpack.c.0.s8 %v2526
  %v2528 = vlaneseq
  %v2529 = vshrl.u32 %v2528, 7
  %v2530 = vsub.s32 %v2527, %v2529
  %v2531 = vrot.slane %v2524, %v2530
  %v2532 = vcombine.low %v2531, %v1505
  %v2533 = vcombine.low %v2313, %v2329
  %v2534 = vcombine.high %v2313, %v2329
  %v2535 = vcombine.low %v2345, %v2361
  %v2536 = vcombine.high %v2345, %v2361
  %v2538 = vunpack.c.l.s4 1983009808
  %v2539 = vunpack.c.0.s8 %v2538
  %v2540 = vlaneseq
  %v2541 = vshrl.u32 %v2540, 7
  %v2542 = vsub.s32 %v2539, %v2541
  %v2543 = vrot.slane %v2533, %v2542
  %v2545 = vunpack.c.l.s4 1983009808
  %v2546 = vunpack.c.0.s8 %v2545
  %v2547 = vlaneseq
  %v2548 = vshrl.u32 %v2547, 7
  %v2549 = vsub.s32 %v2546, %v2548
  %v2550 = vrot.slane %v2534, %v2549
  %v2552 = vunpack.c.l.s4 1983009808
  %v2553 = vunpack.c.0.s8 %v2552
  %v2554 = vlaneseq
  %v2555 = vshrl.u32 %v2554, 7
  %v2556 = vsub.s32 %v2553, %v2555
  %v2557 = vrot.slane %v2535, %v2556
  %v2559 = vunpack.c.l.s4 1983009808
  %v2560 = vunpack.c.0.s8 %v2559
  %v2561 = vlaneseq
  %v2562 = vshrl.u32 %v2561, 7
  %v2563 = vsub.s32 %v2560, %v2562
  %v2564 = vrot.slane %v2536, %v2563
  %v2565 = vcombine.low %v2543, %v2557
  %v2566 = vcombine.high %v2543, %v2557
  %v2567 = vcombine.low %v2550, %v2564
  %v2568 = vcombine.low %v2377, %v2393
  %v2569 = vcombine.high %v2377, %v2393
  %v2570 = vcombine.low %v2409, %v2425
  %v2571 = vcombine.high %v2409, %v2425
  %v2573 = vunpack.c.l.s4 1983009808
  %v2574 = vunpack.c.0.s8 %v2573
  %v2575 = vlaneseq
  %v2576 = vshrl.u32 %v2575, 7
  %v2577 = vsub.s32 %v2574, %v2576
  %v2578 = vrot.slane %v2568, %v2577
  %v2580 = vunpack.c.l.s4 1983009808
  %v2581 = vunpack.c.0.s8 %v2580
  %v2582 = vlaneseq
  %v2583 = vshrl.u32 %v2582, 7
  %v2584 = vsub.s32 %v2581, %v2583
  %v2585 = vrot.slane %v2569, %v2584
  %v2587 = vunpack.c.l.s4 1983009808
  %v2588 = vunpack.c.0.s8 %v2587
  %v2589 = vlaneseq
  %v2590 = vshrl.u32 %v2589, 7
  %v2591 = vsub.s32 %v2588, %v2590
  %v2592 = vrot.slane %v2570, %v2591
  %v2594 = vunpack.c.l.s4 1983009808
  %v2595 = vunpack.c.0.s8 %v2594
  %v2596 = vlaneseq
  %v2597 = vshrl.u32 %v2596, 7
  %v2598 = vsub.s32 %v2595, %v2597
  %v2599 = vrot.slane %v2571, %v2598
  %v2600 = vcombine.low %v2578, %v2592
  %v2601 = vcombine.high %v2578, %v2592
  %v2602 = vcombine.low %v2585, %v2599
  %v2603 = vcombine.low %v2441, %v2457
  %v2604 = vcombine.high %v2441, %v2457
  %v2605 = vcombine.low %v2473, %v2489
  %v2606 = vcombine.high %v2473, %v2489
  %v2608 = vunpack.c.l.s4 1983009808
  %v2609 = vunpack.c.0.s8 %v2608
  %v2610 = vlaneseq
  %v2611 = vshrl.u32 %v2610, 7
  %v2612 = vsub.s32 %v2609, %v2611
  %v2613 = vrot.slane %v2603, %v2612
  %v2615 = vunpack.c.l.s4 1983009808
  %v2616 = vunpack.c.0.s8 %v2615
  %v2617 = vlaneseq
  %v2618 = vshrl.u32 %v2617, 7
  %v2619 = vsub.s32 %v2616, %v2618
  %v2620 = vrot.slane %v2604, %v2619
  %v2622 = vunpack.c.l.s4 1983009808
  %v2623 = vunpack.c.0.s8 %v2622
  %v2624 = vlaneseq
  %v2625 = vshrl.u32 %v2624, 7
  %v2626 = vsub.s32 %v2623, %v2625
  %v2627 = vrot.slane %v2605, %v2626
  %v2629 = vunpack.c.l.s4 1983009808
  %v2630 = vunpack.c.0.s8 %v2629
  %v2631 = vlaneseq
  %v2632 = vshrl.u32 %v2631, 7
  %v2633 = vsub.s32 %v2630, %v2632
  %v2634 = vrot.slane %v2606, %v2633
  %v2635 = vcombine.low %v2613, %v2627
  %v2636 = vcombine.high %v2613, %v2627
  %v2637 = vcombine.low %v2620, %v2634
  %v2638 = vcombine.low %v2505, %v2514
  %v2639 = vcombine.high %v2505, %v2514
  %v2640 = vcombine.low %v2523, %v2532
  %v2641 = vcombine.high %v2523, %v2532
  %v2643 = vunpack.c.l.s4 1983009808
  %v2644 = vunpack.c.0.s8 %v2643
  %v2645 = vlaneseq
  %v2646 = vshrl.u32 %v2645, 7
  %v2647 = vsub.s32 %v2644, %v2646
  %v2648 = vrot.slane %v2638, %v2647
  %v2650 = vunpack.c.l.s4 1983009808
  %v2651 = vunpack.c.0.s8 %v2650
  %v2652 = vlaneseq
  %v2653 = vshrl.u32 %v2652, 7
  %v2654 = vsub.s32 %v2651, %v2653
  %v2655 = vrot.slane %v2639, %v2654
  %v2657 = vunpack.c.l.s4 1983009808
  %v2658 = vunpack.c.0.s8 %v2657
  %v2659 = vlaneseq
  %v2660 = vshrl.u32 %v2659, 7
  %v2661 = vsub.s32 %v2658, %v2660
  %v2662 = vrot.slane %v2640, %v2661
  %v2664 = vunpack.c.l.s4 1983009808
  %v2665 = vunpack.c.0.s8 %v2664
  %v2666 = vlaneseq
  %v2667 = vshrl.u32 %v2666, 7
  %v2668 = vsub.s32 %v2665, %v2667
  %v2669 = vrot.slane %v2641, %v2668
  %v2670 = vcombine.low %v2648, %v2662
  %v2671 = vcombine.high %v2648, %v2662
  %v2672 = vcombine.low %v2655, %v2669
  %v2685 = vpack.c.bf16 %v2600, %v2565
  %v2686 = vpack.c.bf16 %v2601, %v2566
  %v2687 = vpack.c.bf16 %v2602, %v2567
  %v2688 = vpack.c.bf16 %v2670, %v2635
  %v2689 = vpack.c.bf16 %v2671, %v2636
  %v2690 = vpack.c.bf16 %v2672, %v2637
  %v2691 = vld [vmem:[%s5] sm:$0xf]
  %v2692 = vld [vmem:[%s5 + $0x4] sm:$0xf]
  %v2693 = vld [vmem:[%s5 + $0x8] sm:$0xf]
  %v2694 = vld [vmem:[%s5 + $0xc] sm:$0xf]
  %v2695 = vld [vmem:[%s5 + $0x10] sm:$0xf]
  %v2696 = vld [vmem:[%s5 + $0x14] sm:$0xf]
  %v2697 = vld [vmem:[%s5 + $0x18] sm:$0xf]
  %v2698 = vld [vmem:[%s5 + $0x1c] sm:$0xf]
  %v2699 = vld [vmem:[%s5 + $0x20] sm:$0xf]
  %v2700 = vld [vmem:[%s5 + $0x24] sm:$0xf]
  %v2701 = vld [vmem:[%s5 + $0x28] sm:$0xf]
  %v2702 = vld [vmem:[%s5 + $0x2c] sm:$0xf]
  %v2703 = vld [vmem:[%s5 + $0x30] sm:$0xf]
  %v2704 = vld [vmem:[%s5 + $0x34] sm:$0xf]
  %v2705 = vld [vmem:[%s5 + $0x38] sm:$0xf]
  %v2706 = vld [vmem:[%s5 + $0x3c] sm:$0xf]
  %v2707 = vld [vmem:[%s5 + $0x40] sm:$0xf]
  %v2708 = vld [vmem:[%s5 + $0x44] sm:$0xf]
  %v2709 = vld [vmem:[%s5 + $0x48] sm:$0xf]
  %v2710 = vld [vmem:[%s5 + $0x4c] sm:$0xf]
  %v2711 = vld [vmem:[%s5 + $0x50] sm:$0xf]
  %v2712 = vld [vmem:[%s5 + $0x54] sm:$0xf]
  %v2713 = vld [vmem:[%s5 + $0x58] sm:$0xf]
  %v2714 = vld [vmem:[%s5 + $0x5c] sm:$0xf]
  %v2715 = vld [vmem:[%s5 + $0x60] sm:$0xf]
  %v2716 = vld [vmem:[%s5 + $0x64] sm:$0xf]
  %v2717 = vld [vmem:[%s5 + $0x68] sm:$0xf]
  %v2718 = vld [vmem:[%s5 + $0x6c] sm:$0xf]
  %v2719 = vld [vmem:[%s5 + $0x70] sm:$0xf]
  %v2720 = vld [vmem:[%s5 + $0x74] sm:$0xf]
  %v2721 = vld [vmem:[%s5 + $0x78] sm:$0xf]
  %v2722 = vld [vmem:[%s5 + $0x7c] sm:$0xf]
  %v2723 = vld [vmem:[%s5 + $0x80] sm:$0xf]
  %v2724 = vld [vmem:[%s5 + $0x84] sm:$0xf]
  %v2725 = vld [vmem:[%s5 + $0x88] sm:$0xf]
  %v2726 = vld [vmem:[%s5 + $0x8c] sm:$0xf]
  %v2727 = vld [vmem:[%s5 + $0x90] sm:$0xf]
  %v2728 = vld [vmem:[%s5 + $0x94] sm:$0xf]
  %v2729 = vld [vmem:[%s5 + $0x98] sm:$0xf]
  %v2730 = vld [vmem:[%s5 + $0x9c] sm:$0xf]
  %v2731 = vld [vmem:[%s5 + $0xa0] sm:$0xf]
  %v2732 = vld [vmem:[%s5 + $0xa4] sm:$0xf]
  %v2733 = vld [vmem:[%s5 + $0xa8] sm:$0xf]
  %v2734 = vld [vmem:[%s5 + $0xac] sm:$0xf]
  %v2735 = vld [vmem:[%s6] sm:$0x1]
  %v2737 = vlaneseq
  %v2738 = vshrl.u32 %v2737, 7
  %v2739 = vsub.s32 0, %v2738
  %v2740 = vrot.slane %v2735, %v2739
  %v2786 = vunpack.c.l.b16 %v2691
  %v2787 = vunpack.c.l.b16 %v2692
  %v2788 = vunpack.c.l.b16 %v2693
  %v2789 = vunpack.c.l.b16 %v2694
  %v2790 = vunpack.c.l.b16 %v2695
  %v2791 = vunpack.c.l.b16 %v2696
  %v2792 = vunpack.c.l.b16 %v2697
  %v2793 = vunpack.c.l.b16 %v2698
  %v2794 = vunpack.c.l.b16 %v2699
  %v2795 = vunpack.c.l.b16 %v2700
  %v2796 = vunpack.c.l.b16 %v2701
  %v2797 = vunpack.c.l.b16 %v2702
  %v2798 = vunpack.c.l.b16 %v2703
  %v2799 = vunpack.c.l.b16 %v2704
  %v2800 = vunpack.c.l.b16 %v2705
  %v2801 = vunpack.c.l.b16 %v2706
  %v2802 = vunpack.c.l.b16 %v2707
  %v2803 = vunpack.c.l.b16 %v2708
  %v2804 = vunpack.c.l.b16 %v2709
  %v2805 = vunpack.c.l.b16 %v2710
  %v2806 = vunpack.c.l.b16 %v2711
  %v2807 = vunpack.c.l.b16 %v2712
  %v2808 = vunpack.c.l.b16 %v2713
  %v2809 = vunpack.c.l.b16 %v2714
  %v2810 = vunpack.c.l.b16 %v2715
  %v2811 = vunpack.c.l.b16 %v2716
  %v2812 = vunpack.c.l.b16 %v2717
  %v2813 = vunpack.c.l.b16 %v2718
  %v2814 = vunpack.c.l.b16 %v2719
  %v2815 = vunpack.c.l.b16 %v2720
  %v2816 = vunpack.c.l.b16 %v2721
  %v2817 = vunpack.c.l.b16 %v2722
  %v2818 = vunpack.c.l.b16 %v2723
  %v2819 = vunpack.c.l.b16 %v2724
  %v2820 = vunpack.c.l.b16 %v2725
  %v2821 = vunpack.c.l.b16 %v2726
  %v2822 = vunpack.c.l.b16 %v2727
  %v2823 = vunpack.c.l.b16 %v2728
  %v2824 = vunpack.c.l.b16 %v2729
  %v2825 = vunpack.c.l.b16 %v2730
  %v2826 = vunpack.c.l.b16 %v2731
  %v2827 = vunpack.c.l.b16 %v2732
  %v2828 = vunpack.c.l.b16 %v2733
  %v2829 = vunpack.c.l.b16 %v2734
  %v2830 = vpack.c.b16 %v2787, %v2786
  %v2831 = vpack.c.b16 %v2789, %v2788
  %v2832 = vpack.c.b16 %v2791, %v2790
  %v2833 = vpack.c.b16 %v2793, %v2792
  %v2834 = vpack.c.b16 %v2795, %v2794
  %v2835 = vpack.c.b16 %v2797, %v2796
  %v2836 = vpack.c.b16 %v2799, %v2798
  %v2837 = vpack.c.b16 %v2801, %v2800
  %v2838 = vpack.c.b16 %v2803, %v2802
  %v2839 = vpack.c.b16 %v2805, %v2804
  %v2840 = vpack.c.b16 %v2807, %v2806
  %v2841 = vpack.c.b16 %v2809, %v2808
  %v2842 = vpack.c.b16 %v2811, %v2810
  %v2843 = vpack.c.b16 %v2813, %v2812
  %v2844 = vpack.c.b16 %v2815, %v2814
  %v2845 = vpack.c.b16 %v2817, %v2816
  %v2846 = vpack.c.b16 %v2819, %v2818
  %v2847 = vpack.c.b16 %v2821, %v2820
  %v2848 = vpack.c.b16 %v2823, %v2822
  %v2849 = vpack.c.b16 %v2825, %v2824
  %v2850 = vpack.c.b16 %v2827, %v2826
  %v2851 = vpack.c.b16 %v2829, %v2828
  %v2875 = vsel %vm1220, %v2687, 0
  %v2878 = vsel %vm1220, %v2690, 0
  %2880 = vmatprep.subr.bf16.mxu0 0
  %2881 = vmatpush1.bf16.msra.mxu0 %v2830
  %2882 = vmatprep.subr.bf16.mxu0 0
  %2883 = vmatpush1.bf16.msra.mxu0 %v2831
  %2884 = vmatprep.subr.bf16.mxu0 0
  %2885 = vmatpush1.bf16.msra.mxu0 %v2832
  %2886 = vmatprep.subr.bf16.mxu0 0
  %2887 = vmatpush1.bf16.msra.mxu0 %v2833
  %2888 = vmatprep.subr.bf16.mxu0 0
  %2889 = vmatpush1.bf16.msra.mxu0 %v2834
  %2890 = vmatprep.subr.bf16.mxu0 0
  %2891 = vmatpush1.bf16.msra.mxu0 %v2835
  %2892 = vmatprep.subr.bf16.mxu0 0
  %2893 = vmatpush1.bf16.msra.mxu0 %v2836
  %2894 = vmatprep.subr.bf16.mxu0 0
  %2895 = vmatpush1.bf16.msra.mxu0 %v2837
  %2896 = vmatprep.subr.bf16.mxu0 0
  %2897 = vmatpush1.bf16.msra.mxu0 %v2838
  %2898 = vmatprep.subr.bf16.mxu0 0
  %2899 = vmatpush1.bf16.msra.mxu0 %v2839
  %2900 = vmatprep.subr.bf16.mxu0 0
  %2901 = vmatpush1.bf16.msra.mxu0 %v2840
  %2902 = vmatprep.subr.bf16.mxu0 0
  %2903 = vmatpush1.bf16.msra.mxu0 %v2841
  %2904 = vmatprep.subr.bf16.mxu0 0
  %2905 = vmatpush1.bf16.msra.mxu0 %v2842
  %2906 = vmatprep.subr.bf16.mxu0 0
  %2907 = vmatpush1.bf16.msra.mxu0 %v2843
  %2908 = vmatprep.subr.bf16.mxu0 0
  %2909 = vmatpush1.bf16.msra.mxu0 %v2844
  %2910 = vmatprep.subr.bf16.mxu0 0
  %2911 = vmatpush1.bf16.msra.mxu0 %v2845
  %2912 = vmatprep.mubr.bf16.mxu0 %v2686
  %2913 = vmatmul.mubr.bf16.gmra.mrb[0].mxu0 %v2685
  %v2914 = vpop.f32.mrb[0].mxu0
  %v2915 = vadd.f32 %v2740, %v2914
  %v2916 = vpop.f32.mrb[0].mxu0
  %v2917 = vpop.f32.mrb[0].mxu0
  %v2918 = vadd.f32 %v2740, %v2917
  %v2919 = vpop.f32.mrb[0].mxu0
  %2920 = vmatprep.mubr.bf16.mxu0 %v2689
  %2921 = vmatmul.mubr.bf16.gmra.mrb[0].mxu0 %v2688
  %v2922 = vpop.f32.mrb[0].mxu0
  %v2923 = vadd.f32 %v2740, %v2922
  %v2924 = vpop.f32.mrb[0].mxu0
  %v2925 = vpop.f32.mrb[0].mxu0
  %v2926 = vadd.f32 %v2740, %v2925
  %v2927 = vpop.f32.mrb[0].mxu0
  %2928 = vdwg.mxu0
  %2929 = vmatprep.subr.bf16.mxu0 0
  %2930 = vmatpush1.bf16.msra.mxu0 %v2846
  %2931 = vmatprep.subr.bf16.mxu0 0
  %2932 = vmatpush1.bf16.msra.mxu0 %v2847
  %2933 = vmatprep.subr.bf16.mxu0 0
  %2934 = vmatpush1.bf16.msra.mxu0 %v2848
  %2935 = vmatprep.subr.bf16.mxu0 0
  %2936 = vmatpush1.bf16.msra.mxu0 %v2849
  %2937 = vmatprep.subr.bf16.mxu0 0
  %2938 = vmatpush1.bf16.msra.mxu0 %v2850
  %2939 = vmatprep.subr.bf16.mxu0 0
  %2940 = vmatpush1.bf16.msra.mxu0 %v2851
  %2941 = vmatprep.subr.bf16.mxu0 0
  %2942 = vmatpush1.bf16.msra.mxu0 0
  %2943 = vmatprep.subr.bf16.mxu0 0
  %2944 = vmatpush1.bf16.msra.mxu0 0
  %2945 = vmatprep.subr.bf16.mxu0 0
  %2946 = vmatpush1.bf16.msra.mxu0 0
  %2947 = vmatprep.subr.bf16.mxu0 0
  %2948 = vmatpush1.bf16.msra.mxu0 0
  %2949 = vmatprep.subr.bf16.mxu0 0
  %2950 = vmatpush1.bf16.msra.mxu0 0
  %2951 = vmatprep.subr.bf16.mxu0 0
  %2952 = vmatpush1.bf16.msra.mxu0 0
  %2953 = vmatprep.subr.bf16.mxu0 0
  %2954 = vmatpush1.bf16.msra.mxu0 0
  %2955 = vmatprep.subr.bf16.mxu0 0
  %2956 = vmatpush1.bf16.msra.mxu0 0
  %2957 = vmatprep.subr.bf16.mxu0 0
  %2958 = vmatpush1.bf16.msra.mxu0 0
  %2959 = vmatprep.subr.bf16.mxu0 0
  %2960 = vmatpush1.bf16.msra.mxu0 0
  %2961 = vmatprep.mubr.bf16.mxu0 0
  %2962 = vmatmul.mubr.bf16.gmra.mrb[0].mxu0 %v2875
  %v2963 = vpop.f32.mrb[0].mxu0
  %v2964 = vadd.f32 %v2915, %v2963
  %v2965 = vpop.f32.mrb[0].mxu0
  %v2966 = vpop.f32.mrb[0].mxu0
  %v2967 = vadd.f32 %v2918, %v2966
  %v2968 = vpop.f32.mrb[0].mxu0
  %2969 = vmatprep.mubr.bf16.mxu0 0
  %2970 = vmatmul.mubr.bf16.gmra.mrb[0].mxu0 %v2878
  %v2971 = vpop.f32.mrb[0].mxu0
  %v2972 = vadd.f32 %v2923, %v2971
  %v2973 = vpop.f32.mrb[0].mxu0
  %v2974 = vpop.f32.mrb[0].mxu0
  %v2975 = vadd.f32 %v2926, %v2974
  %v2976 = vpop.f32.mrb[0].mxu0
  %2977 = vdwg.mxu0
  %vm2978 = vcmp.ge.f32.partialorder %v2964, 0.0
  %vm2979 = vcmp.ge.f32.partialorder %v2967, 0.0
  %vm2980 = vcmp.ge.f32.partialorder %v2972, 0.0
  %vm2981 = vcmp.ge.f32.partialorder %v2975, 0.0
  %v2982 = vmul.f32 %v2964, 0.1
  %v2983 = vmul.f32 %v2967, 0.1
  %v2984 = vmul.f32 %v2972, 0.1
  %v2985 = vmul.f32 %v2975, 0.1
  %v2986 = vsel %vm2978, %v2964, %v2982
  %v2987 = vsel %vm2979, %v2967, %v2983
  %v2988 = vsel %vm2980, %v2972, %v2984
  %v2989 = vsel %vm2981, %v2975, %v2985
  %v2994 = vcombine.high %v2986, %v2986
  %v2996 = vunpack.c.l.s4 1983009808
  %v2997 = vunpack.c.0.s8 %v2996
  %v2998 = vlaneseq
  %v2999 = vshrl.u32 %v2998, 7
  %v3000 = vsub.s32 %v2997, %v2999
  %v3001 = vrot.slane %v2986, %v3000
  %v3003 = vunpack.c.l.s4 1983009808
  %v3004 = vunpack.c.0.s8 %v3003
  %v3005 = vlaneseq
  %v3006 = vshrl.u32 %v3005, 7
  %v3007 = vsub.s32 %v3004, %v3006
  %v3008 = vrot.slane %v2994, %v3007
  %v3009 = vcombine.high %v3001, %v3001
  %v3010 = vcombine.high %v3008, %v3008
  %v3011 = vcombine.high %v2987, %v2987
  %v3013 = vunpack.c.l.s4 1983009808
  %v3014 = vunpack.c.0.s8 %v3013
  %v3015 = vlaneseq
  %v3016 = vshrl.u32 %v3015, 7
  %v3017 = vsub.s32 %v3014, %v3016
  %v3018 = vrot.slane %v2987, %v3017
  %v3020 = vunpack.c.l.s4 1983009808
  %v3021 = vunpack.c.0.s8 %v3020
  %v3022 = vlaneseq
  %v3023 = vshrl.u32 %v3022, 7
  %v3024 = vsub.s32 %v3021, %v3023
  %v3025 = vrot.slane %v3011, %v3024
  %v3026 = vcombine.high %v3018, %v3018
  %v3027 = vcombine.high %v3025, %v3025
  %v3028 = vcombine.high %v2988, %v2988
  %v3030 = vunpack.c.l.s4 1983009808
  %v3031 = vunpack.c.0.s8 %v3030
  %v3032 = vlaneseq
  %v3033 = vshrl.u32 %v3032, 7
  %v3034 = vsub.s32 %v3031, %v3033
  %v3035 = vrot.slane %v2988, %v3034
  %v3037 = vunpack.c.l.s4 1983009808
  %v3038 = vunpack.c.0.s8 %v3037
  %v3039 = vlaneseq
  %v3040 = vshrl.u32 %v3039, 7
  %v3041 = vsub.s32 %v3038, %v3040
  %v3042 = vrot.slane %v3028, %v3041
  %v3043 = vcombine.high %v3035, %v3035
  %v3044 = vcombine.high %v3042, %v3042
  %v3045 = vcombine.high %v2989, %v2989
  %v3047 = vunpack.c.l.s4 1983009808
  %v3048 = vunpack.c.0.s8 %v3047
  %v3049 = vlaneseq
  %v3050 = vshrl.u32 %v3049, 7
  %v3051 = vsub.s32 %v3048, %v3050
  %v3052 = vrot.slane %v2989, %v3051
  %v3054 = vunpack.c.l.s4 1983009808
  %v3055 = vunpack.c.0.s8 %v3054
  %v3056 = vlaneseq
  %v3057 = vshrl.u32 %v3056, 7
  %v3058 = vsub.s32 %v3055, %v3057
  %v3059 = vrot.slane %v3045, %v3058
  %v3060 = vcombine.high %v3052, %v3052
  %v3061 = vcombine.high %v3059, %v3059
  %vm3078 = vcmask 254976
  %3079 = vst.msk [vmem:[#allocation2] sm:$0x3] %vm3078, %v3001
  %3080 = vst.msk [vmem:[#allocation2 + $0x2] sm:$0x3] %vm3078, %v3009
  %3081 = vst.msk [vmem:[#allocation2 + $0x4] sm:$0x3] %vm3078, %v3008
  %3082 = vst.msk [vmem:[#allocation2 + $0x6] sm:$0x3] %vm3078, %v3010
  %3083 = vst.msk [vmem:[#allocation2 + $0x8] sm:$0x3] %vm3078, %v3018
  %3084 = vst.msk [vmem:[#allocation2 + $0xa] sm:$0x3] %vm3078, %v3026
  %3085 = vst.msk [vmem:[#allocation2 + $0xc] sm:$0x3] %vm3078, %v3025
  %3086 = vst.msk [vmem:[#allocation2 + $0xe] sm:$0x3] %vm3078, %v3027
  %3087 = vst.msk [vmem:[#allocation2 + $0x10] sm:$0x3] %vm3078, %v3035
  %3088 = vst.msk [vmem:[#allocation2 + $0x12] sm:$0x3] %vm3078, %v3043
  %3089 = vst.msk [vmem:[#allocation2 + $0x14] sm:$0x3] %vm3078, %v3042
  %3090 = vst.msk [vmem:[#allocation2 + $0x16] sm:$0x3] %vm3078, %v3044
  %3091 = vst.msk [vmem:[#allocation2 + $0x18] sm:$0x3] %vm3078, %v3052
  %3092 = vst.msk [vmem:[#allocation2 + $0x1a] sm:$0x3] %vm3078, %v3060
  %3093 = vst.msk [vmem:[#allocation2 + $0x1c] sm:$0x3] %vm3078, %v3059
  %3094 = vst.msk [vmem:[#allocation2 + $0x1e] sm:$0x3] %vm3078, %v3061
  %v3095 = vld [vmem:[#allocation2] sm:$0x3]
  %v3096 = vld [vmem:[#allocation2 + $0x2] sm:$0x3]
  %v3097 = vld [vmem:[#allocation2 + $0x4] sm:$0x3]
  %v3098 = vld [vmem:[#allocation2 + $0x6] sm:$0x3]
  %v3099 = vld [vmem:[#allocation2 + $0x8] sm:$0x3]
  %v3100 = vld [vmem:[#allocation2 + $0xa] sm:$0x3]
  %v3101 = vld [vmem:[#allocation2 + $0xc] sm:$0x3]
  %v3102 = vld [vmem:[#allocation2 + $0xe] sm:$0x3]
  %v3103 = vld [vmem:[#allocation2 + $0x10] sm:$0x3]
  %v3104 = vld [vmem:[#allocation2 + $0x12] sm:$0x3]
  %v3105 = vld [vmem:[#allocation2 + $0x14] sm:$0x3]
  %v3106 = vld [vmem:[#allocation2 + $0x16] sm:$0x3]
  %v3107 = vld [vmem:[#allocation2 + $0x18] sm:$0x3]
  %v3108 = vld [vmem:[#allocation2 + $0x1a] sm:$0x3]
  %v3109 = vld [vmem:[#allocation2 + $0x1c] sm:$0x3]
  %v3110 = vld [vmem:[#allocation2 + $0x1e] sm:$0x3]
  %v3127 = vcombine.low %v3095, %v3096
  %v3128 = vcombine.low %v3097, %v3098
  %v3130 = vunpack.c.l.s4 1983009808
  %v3131 = vunpack.c.0.s8 %v3130
  %v3132 = vlaneseq
  %v3133 = vshrl.u32 %v3132, 7
  %v3134 = vsub.s32 %v3131, %v3133
  %v3135 = vrot.slane %v3127, %v3134
  %v3137 = vunpack.c.l.s4 1983009808
  %v3138 = vunpack.c.0.s8 %v3137
  %v3139 = vlaneseq
  %v3140 = vshrl.u32 %v3139, 7
  %v3141 = vsub.s32 %v3138, %v3140
  %v3142 = vrot.slane %v3128, %v3141
  %v3143 = vcombine.low %v3135, %v3142
  %v3144 = vcombine.low %v3099, %v3100
  %v3145 = vcombine.low %v3101, %v3102
  %v3147 = vunpack.c.l.s4 1983009808
  %v3148 = vunpack.c.0.s8 %v3147
  %v3149 = vlaneseq
  %v3150 = vshrl.u32 %v3149, 7
  %v3151 = vsub.s32 %v3148, %v3150
  %v3152 = vrot.slane %v3144, %v3151
  %v3154 = vunpack.c.l.s4 1983009808
  %v3155 = vunpack.c.0.s8 %v3154
  %v3156 = vlaneseq
  %v3157 = vshrl.u32 %v3156, 7
  %v3158 = vsub.s32 %v3155, %v3157
  %v3159 = vrot.slane %v3145, %v3158
  %v3160 = vcombine.low %v3152, %v3159
  %v3161 = vcombine.low %v3103, %v3104
  %v3162 = vcombine.low %v3105, %v3106
  %v3164 = vunpack.c.l.s4 1983009808
  %v3165 = vunpack.c.0.s8 %v3164
  %v3166 = vlaneseq
  %v3167 = vshrl.u32 %v3166, 7
  %v3168 = vsub.s32 %v3165, %v3167
  %v3169 = vrot.slane %v3161, %v3168
  %v3171 = vunpack.c.l.s4 1983009808
  %v3172 = vunpack.c.0.s8 %v3171
  %v3173 = vlaneseq
  %v3174 = vshrl.u32 %v3173, 7
  %v3175 = vsub.s32 %v3172, %v3174
  %v3176 = vrot.slane %v3162, %v3175
  %v3177 = vcombine.low %v3169, %v3176
  %v3178 = vcombine.low %v3107, %v3108
  %v3179 = vcombine.low %v3109, %v3110
  %v3181 = vunpack.c.l.s4 1983009808
  %v3182 = vunpack.c.0.s8 %v3181
  %v3183 = vlaneseq
  %v3184 = vshrl.u32 %v3183, 7
  %v3185 = vsub.s32 %v3182, %v3184
  %v3186 = vrot.slane %v3178, %v3185
  %v3188 = vunpack.c.l.s4 1983009808
  %v3189 = vunpack.c.0.s8 %v3188
  %v3190 = vlaneseq
  %v3191 = vshrl.u32 %v3190, 7
  %v3192 = vsub.s32 %v3189, %v3191
  %v3193 = vrot.slane %v3179, %v3192
  %v3194 = vcombine.low %v3186, %v3193
  %v3199 = vpack.c.bf16 %v3160, %v3143
  %v3200 = vpack.c.bf16 %v3194, %v3177
  %v3201 = vld [vmem:[%s7] sm:$0xf]
  %v3202 = vld [vmem:[%s7 + $0x4] sm:$0xf]
  %v3203 = vld [vmem:[%s7 + $0x8] sm:$0xf]
  %v3204 = vld [vmem:[%s7 + $0xc] sm:$0xf]
  %v3205 = vld [vmem:[%s11] sm:$0x1]
  %v3207 = vlaneseq
  %v3208 = vshrl.u32 %v3207, 7
  %v3209 = vsub.s32 0, %v3208
  %v3210 = vrot.slane %v3205, %v3209
  %v3216 = vunpack.c.l.b16 %v3201
  %v3217 = vunpack.c.l.b16 %v3202
  %v3218 = vunpack.c.l.b16 %v3203
  %v3219 = vunpack.c.l.b16 %v3204
  %v3220 = vpack.c.b16 %v3217, %v3216
  %v3221 = vpack.c.b16 %v3219, %v3218
  %v3225 = vsel %vm707, %v3199, 0
  %v3228 = vsel %vm707, %v3200, 0
  %3230 = vmatprep.subr.bf16.mxu0 0
  %3231 = vmatpush1.bf16.msra.mxu0 %v3220
  %3232 = vmatprep.subr.bf16.mxu0 0
  %3233 = vmatpush1.bf16.msra.mxu0 %v3221
  %3234 = vmatprep.subr.bf16.mxu0 0
  %3235 = vmatpush1.bf16.msra.mxu0 0
  %3236 = vmatprep.subr.bf16.mxu0 0
  %3237 = vmatpush1.bf16.msra.mxu0 0
  %3238 = vmatprep.subr.bf16.mxu0 0
  %3239 = vmatpush1.bf16.msra.mxu0 0
  %3240 = vmatprep.subr.bf16.mxu0 0
  %3241 = vmatpush1.bf16.msra.mxu0 0
  %3242 = vmatprep.subr.bf16.mxu0 0
  %3243 = vmatpush1.bf16.msra.mxu0 0
  %3244 = vmatprep.subr.bf16.mxu0 0
  %3245 = vmatpush1.bf16.msra.mxu0 0
  %3246 = vmatprep.subr.bf16.mxu0 0
  %3247 = vmatpush1.bf16.msra.mxu0 0
  %3248 = vmatprep.subr.bf16.mxu0 0
  %3249 = vmatpush1.bf16.msra.mxu0 0
  %3250 = vmatprep.subr.bf16.mxu0 0
  %3251 = vmatpush1.bf16.msra.mxu0 0
  %3252 = vmatprep.subr.bf16.mxu0 0
  %3253 = vmatpush1.bf16.msra.mxu0 0
  %3254 = vmatprep.subr.bf16.mxu0 0
  %3255 = vmatpush1.bf16.msra.mxu0 0
  %3256 = vmatprep.subr.bf16.mxu0 0
  %3257 = vmatpush1.bf16.msra.mxu0 0
  %3258 = vmatprep.subr.bf16.mxu0 0
  %3259 = vmatpush1.bf16.msra.mxu0 0
  %3260 = vmatprep.subr.bf16.mxu0 0
  %3261 = vmatpush1.bf16.msra.mxu0 0
  %3262 = vmatprep.mubr.bf16.mxu0 0
  %3263 = vmatmul.mubr.bf16.gmra.mrb[0].mxu0 %v3225
  %v3264 = vpop.f32.mrb[0].mxu0
  %v3265 = vadd.f32 %v3210, %v3264
  %v3266 = vpop.f32.mrb[0].mxu0
  %v3267 = vpop.f32.mrb[0].mxu0
  %v3268 = vadd.f32 %v3210, %v3267
  %v3269 = vpop.f32.mrb[0].mxu0
  %3270 = vmatprep.mubr.bf16.mxu0 0
  %3271 = vmatmul.mubr.bf16.gmra.mrb[0].mxu0 %v3228
  %v3272 = vpop.f32.mrb[0].mxu0
  %v3273 = vadd.f32 %v3210, %v3272
  %v3274 = vpop.f32.mrb[0].mxu0
  %v3275 = vpop.f32.mrb[0].mxu0
  %v3276 = vadd.f32 %v3210, %v3275
  %v3277 = vpop.f32.mrb[0].mxu0
  %3278 = vdwg.mxu0
  %v3283 = vcombine.high %v3265, %v3265
  %v3285 = vunpack.c.l.s4 1983009808
  %v3286 = vunpack.c.0.s8 %v3285
  %v3287 = vlaneseq
  %v3288 = vshrl.u32 %v3287, 7
  %v3289 = vsub.s32 %v3286, %v3288
  %v3290 = vrot.slane %v3265, %v3289
  %v3292 = vunpack.c.l.s4 1983009808
  %v3293 = vunpack.c.0.s8 %v3292
  %v3294 = vlaneseq
  %v3295 = vshrl.u32 %v3294, 7
  %v3296 = vsub.s32 %v3293, %v3295
  %v3297 = vrot.slane %v3283, %v3296
  %v3298 = vcombine.high %v3290, %v3290
  %v3299 = vcombine.high %v3297, %v3297
  %v3300 = vcombine.high %v3268, %v3268
  %v3302 = vunpack.c.l.s4 1983009808
  %v3303 = vunpack.c.0.s8 %v3302
  %v3304 = vlaneseq
  %v3305 = vshrl.u32 %v3304, 7
  %v3306 = vsub.s32 %v3303, %v3305
  %v3307 = vrot.slane %v3268, %v3306
  %v3309 = vunpack.c.l.s4 1983009808
  %v3310 = vunpack.c.0.s8 %v3309
  %v3311 = vlaneseq
  %v3312 = vshrl.u32 %v3311, 7
  %v3313 = vsub.s32 %v3310, %v3312
  %v3314 = vrot.slane %v3300, %v3313
  %v3315 = vcombine.high %v3307, %v3307
  %v3316 = vcombine.high %v3314, %v3314
  %v3317 = vcombine.high %v3273, %v3273
  %v3319 = vunpack.c.l.s4 1983009808
  %v3320 = vunpack.c.0.s8 %v3319
  %v3321 = vlaneseq
  %v3322 = vshrl.u32 %v3321, 7
  %v3323 = vsub.s32 %v3320, %v3322
  %v3324 = vrot.slane %v3273, %v3323
  %v3326 = vunpack.c.l.s4 1983009808
  %v3327 = vunpack.c.0.s8 %v3326
  %v3328 = vlaneseq
  %v3329 = vshrl.u32 %v3328, 7
  %v3330 = vsub.s32 %v3327, %v3329
  %v3331 = vrot.slane %v3317, %v3330
  %v3332 = vcombine.high %v3324, %v3324
  %v3333 = vcombine.high %v3331, %v3331
  %v3334 = vcombine.high %v3276, %v3276
  %v3336 = vunpack.c.l.s4 1983009808
  %v3337 = vunpack.c.0.s8 %v3336
  %v3338 = vlaneseq
  %v3339 = vshrl.u32 %v3338, 7
  %v3340 = vsub.s32 %v3337, %v3339
  %v3341 = vrot.slane %v3276, %v3340
  %v3343 = vunpack.c.l.s4 1983009808
  %v3344 = vunpack.c.0.s8 %v3343
  %v3345 = vlaneseq
  %v3346 = vshrl.u32 %v3345, 7
  %v3347 = vsub.s32 %v3344, %v3346
  %v3348 = vrot.slane %v3334, %v3347
  %v3349 = vcombine.high %v3341, %v3341
  %v3350 = vcombine.high %v3348, %v3348
  %3367 = vst.msk [vmem:[#allocation3] sm:$0x3] %vm3078, %v3290
  %3368 = vst.msk [vmem:[#allocation3 + $0x2] sm:$0x3] %vm3078, %v3298
  %3369 = vst.msk [vmem:[#allocation3 + $0x4] sm:$0x3] %vm3078, %v3297
  %3370 = vst.msk [vmem:[#allocation3 + $0x6] sm:$0x3] %vm3078, %v3299
  %3371 = vst.msk [vmem:[#allocation3 + $0x8] sm:$0x3] %vm3078, %v3307
  %3372 = vst.msk [vmem:[#allocation3 + $0xa] sm:$0x3] %vm3078, %v3315
  %3373 = vst.msk [vmem:[#allocation3 + $0xc] sm:$0x3] %vm3078, %v3314
  %3374 = vst.msk [vmem:[#allocation3 + $0xe] sm:$0x3] %vm3078, %v3316
  %3375 = vst.msk [vmem:[#allocation3 + $0x10] sm:$0x3] %vm3078, %v3324
  %3376 = vst.msk [vmem:[#allocation3 + $0x12] sm:$0x3] %vm3078, %v3332
  %3377 = vst.msk [vmem:[#allocation3 + $0x14] sm:$0x3] %vm3078, %v3331
  %3378 = vst.msk [vmem:[#allocation3 + $0x16] sm:$0x3] %vm3078, %v3333
  %3379 = vst.msk [vmem:[#allocation3 + $0x18] sm:$0x3] %vm3078, %v3341
  %3380 = vst.msk [vmem:[#allocation3 + $0x1a] sm:$0x3] %vm3078, %v3349
  %3381 = vst.msk [vmem:[#allocation3 + $0x1c] sm:$0x3] %vm3078, %v3348
  %3382 = vst.msk [vmem:[#allocation3 + $0x1e] sm:$0x3] %vm3078, %v3350
  %v3384 = vunpack.c.l.s4 1983009808
  %v3385 = vunpack.c.0.s8 %v3384
  %v3386 = vlaneseq
  %v3387 = vshrl.u32 %v3386, 7
  %v3388 = vsub.s32 %v3385, %v3387
  %v3389 = vrot.slane %v3290, %v3388
  %v3391 = vunpack.c.l.s4 1983009808
  %v3392 = vunpack.c.0.s8 %v3391
  %v3393 = vlaneseq
  %v3394 = vshrl.u32 %v3393, 7
  %v3395 = vsub.s32 %v3392, %v3394
  %v3396 = vrot.slane %v3298, %v3395
  %v3398 = vunpack.c.l.s4 1983009808
  %v3399 = vunpack.c.0.s8 %v3398
  %v3400 = vlaneseq
  %v3401 = vshrl.u32 %v3400, 7
  %v3402 = vsub.s32 %v3399, %v3401
  %v3403 = vrot.slane %v3297, %v3402
  %v3405 = vunpack.c.l.s4 1983009808
  %v3406 = vunpack.c.0.s8 %v3405
  %v3407 = vlaneseq
  %v3408 = vshrl.u32 %v3407, 7
  %v3409 = vsub.s32 %v3406, %v3408
  %v3410 = vrot.slane %v3299, %v3409
  %v3412 = vunpack.c.l.s4 1983009808
  %v3413 = vunpack.c.0.s8 %v3412
  %v3414 = vlaneseq
  %v3415 = vshrl.u32 %v3414, 7
  %v3416 = vsub.s32 %v3413, %v3415
  %v3417 = vrot.slane %v3307, %v3416
  %v3419 = vunpack.c.l.s4 1983009808
  %v3420 = vunpack.c.0.s8 %v3419
  %v3421 = vlaneseq
  %v3422 = vshrl.u32 %v3421, 7
  %v3423 = vsub.s32 %v3420, %v3422
  %v3424 = vrot.slane %v3315, %v3423
  %v3426 = vunpack.c.l.s4 1983009808
  %v3427 = vunpack.c.0.s8 %v3426
  %v3428 = vlaneseq
  %v3429 = vshrl.u32 %v3428, 7
  %v3430 = vsub.s32 %v3427, %v3429
  %v3431 = vrot.slane %v3314, %v3430
  %v3433 = vunpack.c.l.s4 1983009808
  %v3434 = vunpack.c.0.s8 %v3433
  %v3435 = vlaneseq
  %v3436 = vshrl.u32 %v3435, 7
  %v3437 = vsub.s32 %v3434, %v3436
  %v3438 = vrot.slane %v3316, %v3437
  %v3440 = vunpack.c.l.s4 1983009808
  %v3441 = vunpack.c.0.s8 %v3440
  %v3442 = vlaneseq
  %v3443 = vshrl.u32 %v3442, 7
  %v3444 = vsub.s32 %v3441, %v3443
  %v3445 = vrot.slane %v3324, %v3444
  %v3447 = vunpack.c.l.s4 1983009808
  %v3448 = vunpack.c.0.s8 %v3447
  %v3449 = vlaneseq
  %v3450 = vshrl.u32 %v3449, 7
  %v3451 = vsub.s32 %v3448, %v3450
  %v3452 = vrot.slane %v3332, %v3451
  %v3454 = vunpack.c.l.s4 1983009808
  %v3455 = vunpack.c.0.s8 %v3454
  %v3456 = vlaneseq
  %v3457 = vshrl.u32 %v3456, 7
  %v3458 = vsub.s32 %v3455, %v3457
  %v3459 = vrot.slane %v3331, %v3458
  %v3461 = vunpack.c.l.s4 1983009808
  %v3462 = vunpack.c.0.s8 %v3461
  %v3463 = vlaneseq
  %v3464 = vshrl.u32 %v3463, 7
  %v3465 = vsub.s32 %v3462, %v3464
  %v3466 = vrot.slane %v3333, %v3465
  %v3468 = vunpack.c.l.s4 1983009808
  %v3469 = vunpack.c.0.s8 %v3468
  %v3470 = vlaneseq
  %v3471 = vshrl.u32 %v3470, 7
  %v3472 = vsub.s32 %v3469, %v3471
  %v3473 = vrot.slane %v3341, %v3472
  %v3475 = vunpack.c.l.s4 1983009808
  %v3476 = vunpack.c.0.s8 %v3475
  %v3477 = vlaneseq
  %v3478 = vshrl.u32 %v3477, 7
  %v3479 = vsub.s32 %v3476, %v3478
  %v3480 = vrot.slane %v3349, %v3479
  %v3482 = vunpack.c.l.s4 1983009808
  %v3483 = vunpack.c.0.s8 %v3482
  %v3484 = vlaneseq
  %v3485 = vshrl.u32 %v3484, 7
  %v3486 = vsub.s32 %v3483, %v3485
  %v3487 = vrot.slane %v3348, %v3486
  %v3489 = vunpack.c.l.s4 1983009808
  %v3490 = vunpack.c.0.s8 %v3489
  %v3491 = vlaneseq
  %v3492 = vshrl.u32 %v3491, 7
  %v3493 = vsub.s32 %v3490, %v3492
  %v3494 = vrot.slane %v3350, %v3493
  %3495 = vrot.lane.b32.xlu0 %v3389, 96
  %v3496 = vpop.permute.xlu0 %3495
  %3497 = vrot.lane.b32.xlu0 %v3396, 96
  %v3498 = vpop.permute.xlu0 %3497
  %3499 = vrot.lane.b32.xlu0 %v3403, 96
  %v3500 = vpop.permute.xlu0 %3499
  %3501 = vrot.lane.b32.xlu0 %v3410, 96
  %v3502 = vpop.permute.xlu0 %3501
  %3503 = vrot.lane.b32.xlu0 %v3417, 96
  %v3504 = vpop.permute.xlu0 %3503
  %3505 = vrot.lane.b32.xlu0 %v3424, 96
  %v3506 = vpop.permute.xlu0 %3505
  %3507 = vrot.lane.b32.xlu0 %v3431, 96
  %v3508 = vpop.permute.xlu0 %3507
  %3509 = vrot.lane.b32.xlu0 %v3438, 96
  %v3510 = vpop.permute.xlu0 %3509
  %3511 = vrot.lane.b32.xlu0 %v3445, 96
  %v3512 = vpop.permute.xlu0 %3511
  %3513 = vrot.lane.b32.xlu0 %v3452, 96
  %v3514 = vpop.permute.xlu0 %3513
  %3515 = vrot.lane.b32.xlu0 %v3459, 96
  %v3516 = vpop.permute.xlu0 %3515
  %3517 = vrot.lane.b32.xlu0 %v3466, 96
  %v3518 = vpop.permute.xlu0 %3517
  %3519 = vrot.lane.b32.xlu0 %v3473, 96
  %v3520 = vpop.permute.xlu0 %3519
  %3521 = vrot.lane.b32.xlu0 %v3480, 96
  %v3522 = vpop.permute.xlu0 %3521
  %3523 = vrot.lane.b32.xlu0 %v3487, 96
  %v3524 = vpop.permute.xlu0 %3523
  %3525 = vrot.lane.b32.xlu0 %v3494, 96
  %v3526 = vpop.permute.xlu0 %3525
  %3543 = vst.msk [vmem:[#allocation4] sm:$0x3] %vm3078, %v3496
  %3544 = vst.msk [vmem:[#allocation4 + $0x2] sm:$0x3] %vm3078, %v3498
  %3545 = vst.msk [vmem:[#allocation4 + $0x4] sm:$0x3] %vm3078, %v3500
  %3546 = vst.msk [vmem:[#allocation4 + $0x6] sm:$0x3] %vm3078, %v3502
  %3547 = vst.msk [vmem:[#allocation4 + $0x8] sm:$0x3] %vm3078, %v3504
  %3548 = vst.msk [vmem:[#allocation4 + $0xa] sm:$0x3] %vm3078, %v3506
  %3549 = vst.msk [vmem:[#allocation4 + $0xc] sm:$0x3] %vm3078, %v3508
  %3550 = vst.msk [vmem:[#allocation4 + $0xe] sm:$0x3] %vm3078, %v3510
  %3551 = vst.msk [vmem:[#allocation4 + $0x10] sm:$0x3] %vm3078, %v3512
  %3552 = vst.msk [vmem:[#allocation4 + $0x12] sm:$0x3] %vm3078, %v3514
  %3553 = vst.msk [vmem:[#allocation4 + $0x14] sm:$0x3] %vm3078, %v3516
  %3554 = vst.msk [vmem:[#allocation4 + $0x16] sm:$0x3] %vm3078, %v3518
  %3555 = vst.msk [vmem:[#allocation4 + $0x18] sm:$0x3] %vm3078, %v3520
  %3556 = vst.msk [vmem:[#allocation4 + $0x1a] sm:$0x3] %vm3078, %v3522
  %3557 = vst.msk [vmem:[#allocation4 + $0x1c] sm:$0x3] %vm3078, %v3524
  %3558 = vst.msk [vmem:[#allocation4 + $0x1e] sm:$0x3] %vm3078, %v3526
  %3559 = vrot.lane.b32.xlu0 %v3389, 64
  %v3560 = vpop.permute.xlu0 %3559
  %3561 = vrot.lane.b32.xlu0 %v3396, 64
  %v3562 = vpop.permute.xlu0 %3561
  %3563 = vrot.lane.b32.xlu0 %v3403, 64
  %v3564 = vpop.permute.xlu0 %3563
  %3565 = vrot.lane.b32.xlu0 %v3410, 64
  %v3566 = vpop.permute.xlu0 %3565
  %3567 = vrot.lane.b32.xlu0 %v3417, 64
  %v3568 = vpop.permute.xlu0 %3567
  %3569 = vrot.lane.b32.xlu0 %v3424, 64
  %v3570 = vpop.permute.xlu0 %3569
  %3571 = vrot.lane.b32.xlu0 %v3431, 64
  %v3572 = vpop.permute.xlu0 %3571
  %3573 = vrot.lane.b32.xlu0 %v3438, 64
  %v3574 = vpop.permute.xlu0 %3573
  %3575 = vrot.lane.b32.xlu0 %v3445, 64
  %v3576 = vpop.permute.xlu0 %3575
  %3577 = vrot.lane.b32.xlu0 %v3452, 64
  %v3578 = vpop.permute.xlu0 %3577
  %3579 = vrot.lane.b32.xlu0 %v3459, 64
  %v3580 = vpop.permute.xlu0 %3579
  %3581 = vrot.lane.b32.xlu0 %v3466, 64
  %v3582 = vpop.permute.xlu0 %3581
  %3583 = vrot.lane.b32.xlu0 %v3473, 64
  %v3584 = vpop.permute.xlu0 %3583
  %3585 = vrot.lane.b32.xlu0 %v3480, 64
  %v3586 = vpop.permute.xlu0 %3585
  %3587 = vrot.lane.b32.xlu0 %v3487, 64
  %v3588 = vpop.permute.xlu0 %3587
  %3589 = vrot.lane.b32.xlu0 %v3494, 64
  %v3590 = vpop.permute.xlu0 %3589
  %3607 = vst.msk [vmem:[#allocation5] sm:$0x3] %vm3078, %v3560
  %3608 = vst.msk [vmem:[#allocation5 + $0x2] sm:$0x3] %vm3078, %v3562
  %3609 = vst.msk [vmem:[#allocation5 + $0x4] sm:$0x3] %vm3078, %v3564
  %3610 = vst.msk [vmem:[#allocation5 + $0x6] sm:$0x3] %vm3078, %v3566
  %3611 = vst.msk [vmem:[#allocation5 + $0x8] sm:$0x3] %vm3078, %v3568
  %3612 = vst.msk [vmem:[#allocation5 + $0xa] sm:$0x3] %vm3078, %v3570
  %3613 = vst.msk [vmem:[#allocation5 + $0xc] sm:$0x3] %vm3078, %v3572
  %3614 = vst.msk [vmem:[#allocation5 + $0xe] sm:$0x3] %vm3078, %v3574
  %3615 = vst.msk [vmem:[#allocation5 + $0x10] sm:$0x3] %vm3078, %v3576
  %3616 = vst.msk [vmem:[#allocation5 + $0x12] sm:$0x3] %vm3078, %v3578
  %3617 = vst.msk [vmem:[#allocation5 + $0x14] sm:$0x3] %vm3078, %v3580
  %3618 = vst.msk [vmem:[#allocation5 + $0x16] sm:$0x3] %vm3078, %v3582
  %3619 = vst.msk [vmem:[#allocation5 + $0x18] sm:$0x3] %vm3078, %v3584
  %3620 = vst.msk [vmem:[#allocation5 + $0x1a] sm:$0x3] %vm3078, %v3586
  %3621 = vst.msk [vmem:[#allocation5 + $0x1c] sm:$0x3] %vm3078, %v3588
  %3622 = vst.msk [vmem:[#allocation5 + $0x1e] sm:$0x3] %vm3078, %v3590
  %v3623 = vld [vmem:[%s8] sm:$0xf]
  %v3624 = vld [vmem:[%s8 + $0x4] sm:$0xf]
  %v3625 = vld [vmem:[%s8 + $0x8] sm:$0xf]
  %v3626 = vld [vmem:[%s8 + $0xc] sm:$0xf]
  %v3627 = vld [vmem:[%s9] sm:$0xf]
  %v3628 = vld [vmem:[%s9 + $0x4] sm:$0xf]
  %v3629 = vld [vmem:[%s9 + $0x8] sm:$0xf]
  %v3630 = vld [vmem:[%s9 + $0xc] sm:$0xf]
  %v3631 = vld [vmem:[%s10] sm:$0xf]
  %v3632 = vld [vmem:[%s10 + $0x4] sm:$0xf]
  %v3633 = vld [vmem:[%s10 + $0x8] sm:$0xf]
  %v3634 = vld [vmem:[%s10 + $0xc] sm:$0xf]
  %v3635 = vld [vmem:[%s12] sm:$0x1]
  %v3636 = vld [vmem:[%s13] sm:$0x1]
  %v3637 = vld [vmem:[%s14] sm:$0x1]
  loop: start=0, step=1, limit=16
  $region70: #{conv_gru_forward.1} parent=0 // loop_pre_header
    _
  $region71: #{conv_gru_forward.1} parent=0 // loop_header
    %s3639 = sphi 0, %s3643
    %p3640 = scmp.ge.s32.totalorder %s3639, 16
    %v3644 = vphi 0.0, %v3850
  $region72: #{conv_gru_forward.1} parent=0 // loop_header_branch
    %3642 = sbr.rel (%p3640) target = $region76
  $region73: #{conv_gru_forward.1} parent=0 // loop_body
    %v3645 = vpack.c.bf16 %v3644, %v3644
    %v3647 = vlaneseq
    %v3648 = vshrl.u32 %v3647, 7
    %v3649 = vsub.s32 0, %v3648
    %v3650 = vrot.slane %v3635, %v3649
    %v3656 = vunpack.c.l.b16 %v3623
    %v3657 = vunpack.c.l.b16 %v3624
    %v3658 = vunpack.c.l.b16 %v3625
    %v3659 = vunpack.c.l.b16 %v3626
    %v3660 = vpack.c.b16 %v3657, %v3656
    %v3661 = vpack.c.b16 %v3659, %v3658
    %v3665 = vsel %vm707, %v3645, 0
    %3667 = vmatprep.subr.bf16.mxu0 0
    %3668 = vmatpush1.bf16.msra.mxu0 %v3660
    %3669 = vmatprep.subr.bf16.mxu0 0
    %3670 = vmatpush1.bf16.msra.mxu0 %v3661
    %3671 = vmatprep.subr.bf16.mxu0 0
    %3672 = vmatpush1.bf16.msra.mxu0 0
    %3673 = vmatprep.subr.bf16.mxu0 0
    %3674 = vmatpush1.bf16.msra.mxu0 0
    %3675 = vmatprep.subr.bf16.mxu0 0
    %3676 = vmatpush1.bf16.msra.mxu0 0
    %3677 = vmatprep.subr.bf16.mxu0 0
    %3678 = vmatpush1.bf16.msra.mxu0 0
    %3679 = vmatprep.subr.bf16.mxu0 0
    %3680 = vmatpush1.bf16.msra.mxu0 0
    %3681 = vmatprep.subr.bf16.mxu0 0
    %3682 = vmatpush1.bf16.msra.mxu0 0
    %3683 = vmatprep.subr.bf16.mxu0 0
    %3684 = vmatpush1.bf16.msra.mxu0 0
    %3685 = vmatprep.subr.bf16.mxu0 0
    %3686 = vmatpush1.bf16.msra.mxu0 0
    %3687 = vmatprep.subr.bf16.mxu0 0
    %3688 = vmatpush1.bf16.msra.mxu0 0
    %3689 = vmatprep.subr.bf16.mxu0 0
    %3690 = vmatpush1.bf16.msra.mxu0 0
    %3691 = vmatprep.subr.bf16.mxu0 0
    %3692 = vmatpush1.bf16.msra.mxu0 0
    %3693 = vmatprep.subr.bf16.mxu0 0
    %3694 = vmatpush1.bf16.msra.mxu0 0
    %3695 = vmatprep.subr.bf16.mxu0 0
    %3696 = vmatpush1.bf16.msra.mxu0 0
    %3697 = vmatprep.subr.bf16.mxu0 0
    %3698 = vmatpush1.bf16.msra.mxu0 0
    %3699 = vmatprep.mubr.bf16.mxu0 0
    %3700 = vmatmul.mubr.bf16.gmra.mrb[0].mxu0 %v3665
    %v3701 = vpop.f32.mrb[0].mxu0
    %v3702 = vadd.f32 %v3650, %v3701
    %v3703 = vpop.f32.mrb[0].mxu0
    %v3704 = vpop.f32.mrb[0].mxu0
    %v3705 = vpop.f32.mrb[0].mxu0
    %3706 = vdwg.mxu0
    %v3708 = vlaneseq
    %v3709 = vshrl.u32 %v3708, 7
    %v3710 = vsub.s32 0, %v3709
    %v3711 = vrot.slane %v3636, %v3710
    %v3717 = vunpack.c.l.b16 %v3627
    %v3718 = vunpack.c.l.b16 %v3628
    %v3719 = vunpack.c.l.b16 %v3629
    %v3720 = vunpack.c.l.b16 %v3630
    %v3721 = vpack.c.b16 %v3718, %v3717
    %v3722 = vpack.c.b16 %v3720, %v3719
    %3725 = vmatprep.subr.bf16.mxu0 0
    %3726 = vmatpush1.bf16.msra.mxu0 %v3721
    %3727 = vmatprep.subr.bf16.mxu0 0
    %3728 = vmatpush1.bf16.msra.mxu0 %v3722
    %3729 = vmatprep.subr.bf16.mxu0 0
    %3730 = vmatpush1.bf16.msra.mxu0 0
    %3731 = vmatprep.subr.bf16.mxu0 0
    %3732 = vmatpush1.bf16.msra.mxu0 0
    %3733 = vmatprep.subr.bf16.mxu0 0
    %3734 = vmatpush1.bf16.msra.mxu0 0
    %3735 = vmatprep.subr.bf16.mxu0 0
    %3736 = vmatpush1.bf16.msra.mxu0 0
    %3737 = vmatprep.subr.bf16.mxu0 0
    %3738 = vmatpush1.bf16.msra.mxu0 0
    %3739 = vmatprep.subr.bf16.mxu0 0
    %3740 = vmatpush1.bf16.msra.mxu0 0
    %3741 = vmatprep.subr.bf16.mxu0 0
    %3742 = vmatpush1.bf16.msra.mxu0 0
    %3743 = vmatprep.subr.bf16.mxu0 0
    %3744 = vmatpush1.bf16.msra.mxu0 0
    %3745 = vmatprep.subr.bf16.mxu0 0
    %3746 = vmatpush1.bf16.msra.mxu0 0
    %3747 = vmatprep.subr.bf16.mxu0 0
    %3748 = vmatpush1.bf16.msra.mxu0 0
    %3749 = vmatprep.subr.bf16.mxu0 0
    %3750 = vmatpush1.bf16.msra.mxu0 0
    %3751 = vmatprep.subr.bf16.mxu0 0
    %3752 = vmatpush1.bf16.msra.mxu0 0
    %3753 = vmatprep.subr.bf16.mxu0 0
    %3754 = vmatpush1.bf16.msra.mxu0 0
    %3755 = vmatprep.subr.bf16.mxu0 0
    %3756 = vmatpush1.bf16.msra.mxu0 0
    %3757 = vmatprep.mubr.bf16.mxu0 0
    %3758 = vmatmul.mubr.bf16.gmra.mrb[0].mxu0 %v3665
    %v3759 = vpop.f32.mrb[0].mxu0
    %v3760 = vadd.f32 %v3711, %v3759
    %v3761 = vpop.f32.mrb[0].mxu0
    %v3762 = vpop.f32.mrb[0].mxu0
    %v3763 = vpop.f32.mrb[0].mxu0
    %3764 = vdwg.mxu0
    %v3766 = vlaneseq
    %v3767 = vshrl.u32 %v3766, 7
    %v3768 = vsub.s32 0, %v3767
    %v3769 = vrot.slane %v3637, %v3768
    %v3775 = vunpack.c.l.b16 %v3631
    %v3776 = vunpack.c.l.b16 %v3632
    %v3777 = vunpack.c.l.b16 %v3633
    %v3778 = vunpack.c.l.b16 %v3634
    %v3779 = vpack.c.b16 %v3776, %v3775
    %v3780 = vpack.c.b16 %v3778, %v3777
    %3783 = vmatprep.subr.bf16.mxu0 0
    %3784 = vmatpush1.bf16.msra.mxu0 %v3779
    %3785 = vmatprep.subr.bf16.mxu0 0
    %3786 = vmatpush1.bf16.msra.mxu0 %v3780
    %3787 = vmatprep.subr.bf16.mxu0 0
    %3788 = vmatpush1.bf16.msra.mxu0 0
    %3789 = vmatprep.subr.bf16.mxu0 0
    %3790 = vmatpush1.bf16.msra.mxu0 0
    %3791 = vmatprep.subr.bf16.mxu0 0
    %3792 = vmatpush1.bf16.msra.mxu0 0
    %3793 = vmatprep.subr.bf16.mxu0 0
    %3794 = vmatpush1.bf16.msra.mxu0 0
    %3795 = vmatprep.subr.bf16.mxu0 0
    %3796 = vmatpush1.bf16.msra.mxu0 0
    %3797 = vmatprep.subr.bf16.mxu0 0
    %3798 = vmatpush1.bf16.msra.mxu0 0
    %3799 = vmatprep.subr.bf16.mxu0 0
    %3800 = vmatpush1.bf16.msra.mxu0 0
    %3801 = vmatprep.subr.bf16.mxu0 0
    %3802 = vmatpush1.bf16.msra.mxu0 0
    %3803 = vmatprep.subr.bf16.mxu0 0
    %3804 = vmatpush1.bf16.msra.mxu0 0
    %3805 = vmatprep.subr.bf16.mxu0 0
    %3806 = vmatpush1.bf16.msra.mxu0 0
    %3807 = vmatprep.subr.bf16.mxu0 0
    %3808 = vmatpush1.bf16.msra.mxu0 0
    %3809 = vmatprep.subr.bf16.mxu0 0
    %3810 = vmatpush1.bf16.msra.mxu0 0
    %3811 = vmatprep.subr.bf16.mxu0 0
    %3812 = vmatpush1.bf16.msra.mxu0 0
    %3813 = vmatprep.subr.bf16.mxu0 0
    %3814 = vmatpush1.bf16.msra.mxu0 0
    %3815 = vmatprep.mubr.bf16.mxu0 0
    %3816 = vmatmul.mubr.bf16.gmra.mrb[0].mxu0 %v3665
    %v3817 = vpop.f32.mrb[0].mxu0
    %v3818 = vadd.f32 %v3769, %v3817
    %v3819 = vpop.f32.mrb[0].mxu0
    %v3820 = vpop.f32.mrb[0].mxu0
    %v3821 = vpop.f32.mrb[0].mxu0
    %3822 = vdwg.mxu0
    %s3823 = smul.u32 %s3639, 2
    %s3824 = scalar_lea.vmem [#allocation3], %s3823
    %v3825 = vld [vmem:[%s3824] sm:$0x3]
    %v3826 = vadd.f32 %v3825, %v3702
    %v3827 = vxor.u32 %v3826, 2147483648
    %v3828 = vmul.f32 %v3827, 1.442695
    %v3829 = vpow.pop %v3828
    %v3830 = vadd.f32 %v3829, 1.0
    %v3831 = vrcp.pop %v3830
    %v3832 = vmul.f32 1.0, %v3831
    %s3833 = scalar_lea.vmem [#allocation4], %s3823
    %v3834 = vld [vmem:[%s3833] sm:$0x3]
    %v3835 = vadd.f32 %v3834, %v3760
    %v3836 = vxor.u32 %v3835, 2147483648
    %v3837 = vmul.f32 %v3836, 1.442695
    %v3838 = vpow.pop %v3837
    %v3839 = vadd.f32 %v3838, 1.0
    %v3840 = vrcp.pop %v3839
    %v3841 = vmul.f32 1.0, %v3840
    %s3842 = scalar_lea.vmem [#allocation5], %s3823
    %v3843 = vld [vmem:[%s3842] sm:$0x3]
    %v3844 = vmul.f32 %v3832, %v3818
    %v3845 = vadd.f32 %v3843, %v3844
    %v3846 = vtanh.pop %v3845
    %v3847 = vsub.f32 1.0, %v3841
    %v3848 = vmul.f32 %v3847, %v3846
    %v3849 = vmul.f32 %v3841, %v3644
    %v3850 = vadd.f32 %v3848, %v3849
    %s3851 = scalar_lea.vmem [#allocation2], %s3823
    %3852 = vst.msk [vmem:[%s3851] sm:$0x3] %vm3078, %v3850
  $region74: #{conv_gru_forward.1} parent=0 // loop_footer
    %s3643 = sadd.s32 1, %s3639
  $region75: #{conv_gru_forward.1} parent=0 // loop_footer_branch
    %3638 = sbr.rel target = $region71
  $region76: #{conv_gru_forward.1} parent=0 // loop_exit
    _
  %v3853 = vld [vmem:[#allocation2] sm:$0x3]
  %v3854 = vld [vmem:[#allocation2 + $0x2] sm:$0x3]
  %v3855 = vld [vmem:[#allocation2 + $0x4] sm:$0x3]
  %v3856 = vld [vmem:[#allocation2 + $0x6] sm:$0x3]
  %v3857 = vld [vmem:[#allocation2 + $0x8] sm:$0x3]
  %v3858 = vld [vmem:[#allocation2 + $0xa] sm:$0x3]
  %v3859 = vld [vmem:[#allocation2 + $0xc] sm:$0x3]
  %v3860 = vld [vmem:[#allocation2 + $0xe] sm:$0x3]
  %v3861 = vld [vmem:[#allocation2 + $0x10] sm:$0x3]
  %v3862 = vld [vmem:[#allocation2 + $0x12] sm:$0x3]
  %v3863 = vld [vmem:[#allocation2 + $0x14] sm:$0x3]
  %v3864 = vld [vmem:[#allocation2 + $0x16] sm:$0x3]
  %v3865 = vld [vmem:[#allocation2 + $0x18] sm:$0x3]
  %v3866 = vld [vmem:[#allocation2 + $0x1a] sm:$0x3]
  %v3867 = vld [vmem:[#allocation2 + $0x1c] sm:$0x3]
  %v3868 = vld [vmem:[#allocation2 + $0x1e] sm:$0x3]
  %v3885 = vcombine.low %v3853, %v3854
  %v3886 = vcombine.low %v3855, %v3856
  %v3888 = vunpack.c.l.s4 1983009808
  %v3889 = vunpack.c.0.s8 %v3888
  %v3890 = vlaneseq
  %v3891 = vshrl.u32 %v3890, 7
  %v3892 = vsub.s32 %v3889, %v3891
  %v3893 = vrot.slane %v3885, %v3892
  %v3895 = vunpack.c.l.s4 1983009808
  %v3896 = vunpack.c.0.s8 %v3895
  %v3897 = vlaneseq
  %v3898 = vshrl.u32 %v3897, 7
  %v3899 = vsub.s32 %v3896, %v3898
  %v3900 = vrot.slane %v3886, %v3899
  %v3901 = vcombine.low %v3893, %v3900
  %v3902 = vcombine.low %v3857, %v3858
  %v3903 = vcombine.low %v3859, %v3860
  %v3905 = vunpack.c.l.s4 1983009808
  %v3906 = vunpack.c.0.s8 %v3905
  %v3907 = vlaneseq
  %v3908 = vshrl.u32 %v3907, 7
  %v3909 = vsub.s32 %v3906, %v3908
  %v3910 = vrot.slane %v3902, %v3909
  %v3912 = vunpack.c.l.s4 1983009808
  %v3913 = vunpack.c.0.s8 %v3912
  %v3914 = vlaneseq
  %v3915 = vshrl.u32 %v3914, 7
  %v3916 = vsub.s32 %v3913, %v3915
  %v3917 = vrot.slane %v3903, %v3916
  %v3918 = vcombine.low %v3910, %v3917
  %v3919 = vcombine.low %v3861, %v3862
  %v3920 = vcombine.low %v3863, %v3864
  %v3922 = vunpack.c.l.s4 1983009808
  %v3923 = vunpack.c.0.s8 %v3922
  %v3924 = vlaneseq
  %v3925 = vshrl.u32 %v3924, 7
  %v3926 = vsub.s32 %v3923, %v3925
  %v3927 = vrot.slane %v3919, %v3926
  %v3929 = vunpack.c.l.s4 1983009808
  %v3930 = vunpack.c.0.s8 %v3929
  %v3931 = vlaneseq
  %v3932 = vshrl.u32 %v3931, 7
  %v3933 = vsub.s32 %v3930, %v3932
  %v3934 = vrot.slane %v3920, %v3933
  %v3935 = vcombine.low %v3927, %v3934
  %v3936 = vcombine.low %v3865, %v3866
  %v3937 = vcombine.low %v3867, %v3868
  %v3939 = vunpack.c.l.s4 1983009808
  %v3940 = vunpack.c.0.s8 %v3939
  %v3941 = vlaneseq
  %v3942 = vshrl.u32 %v3941, 7
  %v3943 = vsub.s32 %v3940, %v3942
  %v3944 = vrot.slane %v3936, %v3943
  %v3946 = vunpack.c.l.s4 1983009808
  %v3947 = vunpack.c.0.s8 %v3946
  %v3948 = vlaneseq
  %v3949 = vshrl.u32 %v3948, 7
  %v3950 = vsub.s32 %v3947, %v3949
  %v3951 = vrot.slane %v3937, %v3950
  %v3952 = vcombine.low %v3944, %v3951
  %v3957 = vpack.c.bf16 %v3918, %v3901
  %v3958 = vpack.c.bf16 %v3952, %v3935
  %s3959 = scalar_lea.vmem %s7, 16
  %v3960 = vld [vmem:[%s3959] sm:$0xf]
  %v3961 = vld [vmem:[%s3959 + $0x4] sm:$0xf]
  %v3962 = vld [vmem:[%s3959 + $0x8] sm:$0xf]
  %v3963 = vld [vmem:[%s3959 + $0xc] sm:$0xf]
  %s3964 = scalar_lea.vmem %s11, 1
  %v3965 = vld [vmem:[%s3964] sm:$0x1]
  %v3967 = vlaneseq
  %v3968 = vshrl.u32 %v3967, 7
  %v3969 = vsub.s32 0, %v3968
  %v3970 = vrot.slane %v3965, %v3969
  %v3976 = vunpack.c.l.b16 %v3960
  %v3977 = vunpack.c.l.b16 %v3961
  %v3978 = vunpack.c.l.b16 %v3962
  %v3979 = vunpack.c.l.b16 %v3963
  %v3980 = vpack.c.b16 %v3977, %v3976
  %v3981 = vpack.c.b16 %v3979, %v3978
  %v3985 = vsel %vm707, %v3957, 0
  %v3988 = vsel %vm707, %v3958, 0
  %3990 = vmatprep.subr.bf16.mxu0 0
  %3991 = vmatpush1.bf16.msra.mxu0 %v3980
  %3992 = vmatprep.subr.bf16.mxu0 0
  %3993 = vmatpush1.bf16.msra.mxu0 %v3981
  %3994 = vmatprep.subr.bf16.mxu0 0
  %3995 = vmatpush1.bf16.msra.mxu0 0
  %3996 = vmatprep.subr.bf16.mxu0 0
  %3997 = vmatpush1.bf16.msra.mxu0 0
  %3998 = vmatprep.subr.bf16.mxu0 0
  %3999 = vmatpush1.bf16.msra.mxu0 0
  %4000 = vmatprep.subr.bf16.mxu0 0
  %4001 = vmatpush1.bf16.msra.mxu0 0
  %4002 = vmatprep.subr.bf16.mxu0 0
  %4003 = vmatpush1.bf16.msra.mxu0 0
  %4004 = vmatprep.subr.bf16.mxu0 0
  %4005 = vmatpush1.bf16.msra.mxu0 0
  %4006 = vmatprep.subr.bf16.mxu0 0
  %4007 = vmatpush1.bf16.msra.mxu0 0
  %4008 = vmatprep.subr.bf16.mxu0 0
  %4009 = vmatpush1.bf16.msra.mxu0 0
  %4010 = vmatprep.subr.bf16.mxu0 0
  %4011 = vmatpush1.bf16.msra.mxu0 0
  %4012 = vmatprep.subr.bf16.mxu0 0
  %4013 = vmatpush1.bf16.msra.mxu0 0
  %4014 = vmatprep.subr.bf16.mxu0 0
  %4015 = vmatpush1.bf16.msra.mxu0 0
  %4016 = vmatprep.subr.bf16.mxu0 0
  %4017 = vmatpush1.bf16.msra.mxu0 0
  %4018 = vmatprep.subr.bf16.mxu0 0
  %4019 = vmatpush1.bf16.msra.mxu0 0
  %4020 = vmatprep.subr.bf16.mxu0 0
  %4021 = vmatpush1.bf16.msra.mxu0 0
  %4022 = vmatprep.mubr.bf16.mxu0 0
  %4023 = vmatmul.mubr.bf16.gmra.mrb[0].mxu0 %v3985
  %v4024 = vpop.f32.mrb[0].mxu0
  %v4025 = vadd.f32 %v3970, %v4024
  %v4026 = vpop.f32.mrb[0].mxu0
  %v4027 = vpop.f32.mrb[0].mxu0
  %v4028 = vadd.f32 %v3970, %v4027
  %v4029 = vpop.f32.mrb[0].mxu0
  %4030 = vmatprep.mubr.bf16.mxu0 0
  %4031 = vmatmul.mubr.bf16.gmra.mrb[0].mxu0 %v3988
  %v4032 = vpop.f32.mrb[0].mxu0
  %v4033 = vadd.f32 %v3970, %v4032
  %v4034 = vpop.f32.mrb[0].mxu0
  %v4035 = vpop.f32.mrb[0].mxu0
  %v4036 = vadd.f32 %v3970, %v4035
  %v4037 = vpop.f32.mrb[0].mxu0
  %4038 = vdwg.mxu0
  %v4043 = vcombine.high %v4025, %v4025
  %v4045 = vunpack.c.l.s4 1983009808
  %v4046 = vunpack.c.0.s8 %v4045
  %v4047 = vlaneseq
  %v4048 = vshrl.u32 %v4047, 7
  %v4049 = vsub.s32 %v4046, %v4048
  %v4050 = vrot.slane %v4025, %v4049
  %v4052 = vunpack.c.l.s4 1983009808
  %v4053 = vunpack.c.0.s8 %v4052
  %v4054 = vlaneseq
  %v4055 = vshrl.u32 %v4054, 7
  %v4056 = vsub.s32 %v4053, %v4055
  %v4057 = vrot.slane %v4043, %v4056
  %v4058 = vcombine.high %v4050, %v4050
  %v4059 = vcombine.high %v4057, %v4057
  %v4060 = vcombine.high %v4028, %v4028
  %v4062 = vunpack.c.l.s4 1983009808
  %v4063 = vunpack.c.0.s8 %v4062
  %v4064 = vlaneseq
  %v4065 = vshrl.u32 %v4064, 7
  %v4066 = vsub.s32 %v4063, %v4065
  %v4067 = vrot.slane %v4028, %v4066
  %v4069 = vunpack.c.l.s4 1983009808
  %v4070 = vunpack.c.0.s8 %v4069
  %v4071 = vlaneseq
  %v4072 = vshrl.u32 %v4071, 7
  %v4073 = vsub.s32 %v4070, %v4072
  %v4074 = vrot.slane %v4060, %v4073
  %v4075 = vcombine.high %v4067, %v4067
  %v4076 = vcombine.high %v4074, %v4074
  %v4077 = vcombine.high %v4033, %v4033
  %v4079 = vunpack.c.l.s4 1983009808
  %v4080 = vunpack.c.0.s8 %v4079
  %v4081 = vlaneseq
  %v4082 = vshrl.u32 %v4081, 7
  %v4083 = vsub.s32 %v4080, %v4082
  %v4084 = vrot.slane %v4033, %v4083
  %v4086 = vunpack.c.l.s4 1983009808
  %v4087 = vunpack.c.0.s8 %v4086
  %v4088 = vlaneseq
  %v4089 = vshrl.u32 %v4088, 7
  %v4090 = vsub.s32 %v4087, %v4089
  %v4091 = vrot.slane %v4077, %v4090
  %v4092 = vcombine.high %v4084, %v4084
  %v4093 = vcombine.high %v4091, %v4091
  %v4094 = vcombine.high %v4036, %v4036
  %v4096 = vunpack.c.l.s4 1983009808
  %v4097 = vunpack.c.0.s8 %v4096
  %v4098 = vlaneseq
  %v4099 = vshrl.u32 %v4098, 7
  %v4100 = vsub.s32 %v4097, %v4099
  %v4101 = vrot.slane %v4036, %v4100
  %v4103 = vunpack.c.l.s4 1983009808
  %v4104 = vunpack.c.0.s8 %v4103
  %v4105 = vlaneseq
  %v4106 = vshrl.u32 %v4105, 7
  %v4107 = vsub.s32 %v4104, %v4106
  %v4108 = vrot.slane %v4094, %v4107
  %v4109 = vcombine.high %v4101, %v4101
  %v4110 = vcombine.high %v4108, %v4108
  %4127 = vst.msk [vmem:[#allocation3] sm:$0x3] %vm3078, %v4050
  %4128 = vst.msk [vmem:[#allocation3 + $0x2] sm:$0x3] %vm3078, %v4058
  %4129 = vst.msk [vmem:[#allocation3 + $0x4] sm:$0x3] %vm3078, %v4057
  %4130 = vst.msk [vmem:[#allocation3 + $0x6] sm:$0x3] %vm3078, %v4059
  %4131 = vst.msk [vmem:[#allocation3 + $0x8] sm:$0x3] %vm3078, %v4067
  %4132 = vst.msk [vmem:[#allocation3 + $0xa] sm:$0x3] %vm3078, %v4075
  %4133 = vst.msk [vmem:[#allocation3 + $0xc] sm:$0x3] %vm3078, %v4074
  %4134 = vst.msk [vmem:[#allocation3 + $0xe] sm:$0x3] %vm3078, %v4076
  %4135 = vst.msk [vmem:[#allocation3 + $0x10] sm:$0x3] %vm3078, %v4084
  %4136 = vst.msk [vmem:[#allocation3 + $0x12] sm:$0x3] %vm3078, %v4092
  %4137 = vst.msk [vmem:[#allocation3 + $0x14] sm:$0x3] %vm3078, %v4091
  %4138 = vst.msk [vmem:[#allocation3 + $0x16] sm:$0x3] %vm3078, %v4093
  %4139 = vst.msk [vmem:[#allocation3 + $0x18] sm:$0x3] %vm3078, %v4101
  %4140 = vst.msk [vmem:[#allocation3 + $0x1a] sm:$0x3] %vm3078, %v4109
  %4141 = vst.msk [vmem:[#allocation3 + $0x1c] sm:$0x3] %vm3078, %v4108
  %4142 = vst.msk [vmem:[#allocation3 + $0x1e] sm:$0x3] %vm3078, %v4110
  %v4144 = vunpack.c.l.s4 1983009808
  %v4145 = vunpack.c.0.s8 %v4144
  %v4146 = vlaneseq
  %v4147 = vshrl.u32 %v4146, 7
  %v4148 = vsub.s32 %v4145, %v4147
  %v4149 = vrot.slane %v4050, %v4148
  %v4151 = vunpack.c.l.s4 1983009808
  %v4152 = vunpack.c.0.s8 %v4151
  %v4153 = vlaneseq
  %v4154 = vshrl.u32 %v4153, 7
  %v4155 = vsub.s32 %v4152, %v4154
  %v4156 = vrot.slane %v4058, %v4155
  %v4158 = vunpack.c.l.s4 1983009808
  %v4159 = vunpack.c.0.s8 %v4158
  %v4160 = vlaneseq
  %v4161 = vshrl.u32 %v4160, 7
  %v4162 = vsub.s32 %v4159, %v4161
  %v4163 = vrot.slane %v4057, %v4162
  %v4165 = vunpack.c.l.s4 1983009808
  %v4166 = vunpack.c.0.s8 %v4165
  %v4167 = vlaneseq
  %v4168 = vshrl.u32 %v4167, 7
  %v4169 = vsub.s32 %v4166, %v4168
  %v4170 = vrot.slane %v4059, %v4169
  %v4172 = vunpack.c.l.s4 1983009808
  %v4173 = vunpack.c.0.s8 %v4172
  %v4174 = vlaneseq
  %v4175 = vshrl.u32 %v4174, 7
  %v4176 = vsub.s32 %v4173, %v4175
  %v4177 = vrot.slane %v4067, %v4176
  %v4179 = vunpack.c.l.s4 1983009808
  %v4180 = vunpack.c.0.s8 %v4179
  %v4181 = vlaneseq
  %v4182 = vshrl.u32 %v4181, 7
  %v4183 = vsub.s32 %v4180, %v4182
  %v4184 = vrot.slane %v4075, %v4183
  %v4186 = vunpack.c.l.s4 1983009808
  %v4187 = vunpack.c.0.s8 %v4186
  %v4188 = vlaneseq
  %v4189 = vshrl.u32 %v4188, 7
  %v4190 = vsub.s32 %v4187, %v4189
  %v4191 = vrot.slane %v4074, %v4190
  %v4193 = vunpack.c.l.s4 1983009808
  %v4194 = vunpack.c.0.s8 %v4193
  %v4195 = vlaneseq
  %v4196 = vshrl.u32 %v4195, 7
  %v4197 = vsub.s32 %v4194, %v4196
  %v4198 = vrot.slane %v4076, %v4197
  %v4200 = vunpack.c.l.s4 1983009808
  %v4201 = vunpack.c.0.s8 %v4200
  %v4202 = vlaneseq
  %v4203 = vshrl.u32 %v4202, 7
  %v4204 = vsub.s32 %v4201, %v4203
  %v4205 = vrot.slane %v4084, %v4204
  %v4207 = vunpack.c.l.s4 1983009808
  %v4208 = vunpack.c.0.s8 %v4207
  %v4209 = vlaneseq
  %v4210 = vshrl.u32 %v4209, 7
  %v4211 = vsub.s32 %v4208, %v4210
  %v4212 = vrot.slane %v4092, %v4211
  %v4214 = vunpack.c.l.s4 1983009808
  %v4215 = vunpack.c.0.s8 %v4214
  %v4216 = vlaneseq
  %v4217 = vshrl.u32 %v4216, 7
  %v4218 = vsub.s32 %v4215, %v4217
  %v4219 = vrot.slane %v4091, %v4218
  %v4221 = vunpack.c.l.s4 1983009808
  %v4222 = vunpack.c.0.s8 %v4221
  %v4223 = vlaneseq
  %v4224 = vshrl.u32 %v4223, 7
  %v4225 = vsub.s32 %v4222, %v4224
  %v4226 = vrot.slane %v4093, %v4225
  %v4228 = vunpack.c.l.s4 1983009808
  %v4229 = vunpack.c.0.s8 %v4228
  %v4230 = vlaneseq
  %v4231 = vshrl.u32 %v4230, 7
  %v4232 = vsub.s32 %v4229, %v4231
  %v4233 = vrot.slane %v4101, %v4232
  %v4235 = vunpack.c.l.s4 1983009808
  %v4236 = vunpack.c.0.s8 %v4235
  %v4237 = vlaneseq
  %v4238 = vshrl.u32 %v4237, 7
  %v4239 = vsub.s32 %v4236, %v4238
  %v4240 = vrot.slane %v4109, %v4239
  %v4242 = vunpack.c.l.s4 1983009808
  %v4243 = vunpack.c.0.s8 %v4242
  %v4244 = vlaneseq
  %v4245 = vshrl.u32 %v4244, 7
  %v4246 = vsub.s32 %v4243, %v4245
  %v4247 = vrot.slane %v4108, %v4246
  %v4249 = vunpack.c.l.s4 1983009808
  %v4250 = vunpack.c.0.s8 %v4249
  %v4251 = vlaneseq
  %v4252 = vshrl.u32 %v4251, 7
  %v4253 = vsub.s32 %v4250, %v4252
  %v4254 = vrot.slane %v4110, %v4253
  %4255 = vrot.lane.b32.xlu0 %v4149, 96
  %v4256 = vpop.permute.xlu0 %4255
  %4257 = vrot.lane.b32.xlu0 %v4156, 96
  %v4258 = vpop.permute.xlu0 %4257
  %4259 = vrot.lane.b32.xlu0 %v4163, 96
  %v4260 = vpop.permute.xlu0 %4259
  %4261 = vrot.lane.b32.xlu0 %v4170, 96
  %v4262 = vpop.permute.xlu0 %4261
  %4263 = vrot.lane.b32.xlu0 %v4177, 96
  %v4264 = vpop.permute.xlu0 %4263
  %4265 = vrot.lane.b32.xlu0 %v4184, 96
  %v4266 = vpop.permute.xlu0 %4265
  %4267 = vrot.lane.b32.xlu0 %v4191, 96
  %v4268 = vpop.permute.xlu0 %4267
  %4269 = vrot.lane.b32.xlu0 %v4198, 96
  %v4270 = vpop.permute.xlu0 %4269
  %4271 = vrot.lane.b32.xlu0 %v4205, 96
  %v4272 = vpop.permute.xlu0 %4271
  %4273 = vrot.lane.b32.xlu0 %v4212, 96
  %v4274 = vpop.permute.xlu0 %4273
  %4275 = vrot.lane.b32.xlu0 %v4219, 96
  %v4276 = vpop.permute.xlu0 %4275
  %4277 = vrot.lane.b32.xlu0 %v4226, 96
  %v4278 = vpop.permute.xlu0 %4277
  %4279 = vrot.lane.b32.xlu0 %v4233, 96
  %v4280 = vpop.permute.xlu0 %4279
  %4281 = vrot.lane.b32.xlu0 %v4240, 96
  %v4282 = vpop.permute.xlu0 %4281
  %4283 = vrot.lane.b32.xlu0 %v4247, 96
  %v4284 = vpop.permute.xlu0 %4283
  %4285 = vrot.lane.b32.xlu0 %v4254, 96
  %v4286 = vpop.permute.xlu0 %4285
  %4303 = vst.msk [vmem:[#allocation4] sm:$0x3] %vm3078, %v4256
  %4304 = vst.msk [vmem:[#allocation4 + $0x2] sm:$0x3] %vm3078, %v4258
  %4305 = vst.msk [vmem:[#allocation4 + $0x4] sm:$0x3] %vm3078, %v4260
  %4306 = vst.msk [vmem:[#allocation4 + $0x6] sm:$0x3] %vm3078, %v4262
  %4307 = vst.msk [vmem:[#allocation4 + $0x8] sm:$0x3] %vm3078, %v4264
  %4308 = vst.msk [vmem:[#allocation4 + $0xa] sm:$0x3] %vm3078, %v4266
  %4309 = vst.msk [vmem:[#allocation4 + $0xc] sm:$0x3] %vm3078, %v4268
  %4310 = vst.msk [vmem:[#allocation4 + $0xe] sm:$0x3] %vm3078, %v4270
  %4311 = vst.msk [vmem:[#allocation4 + $0x10] sm:$0x3] %vm3078, %v4272
  %4312 = vst.msk [vmem:[#allocation4 + $0x12] sm:$0x3] %vm3078, %v4274
  %4313 = vst.msk [vmem:[#allocation4 + $0x14] sm:$0x3] %vm3078, %v4276
  %4314 = vst.msk [vmem:[#allocation4 + $0x16] sm:$0x3] %vm3078, %v4278
  %4315 = vst.msk [vmem:[#allocation4 + $0x18] sm:$0x3] %vm3078, %v4280
  %4316 = vst.msk [vmem:[#allocation4 + $0x1a] sm:$0x3] %vm3078, %v4282
  %4317 = vst.msk [vmem:[#allocation4 + $0x1c] sm:$0x3] %vm3078, %v4284
  %4318 = vst.msk [vmem:[#allocation4 + $0x1e] sm:$0x3] %vm3078, %v4286
  %4319 = vrot.lane.b32.xlu0 %v4149, 64
  %v4320 = vpop.permute.xlu0 %4319
  %4321 = vrot.lane.b32.xlu0 %v4156, 64
  %v4322 = vpop.permute.xlu0 %4321
  %4323 = vrot.lane.b32.xlu0 %v4163, 64
  %v4324 = vpop.permute.xlu0 %4323
  %4325 = vrot.lane.b32.xlu0 %v4170, 64
  %v4326 = vpop.permute.xlu0 %4325
  %4327 = vrot.lane.b32.xlu0 %v4177, 64
  %v4328 = vpop.permute.xlu0 %4327
  %4329 = vrot.lane.b32.xlu0 %v4184, 64
  %v4330 = vpop.permute.xlu0 %4329
  %4331 = vrot.lane.b32.xlu0 %v4191, 64
  %v4332 = vpop.permute.xlu0 %4331
  %4333 = vrot.lane.b32.xlu0 %v4198, 64
  %v4334 = vpop.permute.xlu0 %4333
  %4335 = vrot.lane.b32.xlu0 %v4205, 64
  %v4336 = vpop.permute.xlu0 %4335
  %4337 = vrot.lane.b32.xlu0 %v4212, 64
  %v4338 = vpop.permute.xlu0 %4337
  %4339 = vrot.lane.b32.xlu0 %v4219, 64
  %v4340 = vpop.permute.xlu0 %4339
  %4341 = vrot.lane.b32.xlu0 %v4226, 64
  %v4342 = vpop.permute.xlu0 %4341
  %4343 = vrot.lane.b32.xlu0 %v4233, 64
  %v4344 = vpop.permute.xlu0 %4343
  %4345 = vrot.lane.b32.xlu0 %v4240, 64
  %v4346 = vpop.permute.xlu0 %4345
  %4347 = vrot.lane.b32.xlu0 %v4247, 64
  %v4348 = vpop.permute.xlu0 %4347
  %4349 = vrot.lane.b32.xlu0 %v4254, 64
  %v4350 = vpop.permute.xlu0 %4349
  %4367 = vst.msk [vmem:[#allocation5] sm:$0x3] %vm3078, %v4320
  %4368 = vst.msk [vmem:[#allocation5 + $0x2] sm:$0x3] %vm3078, %v4322
  %4369 = vst.msk [vmem:[#allocation5 + $0x4] sm:$0x3] %vm3078, %v4324
  %4370 = vst.msk [vmem:[#allocation5 + $0x6] sm:$0x3] %vm3078, %v4326
  %4371 = vst.msk [vmem:[#allocation5 + $0x8] sm:$0x3] %vm3078, %v4328
  %4372 = vst.msk [vmem:[#allocation5 + $0xa] sm:$0x3] %vm3078, %v4330
  %4373 = vst.msk [vmem:[#allocation5 + $0xc] sm:$0x3] %vm3078, %v4332
  %4374 = vst.msk [vmem:[#allocation5 + $0xe] sm:$0x3] %vm3078, %v4334
  %4375 = vst.msk [vmem:[#allocation5 + $0x10] sm:$0x3] %vm3078, %v4336
  %4376 = vst.msk [vmem:[#allocation5 + $0x12] sm:$0x3] %vm3078, %v4338
  %4377 = vst.msk [vmem:[#allocation5 + $0x14] sm:$0x3] %vm3078, %v4340
  %4378 = vst.msk [vmem:[#allocation5 + $0x16] sm:$0x3] %vm3078, %v4342
  %4379 = vst.msk [vmem:[#allocation5 + $0x18] sm:$0x3] %vm3078, %v4344
  %4380 = vst.msk [vmem:[#allocation5 + $0x1a] sm:$0x3] %vm3078, %v4346
  %4381 = vst.msk [vmem:[#allocation5 + $0x1c] sm:$0x3] %vm3078, %v4348
  %4382 = vst.msk [vmem:[#allocation5 + $0x1e] sm:$0x3] %vm3078, %v4350
  %s4383 = scalar_lea.vmem %s8, 16
  %v4384 = vld [vmem:[%s4383] sm:$0xf]
  %v4385 = vld [vmem:[%s4383 + $0x4] sm:$0xf]
  %v4386 = vld [vmem:[%s4383 + $0x8] sm:$0xf]
  %v4387 = vld [vmem:[%s4383 + $0xc] sm:$0xf]
  %s4388 = scalar_lea.vmem %s9, 16
  %v4389 = vld [vmem:[%s4388] sm:$0xf]
  %v4390 = vld [vmem:[%s4388 + $0x4] sm:$0xf]
  %v4391 = vld [vmem:[%s4388 + $0x8] sm:$0xf]
  %v4392 = vld [vmem:[%s4388 + $0xc] sm:$0xf]
  %s4393 = scalar_lea.vmem %s10, 16
  %v4394 = vld [vmem:[%s4393] sm:$0xf]
  %v4395 = vld [vmem:[%s4393 + $0x4] sm:$0xf]
  %v4396 = vld [vmem:[%s4393 + $0x8] sm:$0xf]
  %v4397 = vld [vmem:[%s4393 + $0xc] sm:$0xf]
  %s4398 = scalar_lea.vmem %s12, 1
  %v4399 = vld [vmem:[%s4398] sm:$0x1]
  %s4400 = scalar_lea.vmem %s13, 1
  %v4401 = vld [vmem:[%s4400] sm:$0x1]
  %s4402 = scalar_lea.vmem %s14, 1
  %v4403 = vld [vmem:[%s4402] sm:$0x1]
  loop: start=0, step=1, limit=16
  $region77: #{conv_gru_forward.1} parent=0 // loop_pre_header
    _
  $region78: #{conv_gru_forward.1} parent=0 // loop_header
    %s4405 = sphi 0, %s4409
    %p4406 = scmp.ge.s32.totalorder %s4405, 16
    %v4410 = vphi 0.0, %v4616
  $region79: #{conv_gru_forward.1} parent=0 // loop_header_branch
    %4408 = sbr.rel (%p4406) target = $region83
  $region80: #{conv_gru_forward.1} parent=0 // loop_body
    %v4411 = vpack.c.bf16 %v4410, %v4410
    %v4413 = vlaneseq
    %v4414 = vshrl.u32 %v4413, 7
    %v4415 = vsub.s32 0, %v4414
    %v4416 = vrot.slane %v4399, %v4415
    %v4422 = vunpack.c.l.b16 %v4384
    %v4423 = vunpack.c.l.b16 %v4385
    %v4424 = vunpack.c.l.b16 %v4386
    %v4425 = vunpack.c.l.b16 %v4387
    %v4426 = vpack.c.b16 %v4423, %v4422
    %v4427 = vpack.c.b16 %v4425, %v4424
    %v4431 = vsel %vm707, %v4411, 0
    %4433 = vmatprep.subr.bf16.mxu0 0
    %4434 = vmatpush1.bf16.msra.mxu0 %v4426
    %4435 = vmatprep.subr.bf16.mxu0 0
    %4436 = vmatpush1.bf16.msra.mxu0 %v4427
    %4437 = vmatprep.subr.bf16.mxu0 0
    %4438 = vmatpush1.bf16.msra.mxu0 0
    %4439 = vmatprep.subr.bf16.mxu0 0
    %4440 = vmatpush1.bf16.msra.mxu0 0
    %4441 = vmatprep.subr.bf16.mxu0 0
    %4442 = vmatpush1.bf16.msra.mxu0 0
    %4443 = vmatprep.subr.bf16.mxu0 0
    %4444 = vmatpush1.bf16.msra.mxu0 0
    %4445 = vmatprep.subr.bf16.mxu0 0
    %4446 = vmatpush1.bf16.msra.mxu0 0
    %4447 = vmatprep.subr.bf16.mxu0 0
    %4448 = vmatpush1.bf16.msra.mxu0 0
    %4449 = vmatprep.subr.bf16.mxu0 0
    %4450 = vmatpush1.bf16.msra.mxu0 0
    %4451 = vmatprep.subr.bf16.mxu0 0
    %4452 = vmatpush1.bf16.msra.mxu0 0
    %4453 = vmatprep.subr.bf16.mxu0 0
    %4454 = vmatpush1.bf16.msra.mxu0 0
    %4455 = vmatprep.subr.bf16.mxu0 0
    %4456 = vmatpush1.bf16.msra.mxu0 0
    %4457 = vmatprep.subr.bf16.mxu0 0
    %4458 = vmatpush1.bf16.msra.mxu0 0
    %4459 = vmatprep.subr.bf16.mxu0 0
    %4460 = vmatpush1.bf16.msra.mxu0 0
    %4461 = vmatprep.subr.bf16.mxu0 0
    %4462 = vmatpush1.bf16.msra.mxu0 0
    %4463 = vmatprep.subr.bf16.mxu0 0
    %4464 = vmatpush1.bf16.msra.mxu0 0
    %4465 = vmatprep.mubr.bf16.mxu0 0
    %4466 = vmatmul.mubr.bf16.gmra.mrb[0].mxu0 %v4431
    %v4467 = vpop.f32.mrb[0].mxu0
    %v4468 = vadd.f32 %v4416, %v4467
    %v4469 = vpop.f32.mrb[0].mxu0
    %v4470 = vpop.f32.mrb[0].mxu0
    %v4471 = vpop.f32.mrb[0].mxu0
    %4472 = vdwg.mxu0
    %v4474 = vlaneseq
    %v4475 = vshrl.u32 %v4474, 7
    %v4476 = vsub.s32 0, %v4475
    %v4477 = vrot.slane %v4401, %v4476
    %v4483 = vunpack.c.l.b16 %v4389
    %v4484 = vunpack.c.l.b16 %v4390
    %v4485 = vunpack.c.l.b16 %v4391
    %v4486 = vunpack.c.l.b16 %v4392
    %v4487 = vpack.c.b16 %v4484, %v4483
    %v4488 = vpack.c.b16 %v4486, %v4485
    %4491 = vmatprep.subr.bf16.mxu0 0
    %4492 = vmatpush1.bf16.msra.mxu0 %v4487
    %4493 = vmatprep.subr.bf16.mxu0 0
    %4494 = vmatpush1.bf16.msra.mxu0 %v4488
    %4495 = vmatprep.subr.bf16.mxu0 0
    %4496 = vmatpush1.bf16.msra.mxu0 0
    %4497 = vmatprep.subr.bf16.mxu0 0
    %4498 = vmatpush1.bf16.msra.mxu0 0
    %4499 = vmatprep.subr.bf16.mxu0 0
    %4500 = vmatpush1.bf16.msra.mxu0 0
    %4501 = vmatprep.subr.bf16.mxu0 0
    %4502 = vmatpush1.bf16.msra.mxu0 0
    %4503 = vmatprep.subr.bf16.mxu0 0
    %4504 = vmatpush1.bf16.msra.mxu0 0
    %4505 = vmatprep.subr.bf16.mxu0 0
    %4506 = vmatpush1.bf16.msra.mxu0 0
    %4507 = vmatprep.subr.bf16.mxu0 0
    %4508 = vmatpush1.bf16.msra.mxu0 0
    %4509 = vmatprep.subr.bf16.mxu0 0
    %4510 = vmatpush1.bf16.msra.mxu0 0
    %4511 = vmatprep.subr.bf16.mxu0 0
    %4512 = vmatpush1.bf16.msra.mxu0 0
    %4513 = vmatprep.subr.bf16.mxu0 0
    %4514 = vmatpush1.bf16.msra.mxu0 0
    %4515 = vmatprep.subr.bf16.mxu0 0
    %4516 = vmatpush1.bf16.msra.mxu0 0
    %4517 = vmatprep.subr.bf16.mxu0 0
    %4518 = vmatpush1.bf16.msra.mxu0 0
    %4519 = vmatprep.subr.bf16.mxu0 0
    %4520 = vmatpush1.bf16.msra.mxu0 0
    %4521 = vmatprep.subr.bf16.mxu0 0
    %4522 = vmatpush1.bf16.msra.mxu0 0
    %4523 = vmatprep.mubr.bf16.mxu0 0
    %4524 = vmatmul.mubr.bf16.gmra.mrb[0].mxu0 %v4431
    %v4525 = vpop.f32.mrb[0].mxu0
    %v4526 = vadd.f32 %v4477, %v4525
    %v4527 = vpop.f32.mrb[0].mxu0
    %v4528 = vpop.f32.mrb[0].mxu0
    %v4529 = vpop.f32.mrb[0].mxu0
    %4530 = vdwg.mxu0
    %v4532 = vlaneseq
    %v4533 = vshrl.u32 %v4532, 7
    %v4534 = vsub.s32 0, %v4533
    %v4535 = vrot.slane %v4403, %v4534
    %v4541 = vunpack.c.l.b16 %v4394
    %v4542 = vunpack.c.l.b16 %v4395
    %v4543 = vunpack.c.l.b16 %v4396
    %v4544 = vunpack.c.l.b16 %v4397
    %v4545 = vpack.c.b16 %v4542, %v4541
    %v4546 = vpack.c.b16 %v4544, %v4543
    %4549 = vmatprep.subr.bf16.mxu0 0
    %4550 = vmatpush1.bf16.msra.mxu0 %v4545
    %4551 = vmatprep.subr.bf16.mxu0 0
    %4552 = vmatpush1.bf16.msra.mxu0 %v4546
    %4553 = vmatprep.subr.bf16.mxu0 0
    %4554 = vmatpush1.bf16.msra.mxu0 0
    %4555 = vmatprep.subr.bf16.mxu0 0
    %4556 = vmatpush1.bf16.msra.mxu0 0
    %4557 = vmatprep.subr.bf16.mxu0 0
    %4558 = vmatpush1.bf16.msra.mxu0 0
    %4559 = vmatprep.subr.bf16.mxu0 0
    %4560 = vmatpush1.bf16.msra.mxu0 0
    %4561 = vmatprep.subr.bf16.mxu0 0
    %4562 = vmatpush1.bf16.msra.mxu0 0
    %4563 = vmatprep.subr.bf16.mxu0 0
    %4564 = vmatpush1.bf16.msra.mxu0 0
    %4565 = vmatprep.subr.bf16.mxu0 0
    %4566 = vmatpush1.bf16.msra.mxu0 0
    %4567 = vmatprep.subr.bf16.mxu0 0
    %4568 = vmatpush1.bf16.msra.mxu0 0
    %4569 = vmatprep.subr.bf16.mxu0 0
    %4570 = vmatpush1.bf16.msra.mxu0 0
    %4571 = vmatprep.subr.bf16.mxu0 0
    %4572 = vmatpush1.bf16.msra.mxu0 0
    %4573 = vmatprep.subr.bf16.mxu0 0
    %4574 = vmatpush1.bf16.msra.mxu0 0
    %4575 = vmatprep.subr.bf16.mxu0 0
    %4576 = vmatpush1.bf16.msra.mxu0 0
    %4577 = vmatprep.subr.bf16.mxu0 0
    %4578 = vmatpush1.bf16.msra.mxu0 0
    %4579 = vmatprep.subr.bf16.mxu0 0
    %4580 = vmatpush1.bf16.msra.mxu0 0
    %4581 = vmatprep.mubr.bf16.mxu0 0
    %4582 = vmatmul.mubr.bf16.gmra.mrb[0].mxu0 %v4431
    %v4583 = vpop.f32.mrb[0].mxu0
    %v4584 = vadd.f32 %v4535, %v4583
    %v4585 = vpop.f32.mrb[0].mxu0
    %v4586 = vpop.f32.mrb[0].mxu0
    %v4587 = vpop.f32.mrb[0].mxu0
    %4588 = vdwg.mxu0
    %s4589 = smul.u32 %s4405, 2
    %s4590 = scalar_lea.vmem [#allocation3], %s4589
    %v4591 = vld [vmem:[%s4590] sm:$0x3]
    %v4592 = vadd.f32 %v4591, %v4468
    %v4593 = vxor.u32 %v4592, 2147483648
    %v4594 = vmul.f32 %v4593, 1.442695
    %v4595 = vpow.pop %v4594
    %v4596 = vadd.f32 %v4595, 1.0
    %v4597 = vrcp.pop %v4596
    %v4598 = vmul.f32 1.0, %v4597
    %s4599 = scalar_lea.vmem [#allocation4], %s4589
    %v4600 = vld [vmem:[%s4599] sm:$0x3]
    %v4601 = vadd.f32 %v4600, %v4526
    %v4602 = vxor.u32 %v4601, 2147483648
    %v4603 = vmul.f32 %v4602, 1.442695
    %v4604 = vpow.pop %v4603
    %v4605 = vadd.f32 %v4604, 1.0
    %v4606 = vrcp.pop %v4605
    %v4607 = vmul.f32 1.0, %v4606
    %s4608 = scalar_lea.vmem [#allocation5], %s4589
    %v4609 = vld [vmem:[%s4608] sm:$0x3]
    %v4610 = vmul.f32 %v4598, %v4584
    %v4611 = vadd.f32 %v4609, %v4610
    %v4612 = vtanh.pop %v4611
    %v4613 = vsub.f32 1.0, %v4607
    %v4614 = vmul.f32 %v4613, %v4612
    %v4615 = vmul.f32 %v4607, %v4410
    %v4616 = vadd.f32 %v4614, %v4615
    %s4617 = scalar_lea.vmem [#allocation2], %s4589
    %4618 = vst.msk [vmem:[%s4617] sm:$0x3] %vm3078, %v4616
  $region81: #{conv_gru_forward.1} parent=0 // loop_footer
    %s4409 = sadd.s32 1, %s4405
  $region82: #{conv_gru_forward.1} parent=0 // loop_footer_branch
    %4404 = sbr.rel target = $region78
  $region83: #{conv_gru_forward.1} parent=0 // loop_exit
    _
  %v4619 = vld [vmem:[#allocation2] sm:$0x3]
  %v4620 = vld [vmem:[#allocation2 + $0x2] sm:$0x3]
  %v4621 = vld [vmem:[#allocation2 + $0x4] sm:$0x3]
  %v4622 = vld [vmem:[#allocation2 + $0x6] sm:$0x3]
  %v4623 = vld [vmem:[#allocation2 + $0x8] sm:$0x3]
  %v4624 = vld [vmem:[#allocation2 + $0xa] sm:$0x3]
  %v4625 = vld [vmem:[#allocation2 + $0xc] sm:$0x3]
  %v4626 = vld [vmem:[#allocation2 + $0xe] sm:$0x3]
  %v4627 = vld [vmem:[#allocation2 + $0x10] sm:$0x3]
  %v4628 = vld [vmem:[#allocation2 + $0x12] sm:$0x3]
  %v4629 = vld [vmem:[#allocation2 + $0x14] sm:$0x3]
  %v4630 = vld [vmem:[#allocation2 + $0x16] sm:$0x3]
  %v4631 = vld [vmem:[#allocation2 + $0x18] sm:$0x3]
  %v4632 = vld [vmem:[#allocation2 + $0x1a] sm:$0x3]
  %v4633 = vld [vmem:[#allocation2 + $0x1c] sm:$0x3]
  %v4634 = vld [vmem:[#allocation2 + $0x1e] sm:$0x3]
  %v4651 = vcombine.low %v4619, %v4620
  %v4652 = vcombine.low %v4621, %v4622
  %v4654 = vunpack.c.l.s4 1983009808
  %v4655 = vunpack.c.0.s8 %v4654
  %v4656 = vlaneseq
  %v4657 = vshrl.u32 %v4656, 7
  %v4658 = vsub.s32 %v4655, %v4657
  %v4659 = vrot.slane %v4651, %v4658
  %v4661 = vunpack.c.l.s4 1983009808
  %v4662 = vunpack.c.0.s8 %v4661
  %v4663 = vlaneseq
  %v4664 = vshrl.u32 %v4663, 7
  %v4665 = vsub.s32 %v4662, %v4664
  %v4666 = vrot.slane %v4652, %v4665
  %v4667 = vcombine.low %v4659, %v4666
  %v4668 = vcombine.low %v4623, %v4624
  %v4669 = vcombine.low %v4625, %v4626
  %v4671 = vunpack.c.l.s4 1983009808
  %v4672 = vunpack.c.0.s8 %v4671
  %v4673 = vlaneseq
  %v4674 = vshrl.u32 %v4673, 7
  %v4675 = vsub.s32 %v4672, %v4674
  %v4676 = vrot.slane %v4668, %v4675
  %v4678 = vunpack.c.l.s4 1983009808
  %v4679 = vunpack.c.0.s8 %v4678
  %v4680 = vlaneseq
  %v4681 = vshrl.u32 %v4680, 7
  %v4682 = vsub.s32 %v4679, %v4681
  %v4683 = vrot.slane %v4669, %v4682
  %v4684 = vcombine.low %v4676, %v4683
  %v4685 = vcombine.low %v4627, %v4628
  %v4686 = vcombine.low %v4629, %v4630
  %v4688 = vunpack.c.l.s4 1983009808
  %v4689 = vunpack.c.0.s8 %v4688
  %v4690 = vlaneseq
  %v4691 = vshrl.u32 %v4690, 7
  %v4692 = vsub.s32 %v4689, %v4691
  %v4693 = vrot.slane %v4685, %v4692
  %v4695 = vunpack.c.l.s4 1983009808
  %v4696 = vunpack.c.0.s8 %v4695
  %v4697 = vlaneseq
  %v4698 = vshrl.u32 %v4697, 7
  %v4699 = vsub.s32 %v4696, %v4698
  %v4700 = vrot.slane %v4686, %v4699
  %v4701 = vcombine.low %v4693, %v4700
  %v4702 = vcombine.low %v4631, %v4632
  %v4703 = vcombine.low %v4633, %v4634
  %v4705 = vunpack.c.l.s4 1983009808
  %v4706 = vunpack.c.0.s8 %v4705
  %v4707 = vlaneseq
  %v4708 = vshrl.u32 %v4707, 7
  %v4709 = vsub.s32 %v4706, %v4708
  %v4710 = vrot.slane %v4702, %v4709
  %v4712 = vunpack.c.l.s4 1983009808
  %v4713 = vunpack.c.0.s8 %v4712
  %v4714 = vlaneseq
  %v4715 = vshrl.u32 %v4714, 7
  %v4716 = vsub.s32 %v4713, %v4715
  %v4717 = vrot.slane %v4703, %v4716
  %v4718 = vcombine.low %v4710, %v4717
  %v4723 = vpack.c.bf16 %v4684, %v4667
  %v4724 = vpack.c.bf16 %v4718, %v4701
  %v4725 = vld [vmem:[%s15] sm:$0xf]
  %v4726 = vld [vmem:[%s15 + $0x4] sm:$0xf]
  %v4727 = vld [vmem:[%s15 + $0x8] sm:$0xf]
  %v4728 = vld [vmem:[%s15 + $0xc] sm:$0xf]
  %v4729 = vld [vmem:[%s16] sm:$0x1]
  %v4731 = vlaneseq
  %v4732 = vshrl.u32 %v4731, 7
  %v4733 = vsub.s32 0, %v4732
  %v4734 = vrot.slane %v4729, %v4733
  %v4740 = vunpack.c.l.b16 %v4725
  %v4741 = vunpack.c.l.b16 %v4726
  %v4742 = vunpack.c.l.b16 %v4727
  %v4743 = vunpack.c.l.b16 %v4728
  %v4744 = vpack.c.b16 %v4741, %v4740
  %v4745 = vpack.c.b16 %v4743, %v4742
  %v4749 = vsel %vm707, %v4723, 0
  %v4752 = vsel %vm707, %v4724, 0
  %4754 = vmatprep.subr.bf16.mxu0 0
  %4755 = vmatpush1.bf16.msra.mxu0 %v4744
  %4756 = vmatprep.subr.bf16.mxu0 0
  %4757 = vmatpush1.bf16.msra.mxu0 %v4745
  %4758 = vmatprep.subr.bf16.mxu0 0
  %4759 = vmatpush1.bf16.msra.mxu0 0
  %4760 = vmatprep.subr.bf16.mxu0 0
  %4761 = vmatpush1.bf16.msra.mxu0 0
  %4762 = vmatprep.subr.bf16.mxu0 0
  %4763 = vmatpush1.bf16.msra.mxu0 0
  %4764 = vmatprep.subr.bf16.mxu0 0
  %4765 = vmatpush1.bf16.msra.mxu0 0
  %4766 = vmatprep.subr.bf16.mxu0 0
  %4767 = vmatpush1.bf16.msra.mxu0 0
  %4768 = vmatprep.subr.bf16.mxu0 0
  %4769 = vmatpush1.bf16.msra.mxu0 0
  %4770 = vmatprep.subr.bf16.mxu0 0
  %4771 = vmatpush1.bf16.msra.mxu0 0
  %4772 = vmatprep.subr.bf16.mxu0 0
  %4773 = vmatpush1.bf16.msra.mxu0 0
  %4774 = vmatprep.subr.bf16.mxu0 0
  %4775 = vmatpush1.bf16.msra.mxu0 0
  %4776 = vmatprep.subr.bf16.mxu0 0
  %4777 = vmatpush1.bf16.msra.mxu0 0
  %4778 = vmatprep.subr.bf16.mxu0 0
  %4779 = vmatpush1.bf16.msra.mxu0 0
  %4780 = vmatprep.subr.bf16.mxu0 0
  %4781 = vmatpush1.bf16.msra.mxu0 0
  %4782 = vmatprep.subr.bf16.mxu0 0
  %4783 = vmatpush1.bf16.msra.mxu0 0
  %4784 = vmatprep.subr.bf16.mxu0 0
  %4785 = vmatpush1.bf16.msra.mxu0 0
  %4786 = vmatprep.mubr.bf16.mxu0 0
  %4787 = vmatmul.mubr.bf16.gmra.mrb[0].mxu0 %v4749
  %v4788 = vpop.f32.mrb[0].mxu0
  %v4789 = vadd.f32 %v4734, %v4788
  %v4790 = vpop.f32.mrb[0].mxu0
  %v4791 = vpop.f32.mrb[0].mxu0
  %v4792 = vadd.f32 %v4734, %v4791
  %v4793 = vpop.f32.mrb[0].mxu0
  %4794 = vmatprep.mubr.bf16.mxu0 0
  %4795 = vmatmul.mubr.bf16.gmra.mrb[0].mxu0 %v4752
  %v4796 = vpop.f32.mrb[0].mxu0
  %v4797 = vadd.f32 %v4734, %v4796
  %v4798 = vpop.f32.mrb[0].mxu0
  %v4799 = vpop.f32.mrb[0].mxu0
  %v4800 = vadd.f32 %v4734, %v4799
  %v4801 = vpop.f32.mrb[0].mxu0
  %4802 = vdwg.mxu0
  %v4807 = vcombine.high %v4789, %v4789
  %v4809 = vunpack.c.l.s4 1983009808
  %v4810 = vunpack.c.0.s8 %v4809
  %v4811 = vlaneseq
  %v4812 = vshrl.u32 %v4811, 7
  %v4813 = vsub.s32 %v4810, %v4812
  %v4814 = vrot.slane %v4789, %v4813
  %v4816 = vunpack.c.l.s4 1983009808
  %v4817 = vunpack.c.0.s8 %v4816
  %v4818 = vlaneseq
  %v4819 = vshrl.u32 %v4818, 7
  %v4820 = vsub.s32 %v4817, %v4819
  %v4821 = vrot.slane %v4807, %v4820
  %v4822 = vcombine.high %v4814, %v4814
  %v4823 = vcombine.high %v4821, %v4821
  %v4824 = vcombine.high %v4792, %v4792
  %v4826 = vunpack.c.l.s4 1983009808
  %v4827 = vunpack.c.0.s8 %v4826
  %v4828 = vlaneseq
  %v4829 = vshrl.u32 %v4828, 7
  %v4830 = vsub.s32 %v4827, %v4829
  %v4831 = vrot.slane %v4792, %v4830
  %v4833 = vunpack.c.l.s4 1983009808
  %v4834 = vunpack.c.0.s8 %v4833
  %v4835 = vlaneseq
  %v4836 = vshrl.u32 %v4835, 7
  %v4837 = vsub.s32 %v4834, %v4836
  %v4838 = vrot.slane %v4824, %v4837
  %v4839 = vcombine.high %v4831, %v4831
  %v4840 = vcombine.high %v4838, %v4838
  %v4841 = vcombine.high %v4797, %v4797
  %v4843 = vunpack.c.l.s4 1983009808
  %v4844 = vunpack.c.0.s8 %v4843
  %v4845 = vlaneseq
  %v4846 = vshrl.u32 %v4845, 7
  %v4847 = vsub.s32 %v4844, %v4846
  %v4848 = vrot.slane %v4797, %v4847
  %v4850 = vunpack.c.l.s4 1983009808
  %v4851 = vunpack.c.0.s8 %v4850
  %v4852 = vlaneseq
  %v4853 = vshrl.u32 %v4852, 7
  %v4854 = vsub.s32 %v4851, %v4853
  %v4855 = vrot.slane %v4841, %v4854
  %v4856 = vcombine.high %v4848, %v4848
  %v4857 = vcombine.high %v4855, %v4855
  %v4858 = vcombine.high %v4800, %v4800
  %v4860 = vunpack.c.l.s4 1983009808
  %v4861 = vunpack.c.0.s8 %v4860
  %v4862 = vlaneseq
  %v4863 = vshrl.u32 %v4862, 7
  %v4864 = vsub.s32 %v4861, %v4863
  %v4865 = vrot.slane %v4800, %v4864
  %v4867 = vunpack.c.l.s4 1983009808
  %v4868 = vunpack.c.0.s8 %v4867
  %v4869 = vlaneseq
  %v4870 = vshrl.u32 %v4869, 7
  %v4871 = vsub.s32 %v4868, %v4870
  %v4872 = vrot.slane %v4858, %v4871
  %v4873 = vcombine.high %v4865, %v4865
  %v4874 = vcombine.high %v4872, %v4872
  %vm4891 = vcmask 58368
  %4892 = vst.msk [vmem:[%s17] sm:$0x3] %vm4891, %v4814
  %4893 = vst.msk [vmem:[%s17 + $0x2] sm:$0x3] %vm4891, %v4822
  %4894 = vst.msk [vmem:[%s17 + $0x4] sm:$0x3] %vm4891, %v4821
  %4895 = vst.msk [vmem:[%s17 + $0x6] sm:$0x3] %vm4891, %v4823
  %4896 = vst.msk [vmem:[%s17 + $0x8] sm:$0x3] %vm4891, %v4831
  %4897 = vst.msk [vmem:[%s17 + $0xa] sm:$0x3] %vm4891, %v4839
  %4898 = vst.msk [vmem:[%s17 + $0xc] sm:$0x3] %vm4891, %v4838
  %4899 = vst.msk [vmem:[%s17 + $0xe] sm:$0x3] %vm4891, %v4840
  %4900 = vst.msk [vmem:[%s17 + $0x10] sm:$0x3] %vm4891, %v4848
  %4901 = vst.msk [vmem:[%s17 + $0x12] sm:$0x3] %vm4891, %v4856
  %4902 = vst.msk [vmem:[%s17 + $0x14] sm:$0x3] %vm4891, %v4855
  %4903 = vst.msk [vmem:[%s17 + $0x16] sm:$0x3] %vm4891, %v4857
  %4904 = vst.msk [vmem:[%s17 + $0x18] sm:$0x3] %vm4891, %v4865
  %4905 = vst.msk [vmem:[%s17 + $0x1a] sm:$0x3] %vm4891, %v4873
  %4906 = vst.msk [vmem:[%s17 + $0x1c] sm:$0x3] %vm4891, %v4872
  %4907 = vst.msk [vmem:[%s17 + $0x1e] sm:$0x3] %vm4891, %v4874
  // Predicated region
  $region84: #{conv_gru_forward.1} parent=0 // pred_check
    _
  $region85: #{conv_gru_forward.1} parent=0 // pred_check_branch
    %4909 = sbr.rel (0) target = $region87
  $region86: #{conv_gru_forward.1} parent=0 // pred_region
    _
  $region87: #{conv_gru_forward.1} parent=0 // pred_fallthru
    _
  // Predicated region
  $region88: #{conv_gru_forward.1} parent=0 // pred_check
    _
  $region89: #{conv_gru_forward.1} parent=0 // pred_check_branch
    %4911 = sbr.rel (0) target = $region91
  $region90: #{conv_gru_forward.1} parent=0 // pred_region
    _
  $region91: #{conv_gru_forward.1} parent=0 // pred_fallthru
    _

</llo_original>
